<compile_context>
chip_gen: v6e
topology: v6e:2x2x1
jax: 0.10.0
libtpu: 0.0.40
codegen_flags: <defaults>
</compile_context>

<pallas_src>
import functools

import numpy as np
import jax
import jax.numpy as jnp
from jax.experimental import pallas as pl
from jax.experimental.pallas import tpu as pltpu


def _cparams():
    return pltpu.CompilerParams(
        dimension_semantics=("parallel",),
        vmem_limit_bytes=32 * 1024 * 1024,
    )


# ---------------------------------------------------------------------------
# Pallas kernels
# ---------------------------------------------------------------------------
def conv_pool_kernel(x_ref, w_ref, y_ref, s_ref, *, H, W, K, G, C):
    """Complex IGConv (+ optional Gabor max-|z| pooling) for one image.

    x_ref : (H+2p, W+2p, 2*Cin) f32   halo-padded feature map, channels [re|im]
    w_ref : (K*K*2*Cin, G*2*C) bf16   complex-as-real block weight (all groups)
    y_ref : (H*W, 2*C) f32            conv output after pooling, [yr | yi]
    s_ref : (1, 2*C) f32              per-image column sums of y (for BN means)
    """
    x = x_ref[...]
    # In-VMEM patch extraction (no HBM im2col): K*K shifted windows, channel-
    # concatenated, then (H, W, D) -> (H*W, D) which is layout-preserving for
    # W a multiple of the sublane tile.
    taps = [x[ki:ki + H, kj:kj + W, :] for ki in range(K) for kj in range(K)]
    pat = jnp.concatenate(taps, axis=-1).reshape(H * W, -1)
    pat = pat.astype(jnp.bfloat16)

    # Single complex-as-real matmul over all Gabor groups, f32 accumulation.
    y = jnp.dot(pat, w_ref[...], preferred_element_type=jnp.float32)

    if G > 1:
        # gabor_pooling == 'max': keep the complex value with max |z| over the
        # no_g orientations; columns are ordered (group, {re,im}, channel).
        yr = y[:, 0:C]
        yi = y[:, C:2 * C]
        best = yr * yr + yi * yi
        for g in range(1, G):
            cr = y[:, (2 * g) * C:(2 * g + 1) * C]
            ci = y[:, (2 * g + 1) * C:(2 * g + 2) * C]
            m = cr * cr + ci * ci
            take = m > best
            yr = jnp.where(take, cr, yr)
            yi = jnp.where(take, ci, yi)
            best = jnp.where(take, m, best)
        y = jnp.concatenate([yr, yi], axis=-1)

    y_ref[...] = y
    # Column sums over M via a ones-row matmul (MXU) instead of a sublane reduce.
    ones = jnp.ones((1, H * W), jnp.float32)
    s_ref[...] = jnp.dot(ones, y, preferred_element_type=jnp.float32)


def mag_stats_kernel(y_ref, mean_ref, o_ref, *, C):
    """Per-tile partial sums of |z| and |z|^2 (BatchNormCmplx 'old' statistics).

    y_ref    : (TM, 2*C) f32   [yr | yi]
    mean_ref : (1, 2*C)  f32   global re/im means
    o_ref    : (8, C)    f32   row0 = sum(|z|), row1 = sum(|z|^2), rest zero
    """
    y = y_ref[...]
    mu = mean_ref[...]
    cr = y[:, :C] - mu[:, :C]
    ci = y[:, C:] - mu[:, C:]
    mag2 = cr * cr + ci * ci + 1e-12
    mag = jnp.sqrt(mag2)
    ones = jnp.ones((1, y.shape[0]), jnp.float32)
    s1 = jnp.dot(ones, mag, preferred_element_type=jnp.float32)
    s2 = jnp.dot(ones, mag2, preferred_element_type=jnp.float32)
    o_ref[...] = jnp.concatenate(
        [s1, s2, jnp.zeros((6, C), jnp.float32)], axis=0)


def bn_relu_kernel(y_ref, p_ref, o_ref, *, C):
    """BatchNormCmplx('old') finalize + ReLUCmplx('mod') for one M-tile.

    p_ref rows: 0 = mean_re, 1 = mean_im, 2 = 1/std(|z|), 3 = modReLU bias.
    """
    y = y_ref[...]
    p = p_ref[...]
    mr, mi, inv, b = p[0:1, :], p[1:2, :], p[2:3, :], p[3:4, :]
    cr = (y[:, :C] - mr) * inv
    ci = (y[:, C:] - mi) * inv
    mag = jnp.sqrt(cr * cr + ci * ci + 1e-12)
    scale = jnp.maximum(mag + b, 0.0) * pl.reciprocal(mag, approx=True)
    o_ref[...] = jnp.concatenate([cr * scale, ci * scale], axis=-1)


# ---------------------------------------------------------------------------
# JAX glue: Gabor bank, block-weight construction, block wrapper, forward
# ---------------------------------------------------------------------------
def gabor_bank(no_g, k):
    """Deterministic complex Gabor modulation bank, shape (no_g, k, k)."""
    half = (k - 1) / 2.0
    coords = jnp.arange(k, dtype=jnp.float32) - half
    vv, uu = jnp.meshgrid(coords, coords, indexing="ij")
    thetas = jnp.arange(no_g, dtype=jnp.float32) * (np.pi / no_g)
    sigma = float(max(k / 2.0, 1.0))
    f0 = float(np.pi / 2.0)
    xp = (uu[None] * jnp.cos(thetas)[:, None, None]
          + vv[None] * jnp.sin(thetas)[:, None, None])
    env = jnp.exp(-(uu ** 2 + vv ** 2)[None] / (2.0 * sigma ** 2))
    return env * jnp.cos(f0 * xp), env * jnp.sin(f0 * xp)


def block_weight(wr, wi, gr, gi, *, k, no_g, pool):
    """Gabor-modulated complex weights -> one complex-as-real block matrix.

    Returns (k*k*2*cin, G*2*C): rows ordered (kh, kw, {re,im}, cin), columns
    ordered (group, {re,im}, channel).  G=no_g, C=out_b when pooling; else
    G=1, C=no_g*out_b with orientation-major channels (matches prior version).
    """
    out_b, cin = wr.shape[0], wr.shape[1]
    mr = wr[None] * gr[:, None, None] - wi[None] * gi[:, None, None]
    mi = wr[None] * gi[:, None, None] + wi[None] * gr[:, None, None]
    if pool:
        G, C = no_g, out_b
        Wr, Wi = mr, mi                                  # (G, C, cin, k, k)
    else:
        G, C = 1, no_g * out_b
        Wr = mr.reshape(1, C, cin, k, k)
        Wi = mi.reshape(1, C, cin, k, k)
    Wr = jnp.transpose(Wr, (3, 4, 2, 0, 1))              # (k, k, cin, G, C)
    Wi = jnp.transpose(Wi, (3, 4, 2, 0, 1))
    top = jnp.stack([Wr, Wi], axis=-2)                   # rows fed by re(x)
    bot = jnp.stack([-Wi, Wr], axis=-2)                  # rows fed by im(x)
    B = jnp.stack([top, bot], axis=2)                    # (k,k,2,cin,G,2,C)
    return B.reshape(k * k * 2 * cin, G * 2 * C)


def igconv_block(a, w_block, relu_b, *, K, G, C):
    """IGConvCmplx [+Gabor pool] + BatchNormCmplx('old') + ReLUCmplx('mod').

    a: (N, H, W, 2*Cin) merged-channel (re|im) activations, f32.
    Returns (N, H, W, 2*C) merged-channel activations, f32.
    """
    N, H, W, Cin2 = a.shape
    pad = K // 2
    Hp, Wp = H + 2 * pad, W + 2 * pad
    HW = H * W
    M = N * HW
    rows, cols = w_block.shape

    xpad = jnp.pad(a, ((0, 0), (pad, pad), (pad, pad), (0, 0)))
    wb = w_block.astype(jnp.bfloat16)

    # --- conv (+ Gabor pool) + per-image column sums; grid over batch -------
    y, sums = pl.pallas_call(
        functools.partial(conv_pool_kernel, H=H, W=W, K=K, G=G, C=C),
        grid=(N,),
        out_shape=(jax.ShapeDtypeStruct((N, HW, 2 * C), jnp.float32),
                   jax.ShapeDtypeStruct((N, 1, 2 * C), jnp.float32)),
        in_specs=[pl.BlockSpec((None, Hp, Wp, Cin2), lambda n: (n, 0, 0, 0)),
                  pl.BlockSpec((rows, cols), lambda n: (0, 0))],
        out_specs=(pl.BlockSpec((None, HW, 2 * C), lambda n: (n, 0, 0)),
                   pl.BlockSpec((None, 1, 2 * C), lambda n: (n, 0, 0))),
        compiler_params=_cparams(),
    )(xpad, wb)

    y = y.reshape(M, 2 * C)
    mean = jnp.sum(sums, axis=0) / M                      # (1, 2*C) global means

    # --- M-tiled BN statistics (|z| moments) --------------------------------
    TM = M if M <= 1024 else 1024
    assert M % TM == 0 and TM % 8 == 0, (M, TM)
    n_mt = M // TM

    part = pl.pallas_call(
        functools.partial(mag_stats_kernel, C=C),
        grid=(n_mt,),
        out_shape=jax.ShapeDtypeStruct((n_mt, 8, C), jnp.float32),
        in_specs=[pl.BlockSpec((TM, 2 * C), lambda i: (i, 0)),
                  pl.BlockSpec((1, 2 * C), lambda i: (0, 0))],
        out_specs=pl.BlockSpec((None, 8, C), lambda i: (i, 0, 0)),
        compiler_params=_cparams(),
    )(y, mean)

    # Tiny cross-tile combine in JAX (global M in the unbiased divisor).
    tot = jnp.sum(part, axis=0)                           # (8, C)
    mag_mean = tot[0] / M
    var = jnp.maximum((tot[1] - M * mag_mean ** 2) / (M - 1), 0.0)
    inv = 1.0 / jnp.maximum(jnp.sqrt(var), 1e-8)
    p4 = jnp.stack([mean[0, :C], mean[0, C:], inv, relu_b], axis=0)   # (4, C)

    # --- BN finalize + modReLU; grid over M tiles ----------------------------
    out = pl.pallas_call(
        functools.partial(bn_relu_kernel, C=C),
        grid=(n_mt,),
        out_shape=jax.ShapeDtypeStruct((M, 2 * C), jnp.float32),
        in_specs=[pl.BlockSpec((TM, 2 * C), lambda i: (i, 0)),
                  pl.BlockSpec((4, C), lambda i: (0, 0))],
        out_specs=pl.BlockSpec((TM, 2 * C), lambda i: (i, 0)),
        compiler_params=_cparams(),
    )(y, p4)

    return out.reshape(N, H, W, 2 * C)


def down_cmplx_forward(x, params, *, kernel_size=3, no_g=4):
    """DownCmplx forward.  x: [2, N, C, H, W] complex-stacked NCHW."""
    xr = jnp.transpose(x[0], (0, 2, 3, 1))                # -> NHWC
    xi = jnp.transpose(x[1], (0, 2, 3, 1))

    # AvgPoolCmplx(2): plain JAX (XLA fuses); the old lane-sparse pallas_call
    # was pure per-call overhead.
    def pool2(t):
        n, h, w, c = t.shape
        return t.reshape(n, h // 2, 2, w // 2, 2, c).mean(axis=(2, 4))

    a = jnp.concatenate([pool2(xr), pool2(xi)], axis=-1)  # (N, H/2, W/2, 2*Cin)

    gr, gi = params["gabor_r"], params["gabor_i"]
    k = kernel_size
    out_c = params["conv1"]["relu_b"].shape[0]

    b1 = block_weight(params["conv1"]["wr"], params["conv1"]["wi"], gr, gi,
                      k=k, no_g=no_g, pool=False)
    a1 = igconv_block(a, b1, params["conv1"]["relu_b"], K=k, G=1, C=out_c)

    b2 = block_weight(params["conv2"]["wr"], params["conv2"]["wi"], gr, gi,
                      k=k, no_g=no_g, pool=False)
    a2 = igconv_block(a1, b2, params["conv2"]["relu_b"], K=k, G=1, C=out_c)

    b3 = block_weight(params["conv3"]["wr"], params["conv3"]["wi"], gr, gi,
                      k=k, no_g=no_g, pool=True)
    # Residual add fuses with conv3's pad in XLA -> single HBM input stream.
    a3 = igconv_block(a1 + a2, b3, params["conv3"]["relu_b"],
                      K=k, G=no_g, C=out_c)

    yr = a3[..., :out_c]
    yi = a3[..., out_c:]
    return jnp.stack([jnp.transpose(yr, (0, 3, 1, 2)),
                      jnp.transpose(yi, (0, 3, 1, 2))], axis=0)


def make_params(key, in_c, out_c, k, no_g):
    assert out_c % no_g == 0, "out_channels must be divisible by no_g"
    ks = jax.random.split(key, 6)

    def cw(kk, out_b, cin):
        k1, k2 = jax.random.split(kk)
        s = 1.0 / np.sqrt(cin * k * k)
        return {"wr": jax.random.normal(k1, (out_b, cin, k, k), jnp.float32) * s,
                "wi": jax.random.normal(k2, (out_b, cin, k, k), jnp.float32) * s}

    out_b = out_c // no_g                                  # non-pooled base width
    gr, gi = gabor_bank(no_g, k)
    return {
        "gabor_r": gr, "gabor_i": gi,
        "conv1": {**cw(ks[0], out_b, in_c),
                  "relu_b": 0.1 * jax.random.normal(ks[1], (out_c,), jnp.float32)},
        "conv2": {**cw(ks[2], out_b, out_c),
                  "relu_b": 0.1 * jax.random.normal(ks[3], (out_c,), jnp.float32)},
        "conv3": {**cw(ks[4], out_c, out_c),               # pooled conv: full width
                  "relu_b": 0.1 * jax.random.normal(ks[5], (out_c,), jnp.float32)},
    }


if __name__ == "__main__":
    N, C_IN, H, W = 2, 4, 16, 16
    OUT_C, NO_G, K = 8, 4, 3

    key = jax.random.PRNGKey(0)
    kx, kp = jax.random.split(key)
    x = jax.random.normal(kx, (2, N, C_IN, H, W), jnp.float32)  # complex-stacked NCHW
    params = make_params(kp, C_IN, OUT_C, K, NO_G)

    fwd = jax.jit(functools.partial(down_cmplx_forward, kernel_size=K, no_g=NO_G))
    out = fwd(x, params)
    jax.block_until_ready(out)

    assert out.shape == (2, N, OUT_C, H // 2, W // 2), out.shape
    assert bool(jnp.all(jnp.isfinite(out)))
    print("KERNEL_OK")
</pallas_src>

<mosaic_0001>
module attributes {stable_mosaic.version = 11 : i64} {
  func.func @mag_stats_kernel(%arg0: i32, %arg1: memref<128x16xf32, #tpu.memory_space<vmem>>, %arg2: memref<1x16xf32, #tpu.memory_space<vmem>>, %arg3: memref<1x8x8xf32, #tpu.memory_space<vmem>>) attributes {dimension_semantics = [#tpu.dimension_semantics<parallel>], iteration_bounds = array<i64: 1>, scalar_prefetch = 0 : i64, scratch_operands = 0 : i64, tpu.core_type = #tpu.core_type<tc>, window_params = [{transform_indices = @transform_0, window_bounds = array<i64: 128, 16>}, {pipeline_mode = #tpu.pipeline_mode<synchronous>, transform_indices = @transform_1, window_bounds = array<i64: 1, 16>}, {transform_indices = @transform_2, window_bounds = array<i64: 1, 8, 8>}]} {
    %c0 = arith.constant 0 : index
    %c0_0 = arith.constant 0 : index
    %0 = vector.load %arg1[%c0, %c0_0] : memref<128x16xf32, #tpu.memory_space<vmem>>, vector<128x16xf32>
    %c0_1 = arith.constant 0 : index
    %c0_2 = arith.constant 0 : index
    %1 = vector.load %arg2[%c0_1, %c0_2] : memref<1x16xf32, #tpu.memory_space<vmem>>, vector<1x16xf32>
    %2 = vector.extract_strided_slice %0 {offsets = [0, 0], sizes = [128, 8], strides = [1, 1]} : vector<128x16xf32> to vector<128x8xf32>
    %3 = vector.extract_strided_slice %1 {offsets = [0, 0], sizes = [1, 8], strides = [1, 1]} : vector<1x16xf32> to vector<1x8xf32>
    %4 = vector.broadcast %3 : vector<1x8xf32> to vector<128x8xf32>
    %5 = arith.subf %2, %4 : vector<128x8xf32>
    %6 = vector.extract_strided_slice %0 {offsets = [0, 8], sizes = [128, 8], strides = [1, 1]} : vector<128x16xf32> to vector<128x8xf32>
    %7 = vector.extract_strided_slice %1 {offsets = [0, 8], sizes = [1, 8], strides = [1, 1]} : vector<1x16xf32> to vector<1x8xf32>
    %8 = vector.broadcast %7 : vector<1x8xf32> to vector<128x8xf32>
    %9 = arith.subf %6, %8 : vector<128x8xf32>
    %10 = arith.mulf %5, %5 : vector<128x8xf32>
    %11 = arith.mulf %9, %9 : vector<128x8xf32>
    %12 = arith.addf %10, %11 : vector<128x8xf32>
    %cst = arith.constant 9.99999996E-13 : f32
    %13 = vector.broadcast %cst : f32 to vector<128x8xf32>
    %14 = arith.addf %12, %13 : vector<128x8xf32>
    %15 = math.sqrt %14 : vector<128x8xf32>
    %cst_3 = arith.constant 1.000000e+00 : f32
    %16 = vector.broadcast %cst_3 : f32 to vector<1x128xf32>
    %cst_4 = arith.constant dense<0.000000e+00> : vector<1x8xf32>
    %17 = tpu.matmul %16, %15, %cst_4 {dimension_numbers = #tpu.dot_dimension_numbers<[1], [0], [0], [1], [0, 0, 1, 1], [], []>} : vector<1x128xf32>, vector<128x8xf32>, vector<1x8xf32> -> vector<1x8xf32>
    %cst_5 = arith.constant dense<0.000000e+00> : vector<1x8xf32>
    %18 = tpu.matmul %16, %14, %cst_5 {dimension_numbers = #tpu.dot_dimension_numbers<[1], [0], [0], [1], [0, 0, 1, 1], [], []>} : vector<1x128xf32>, vector<128x8xf32>, vector<1x8xf32> -> vector<1x8xf32>
    %cst_6 = arith.constant 0.000000e+00 : f32
    %19 = vector.broadcast %cst_6 : f32 to vector<6x8xf32>
    %20 = tpu.concatenate %17, %18, %19 in 0 : vector<1x8xf32>, vector<1x8xf32>, vector<6x8xf32> -> vector<8x8xf32>
    %c0_7 = arith.constant 0 : index
    %c0_8 = arith.constant 0 : index
    %c0_9 = arith.constant 0 : index
    %21 = vector.load %arg3[%c0_7, %c0_8, %c0_9] : memref<1x8x8xf32, #tpu.memory_space<vmem>>, vector<1x8x8xf32>
    %22 = vector.shape_cast %21 : vector<1x8x8xf32> to vector<8x8xf32>
    %23 = vector.shape_cast %20 : vector<8x8xf32> to vector<1x8x8xf32>
    tpu.vector_store %arg3[%c0_7, %c0_8, %c0_9], %23 {strides = array<i32>} : memref<1x8x8xf32, #tpu.memory_space<vmem>>, vector<1x8x8xf32>,
    return
  }
  func.func @transform_0(%arg0: i32) -> (i32, i32) {
    %c0_i32 = arith.constant 0 : i32
    %c0_i32_0 = arith.constant 0 : i32
    return %arg0, %c0_i32 : i32, i32
  }
  func.func @transform_1(%arg0: i32) -> (i32, i32) {
    %c0_i32 = arith.constant 0 : i32
    %c0_i32_0 = arith.constant 0 : i32
    %c0_i32_1 = arith.constant 0 : i32
    return %c0_i32, %c0_i32_0 : i32, i32
  }
  func.func @transform_2(%arg0: i32) -> (i32, i32, i32) {
    %c0_i32 = arith.constant 0 : i32
    %c0_i32_0 = arith.constant 0 : i32
    %c0_i32_1 = arith.constant 0 : i32
    return %arg0, %c0_i32, %c0_i32_0 : i32, i32, i32
  }
}

module attributes {stable_mosaic.version = 11 : i64} {
  func.func @conv_pool_kernel(%arg0: i32, %arg1: memref<1x10x10x8xf32, #tpu.memory_space<vmem>>, %arg2: memref<72x16xbf16, #tpu.memory_space<vmem>>, %arg3: memref<1x64x16xf32, #tpu.memory_space<vmem>>, %arg4: memref<1x1x16xf32, #tpu.memory_space<vmem>>) attributes {dimension_semantics = [#tpu.dimension_semantics<parallel>], iteration_bounds = array<i64: 2>, scalar_prefetch = 0 : i64, scratch_operands = 0 : i64, tpu.core_type = #tpu.core_type<tc>, window_params = [{transform_indices = @transform_0, window_bounds = array<i64: 1, 10, 10, 8>}, {pipeline_mode = #tpu.pipeline_mode<synchronous>, transform_indices = @transform_1, window_bounds = array<i64: 72, 16>}, {transform_indices = @transform_2, window_bounds = array<i64: 1, 64, 16>}, {transform_indices = @transform_3, window_bounds = array<i64: 1, 1, 16>}]} {
    %c0 = arith.constant 0 : index
    %c0_0 = arith.constant 0 : index
    %c0_1 = arith.constant 0 : index
    %c0_2 = arith.constant 0 : index
    %0 = vector.load %arg1[%c0, %c0_0, %c0_1, %c0_2] : memref<1x10x10x8xf32, #tpu.memory_space<vmem>>, vector<1x10x10x8xf32>
    %1 = vector.shape_cast %0 : vector<1x10x10x8xf32> to vector<10x10x8xf32>
    %2 = vector.extract_strided_slice %1 {offsets = [0, 0, 0], sizes = [8, 8, 8], strides = [1, 1, 1]} : vector<10x10x8xf32> to vector<8x8x8xf32>
    %3 = vector.extract_strided_slice %1 {offsets = [0, 1, 0], sizes = [8, 8, 8], strides = [1, 1, 1]} : vector<10x10x8xf32> to vector<8x8x8xf32>
    %4 = vector.extract_strided_slice %1 {offsets = [0, 2, 0], sizes = [8, 8, 8], strides = [1, 1, 1]} : vector<10x10x8xf32> to vector<8x8x8xf32>
    %5 = vector.extract_strided_slice %1 {offsets = [1, 0, 0], sizes = [8, 8, 8], strides = [1, 1, 1]} : vector<10x10x8xf32> to vector<8x8x8xf32>
    %6 = vector.extract_strided_slice %1 {offsets = [1, 1, 0], sizes = [8, 8, 8], strides = [1, 1, 1]} : vector<10x10x8xf32> to vector<8x8x8xf32>
    %7 = vector.extract_strided_slice %1 {offsets = [1, 2, 0], sizes = [8, 8, 8], strides = [1, 1, 1]} : vector<10x10x8xf32> to vector<8x8x8xf32>
    %8 = vector.extract_strided_slice %1 {offsets = [2, 0, 0], sizes = [8, 8, 8], strides = [1, 1, 1]} : vector<10x10x8xf32> to vector<8x8x8xf32>
    %9 = vector.extract_strided_slice %1 {offsets = [2, 1, 0], sizes = [8, 8, 8], strides = [1, 1, 1]} : vector<10x10x8xf32> to vector<8x8x8xf32>
    %10 = vector.extract_strided_slice %1 {offsets = [2, 2, 0], sizes = [8, 8, 8], strides = [1, 1, 1]} : vector<10x10x8xf32> to vector<8x8x8xf32>
    %11 = tpu.concatenate %2, %3, %4, %5, %6, %7, %8, %9, %10 in 2 : vector<8x8x8xf32>, vector<8x8x8xf32>, vector<8x8x8xf32>, vector<8x8x8xf32>, vector<8x8x8xf32>, vector<8x8x8xf32>, vector<8x8x8xf32>, vector<8x8x8xf32>, vector<8x8x8xf32> -> vector<8x8x72xf32>
    %12 = vector.shape_cast %11 : vector<8x8x72xf32> to vector<64x72xf32>
    %13 = arith.truncf %12 : vector<64x72xf32> to vector<64x72xbf16>
    %c0_3 = arith.constant 0 : index
    %c0_4 = arith.constant 0 : index
    %14 = vector.load %arg2[%c0_3, %c0_4] : memref<72x16xbf16, #tpu.memory_space<vmem>>, vector<72x16xbf16>
    %cst = arith.constant dense<0.000000e+00> : vector<64x16xf32>
    %15 = tpu.matmul %13, %14, %cst {dimension_numbers = #tpu.dot_dimension_numbers<[1], [0], [0], [1], [0, 0, 1, 1], [], []>} : vector<64x72xbf16>, vector<72x16xbf16>, vector<64x16xf32> -> vector<64x16xf32>
    %c0_5 = arith.constant 0 : index
    %c0_6 = arith.constant 0 : index
    %c0_7 = arith.constant 0 : index
    %16 = vector.load %arg3[%c0_5, %c0_6, %c0_7] : memref<1x64x16xf32, #tpu.memory_space<vmem>>, vector<1x64x16xf32>
    %17 = vector.shape_cast %16 : vector<1x64x16xf32> to vector<64x16xf32>
    %18 = vector.shape_cast %15 : vector<64x16xf32> to vector<1x64x16xf32>
    tpu.vector_store %arg3[%c0_5, %c0_6, %c0_7], %18 {strides = array<i32>} : memref<1x64x16xf32, #tpu.memory_space<vmem>>, vector<1x64x16xf32>,
    %cst_8 = arith.constant 1.000000e+00 : f32
    %19 = vector.broadcast %cst_8 : f32 to vector<1x64xf32>
    %cst_9 = arith.constant dense<0.000000e+00> : vector<1x16xf32>
    %20 = tpu.matmul %19, %15, %cst_9 {dimension_numbers = #tpu.dot_dimension_numbers<[1], [0], [0], [1], [0, 0, 1, 1], [], []>} : vector<1x64xf32>, vector<64x16xf32>, vector<1x16xf32> -> vector<1x16xf32>
    %c0_10 = arith.constant 0 : index
    %c0_11 = arith.constant 0 : index
    %c0_12 = arith.constant 0 : index
    %21 = vector.load %arg4[%c0_10, %c0_11, %c0_12] : memref<1x1x16xf32, #tpu.memory_space<vmem>>, vector<1x1x16xf32>
    %22 = vector.shape_cast %21 : vector<1x1x16xf32> to vector<1x16xf32>
    %23 = vector.shape_cast %20 : vector<1x16xf32> to vector<1x1x16xf32>
    tpu.vector_store %arg4[%c0_10, %c0_11, %c0_12], %23 {strides = array<i32>} : memref<1x1x16xf32, #tpu.memory_space<vmem>>, vector<1x1x16xf32>,
    return
  }
  func.func @transform_0(%arg0: i32) -> (i32, i32, i32, i32) {
    %c0_i32 = arith.constant 0 : i32
    %c0_i32_0 = arith.constant 0 : i32
    %c0_i32_1 = arith.constant 0 : i32
    %c0_i32_2 = arith.constant 0 : i32
    return %arg0, %c0_i32, %c0_i32_0, %c0_i32_1 : i32, i32, i32, i32
  }
  func.func @transform_1(%arg0: i32) -> (i32, i32) {
    %c0_i32 = arith.constant 0 : i32
    %c0_i32_0 = arith.constant 0 : i32
    %c0_i32_1 = arith.constant 0 : i32
    return %c0_i32, %c0_i32_0 : i32, i32
  }
  func.func @transform_2(%arg0: i32) -> (i32, i32, i32) {
    %c0_i32 = arith.constant 0 : i32
    %c0_i32_0 = arith.constant 0 : i32
    %c0_i32_1 = arith.constant 0 : i32
    return %arg0, %c0_i32, %c0_i32_0 : i32, i32, i32
  }
  func.func @transform_3(%arg0: i32) -> (i32, i32, i32) {
    %c0_i32 = arith.constant 0 : i32
    %c0_i32_0 = arith.constant 0 : i32
    %c0_i32_1 = arith.constant 0 : i32
    return %arg0, %c0_i32, %c0_i32_0 : i32, i32, i32
  }
}

module attributes {stable_mosaic.version = 11 : i64} {
  func.func @bn_relu_kernel(%arg0: i32, %arg1: memref<128x16xf32, #tpu.memory_space<vmem>>, %arg2: memref<4x8xf32, #tpu.memory_space<vmem>>, %arg3: memref<128x16xf32, #tpu.memory_space<vmem>>) attributes {dimension_semantics = [#tpu.dimension_semantics<parallel>], iteration_bounds = array<i64: 1>, scalar_prefetch = 0 : i64, scratch_operands = 0 : i64, tpu.core_type = #tpu.core_type<tc>, window_params = [{transform_indices = @transform_0, window_bounds = array<i64: 128, 16>}, {pipeline_mode = #tpu.pipeline_mode<synchronous>, transform_indices = @transform_1, window_bounds = array<i64: 4, 8>}, {transform_indices = @transform_2, window_bounds = array<i64: 128, 16>}]} {
    %c0 = arith.constant 0 : index
    %c0_0 = arith.constant 0 : index
    %0 = vector.load %arg1[%c0, %c0_0] : memref<128x16xf32, #tpu.memory_space<vmem>>, vector<128x16xf32>
    %c0_1 = arith.constant 0 : index
    %c0_2 = arith.constant 0 : index
    %1 = vector.load %arg2[%c0_1, %c0_2] : memref<4x8xf32, #tpu.memory_space<vmem>>, vector<4x8xf32>
    %2 = vector.extract_strided_slice %1 {offsets = [0, 0], sizes = [1, 8], strides = [1, 1]} : vector<4x8xf32> to vector<1x8xf32>
    %3 = vector.extract_strided_slice %1 {offsets = [1, 0], sizes = [1, 8], strides = [1, 1]} : vector<4x8xf32> to vector<1x8xf32>
    %4 = vector.extract_strided_slice %1 {offsets = [2, 0], sizes = [1, 8], strides = [1, 1]} : vector<4x8xf32> to vector<1x8xf32>
    %5 = vector.extract_strided_slice %1 {offsets = [3, 0], sizes = [1, 8], strides = [1, 1]} : vector<4x8xf32> to vector<1x8xf32>
    %6 = vector.extract_strided_slice %0 {offsets = [0, 0], sizes = [128, 8], strides = [1, 1]} : vector<128x16xf32> to vector<128x8xf32>
    %7 = vector.broadcast %2 : vector<1x8xf32> to vector<128x8xf32>
    %8 = arith.subf %6, %7 : vector<128x8xf32>
    %9 = vector.broadcast %4 : vector<1x8xf32> to vector<128x8xf32>
    %10 = arith.mulf %8, %9 : vector<128x8xf32>
    %11 = vector.extract_strided_slice %0 {offsets = [0, 8], sizes = [128, 8], strides = [1, 1]} : vector<128x16xf32> to vector<128x8xf32>
    %12 = vector.broadcast %3 : vector<1x8xf32> to vector<128x8xf32>
    %13 = arith.subf %11, %12 : vector<128x8xf32>
    %14 = vector.broadcast %4 : vector<1x8xf32> to vector<128x8xf32>
    %15 = arith.mulf %13, %14 : vector<128x8xf32>
    %16 = arith.mulf %10, %10 : vector<128x8xf32>
    %17 = arith.mulf %15, %15 : vector<128x8xf32>
    %18 = arith.addf %16, %17 : vector<128x8xf32>
    %cst = arith.constant 9.99999996E-13 : f32
    %19 = vector.broadcast %cst : f32 to vector<128x8xf32>
    %20 = arith.addf %18, %19 : vector<128x8xf32>
    %21 = math.sqrt %20 : vector<128x8xf32>
    %22 = vector.broadcast %5 : vector<1x8xf32> to vector<128x8xf32>
    %23 = arith.addf %21, %22 : vector<128x8xf32>
    %cst_3 = arith.constant 0.000000e+00 : f32
    %24 = vector.broadcast %cst_3 : f32 to vector<128x8xf32>
    %25 = arith.maximumf %23, %24 : vector<128x8xf32>
    %26 = tpu.reciprocal %21 {approx = true} : vector<128x8xf32> -> vector<128x8xf32>
    %27 = arith.mulf %25, %26 : vector<128x8xf32>
    %28 = arith.mulf %10, %27 : vector<128x8xf32>
    %29 = arith.mulf %15, %27 : vector<128x8xf32>
    %30 = tpu.concatenate %28, %29 in 1 : vector<128x8xf32>, vector<128x8xf32> -> vector<128x16xf32>
    %c0_4 = arith.constant 0 : index
    %c0_5 = arith.constant 0 : index
    %31 = vector.load %arg3[%c0_4, %c0_5] : memref<128x16xf32, #tpu.memory_space<vmem>>, vector<128x16xf32>
    tpu.vector_store %arg3[%c0_4, %c0_5], %30 {strides = array<i32>} : memref<128x16xf32, #tpu.memory_space<vmem>>, vector<128x16xf32>,
    return
  }
  func.func @transform_0(%arg0: i32) -> (i32, i32) {
    %c0_i32 = arith.constant 0 : i32
    %c0_i32_0 = arith.constant 0 : i32
    return %arg0, %c0_i32 : i32, i32
  }
  func.func @transform_1(%arg0: i32) -> (i32, i32) {
    %c0_i32 = arith.constant 0 : i32
    %c0_i32_0 = arith.constant 0 : i32
    %c0_i32_1 = arith.constant 0 : i32
    return %c0_i32, %c0_i32_0 : i32, i32
  }
  func.func @transform_2(%arg0: i32) -> (i32, i32) {
    %c0_i32 = arith.constant 0 : i32
    %c0_i32_0 = arith.constant 0 : i32
    return %arg0, %c0_i32 : i32, i32
  }
}

module attributes {stable_mosaic.version = 11 : i64} {
  func.func @conv_pool_kernel(%arg0: i32, %arg1: memref<1x10x10x16xf32, #tpu.memory_space<vmem>>, %arg2: memref<144x16xbf16, #tpu.memory_space<vmem>>, %arg3: memref<1x64x16xf32, #tpu.memory_space<vmem>>, %arg4: memref<1x1x16xf32, #tpu.memory_space<vmem>>) attributes {dimension_semantics = [#tpu.dimension_semantics<parallel>], iteration_bounds = array<i64: 2>, scalar_prefetch = 0 : i64, scratch_operands = 0 : i64, tpu.core_type = #tpu.core_type<tc>, window_params = [{transform_indices = @transform_0, window_bounds = array<i64: 1, 10, 10, 16>}, {pipeline_mode = #tpu.pipeline_mode<synchronous>, transform_indices = @transform_1, window_bounds = array<i64: 144, 16>}, {transform_indices = @transform_2, window_bounds = array<i64: 1, 64, 16>}, {transform_indices = @transform_3, window_bounds = array<i64: 1, 1, 16>}]} {
    %c0 = arith.constant 0 : index
    %c0_0 = arith.constant 0 : index
    %c0_1 = arith.constant 0 : index
    %c0_2 = arith.constant 0 : index
    %0 = vector.load %arg1[%c0, %c0_0, %c0_1, %c0_2] : memref<1x10x10x16xf32, #tpu.memory_space<vmem>>, vector<1x10x10x16xf32>
    %1 = vector.shape_cast %0 : vector<1x10x10x16xf32> to vector<10x10x16xf32>
    %2 = vector.extract_strided_slice %1 {offsets = [0, 0, 0], sizes = [8, 8, 16], strides = [1, 1, 1]} : vector<10x10x16xf32> to vector<8x8x16xf32>
    %3 = vector.extract_strided_slice %1 {offsets = [0, 1, 0], sizes = [8, 8, 16], strides = [1, 1, 1]} : vector<10x10x16xf32> to vector<8x8x16xf32>
    %4 = vector.extract_strided_slice %1 {offsets = [0, 2, 0], sizes = [8, 8, 16], strides = [1, 1, 1]} : vector<10x10x16xf32> to vector<8x8x16xf32>
    %5 = vector.extract_strided_slice %1 {offsets = [1, 0, 0], sizes = [8, 8, 16], strides = [1, 1, 1]} : vector<10x10x16xf32> to vector<8x8x16xf32>
    %6 = vector.extract_strided_slice %1 {offsets = [1, 1, 0], sizes = [8, 8, 16], strides = [1, 1, 1]} : vector<10x10x16xf32> to vector<8x8x16xf32>
    %7 = vector.extract_strided_slice %1 {offsets = [1, 2, 0], sizes = [8, 8, 16], strides = [1, 1, 1]} : vector<10x10x16xf32> to vector<8x8x16xf32>
    %8 = vector.extract_strided_slice %1 {offsets = [2, 0, 0], sizes = [8, 8, 16], strides = [1, 1, 1]} : vector<10x10x16xf32> to vector<8x8x16xf32>
    %9 = vector.extract_strided_slice %1 {offsets = [2, 1, 0], sizes = [8, 8, 16], strides = [1, 1, 1]} : vector<10x10x16xf32> to vector<8x8x16xf32>
    %10 = vector.extract_strided_slice %1 {offsets = [2, 2, 0], sizes = [8, 8, 16], strides = [1, 1, 1]} : vector<10x10x16xf32> to vector<8x8x16xf32>
    %11 = tpu.concatenate %2, %3, %4, %5, %6, %7, %8, %9, %10 in 2 : vector<8x8x16xf32>, vector<8x8x16xf32>, vector<8x8x16xf32>, vector<8x8x16xf32>, vector<8x8x16xf32>, vector<8x8x16xf32>, vector<8x8x16xf32>, vector<8x8x16xf32>, vector<8x8x16xf32> -> vector<8x8x144xf32>
    %12 = vector.shape_cast %11 : vector<8x8x144xf32> to vector<64x144xf32>
    %13 = arith.truncf %12 : vector<64x144xf32> to vector<64x144xbf16>
    %c0_3 = arith.constant 0 : index
    %c0_4 = arith.constant 0 : index
    %14 = vector.load %arg2[%c0_3, %c0_4] : memref<144x16xbf16, #tpu.memory_space<vmem>>, vector<144x16xbf16>
    %cst = arith.constant dense<0.000000e+00> : vector<64x16xf32>
    %15 = tpu.matmul %13, %14, %cst {dimension_numbers = #tpu.dot_dimension_numbers<[1], [0], [0], [1], [0, 0, 1, 1], [], []>} : vector<64x144xbf16>, vector<144x16xbf16>, vector<64x16xf32> -> vector<64x16xf32>
    %c0_5 = arith.constant 0 : index
    %c0_6 = arith.constant 0 : index
    %c0_7 = arith.constant 0 : index
    %16 = vector.load %arg3[%c0_5, %c0_6, %c0_7] : memref<1x64x16xf32, #tpu.memory_space<vmem>>, vector<1x64x16xf32>
    %17 = vector.shape_cast %16 : vector<1x64x16xf32> to vector<64x16xf32>
    %18 = vector.shape_cast %15 : vector<64x16xf32> to vector<1x64x16xf32>
    tpu.vector_store %arg3[%c0_5, %c0_6, %c0_7], %18 {strides = array<i32>} : memref<1x64x16xf32, #tpu.memory_space<vmem>>, vector<1x64x16xf32>,
    %cst_8 = arith.constant 1.000000e+00 : f32
    %19 = vector.broadcast %cst_8 : f32 to vector<1x64xf32>
    %cst_9 = arith.constant dense<0.000000e+00> : vector<1x16xf32>
    %20 = tpu.matmul %19, %15, %cst_9 {dimension_numbers = #tpu.dot_dimension_numbers<[1], [0], [0], [1], [0, 0, 1, 1], [], []>} : vector<1x64xf32>, vector<64x16xf32>, vector<1x16xf32> -> vector<1x16xf32>
    %c0_10 = arith.constant 0 : index
    %c0_11 = arith.constant 0 : index
    %c0_12 = arith.constant 0 : index
    %21 = vector.load %arg4[%c0_10, %c0_11, %c0_12] : memref<1x1x16xf32, #tpu.memory_space<vmem>>, vector<1x1x16xf32>
    %22 = vector.shape_cast %21 : vector<1x1x16xf32> to vector<1x16xf32>
    %23 = vector.shape_cast %20 : vector<1x16xf32> to vector<1x1x16xf32>
    tpu.vector_store %arg4[%c0_10, %c0_11, %c0_12], %23 {strides = array<i32>} : memref<1x1x16xf32, #tpu.memory_space<vmem>>, vector<1x1x16xf32>,
    return
  }
  func.func @transform_0(%arg0: i32) -> (i32, i32, i32, i32) {
    %c0_i32 = arith.constant 0 : i32
    %c0_i32_0 = arith.constant 0 : i32
    %c0_i32_1 = arith.constant 0 : i32
    %c0_i32_2 = arith.constant 0 : i32
    return %arg0, %c0_i32, %c0_i32_0, %c0_i32_1 : i32, i32, i32, i32
  }
  func.func @transform_1(%arg0: i32) -> (i32, i32) {
    %c0_i32 = arith.constant 0 : i32
    %c0_i32_0 = arith.constant 0 : i32
    %c0_i32_1 = arith.constant 0 : i32
    return %c0_i32, %c0_i32_0 : i32, i32
  }
  func.func @transform_2(%arg0: i32) -> (i32, i32, i32) {
    %c0_i32 = arith.constant 0 : i32
    %c0_i32_0 = arith.constant 0 : i32
    %c0_i32_1 = arith.constant 0 : i32
    return %arg0, %c0_i32, %c0_i32_0 : i32, i32, i32
  }
  func.func @transform_3(%arg0: i32) -> (i32, i32, i32) {
    %c0_i32 = arith.constant 0 : i32
    %c0_i32_0 = arith.constant 0 : i32
    %c0_i32_1 = arith.constant 0 : i32
    return %arg0, %c0_i32, %c0_i32_0 : i32, i32, i32
  }
}

module attributes {stable_mosaic.version = 11 : i64} {
  func.func @conv_pool_kernel(%arg0: i32, %arg1: memref<1x10x10x16xf32, #tpu.memory_space<vmem>>, %arg2: memref<144x64xbf16, #tpu.memory_space<vmem>>, %arg3: memref<1x64x16xf32, #tpu.memory_space<vmem>>, %arg4: memref<1x1x16xf32, #tpu.memory_space<vmem>>) attributes {dimension_semantics = [#tpu.dimension_semantics<parallel>], iteration_bounds = array<i64: 2>, scalar_prefetch = 0 : i64, scratch_operands = 0 : i64, tpu.core_type = #tpu.core_type<tc>, window_params = [{transform_indices = @transform_0, window_bounds = array<i64: 1, 10, 10, 16>}, {pipeline_mode = #tpu.pipeline_mode<synchronous>, transform_indices = @transform_1, window_bounds = array<i64: 144, 64>}, {transform_indices = @transform_2, window_bounds = array<i64: 1, 64, 16>}, {transform_indices = @transform_3, window_bounds = array<i64: 1, 1, 16>}]} {
    %c0 = arith.constant 0 : index
    %c0_0 = arith.constant 0 : index
    %c0_1 = arith.constant 0 : index
    %c0_2 = arith.constant 0 : index
    %0 = vector.load %arg1[%c0, %c0_0, %c0_1, %c0_2] : memref<1x10x10x16xf32, #tpu.memory_space<vmem>>, vector<1x10x10x16xf32>
    %1 = vector.shape_cast %0 : vector<1x10x10x16xf32> to vector<10x10x16xf32>
    %2 = vector.extract_strided_slice %1 {offsets = [0, 0, 0], sizes = [8, 8, 16], strides = [1, 1, 1]} : vector<10x10x16xf32> to vector<8x8x16xf32>
    %3 = vector.extract_strided_slice %1 {offsets = [0, 1, 0], sizes = [8, 8, 16], strides = [1, 1, 1]} : vector<10x10x16xf32> to vector<8x8x16xf32>
    %4 = vector.extract_strided_slice %1 {offsets = [0, 2, 0], sizes = [8, 8, 16], strides = [1, 1, 1]} : vector<10x10x16xf32> to vector<8x8x16xf32>
    %5 = vector.extract_strided_slice %1 {offsets = [1, 0, 0], sizes = [8, 8, 16], strides = [1, 1, 1]} : vector<10x10x16xf32> to vector<8x8x16xf32>
    %6 = vector.extract_strided_slice %1 {offsets = [1, 1, 0], sizes = [8, 8, 16], strides = [1, 1, 1]} : vector<10x10x16xf32> to vector<8x8x16xf32>
    %7 = vector.extract_strided_slice %1 {offsets = [1, 2, 0], sizes = [8, 8, 16], strides = [1, 1, 1]} : vector<10x10x16xf32> to vector<8x8x16xf32>
    %8 = vector.extract_strided_slice %1 {offsets = [2, 0, 0], sizes = [8, 8, 16], strides = [1, 1, 1]} : vector<10x10x16xf32> to vector<8x8x16xf32>
    %9 = vector.extract_strided_slice %1 {offsets = [2, 1, 0], sizes = [8, 8, 16], strides = [1, 1, 1]} : vector<10x10x16xf32> to vector<8x8x16xf32>
    %10 = vector.extract_strided_slice %1 {offsets = [2, 2, 0], sizes = [8, 8, 16], strides = [1, 1, 1]} : vector<10x10x16xf32> to vector<8x8x16xf32>
    %11 = tpu.concatenate %2, %3, %4, %5, %6, %7, %8, %9, %10 in 2 : vector<8x8x16xf32>, vector<8x8x16xf32>, vector<8x8x16xf32>, vector<8x8x16xf32>, vector<8x8x16xf32>, vector<8x8x16xf32>, vector<8x8x16xf32>, vector<8x8x16xf32>, vector<8x8x16xf32> -> vector<8x8x144xf32>
    %12 = vector.shape_cast %11 : vector<8x8x144xf32> to vector<64x144xf32>
    %13 = arith.truncf %12 : vector<64x144xf32> to vector<64x144xbf16>
    %c0_3 = arith.constant 0 : index
    %c0_4 = arith.constant 0 : index
    %14 = vector.load %arg2[%c0_3, %c0_4] : memref<144x64xbf16, #tpu.memory_space<vmem>>, vector<144x64xbf16>
    %cst = arith.constant dense<0.000000e+00> : vector<64x64xf32>
    %15 = tpu.matmul %13, %14, %cst {dimension_numbers = #tpu.dot_dimension_numbers<[1], [0], [0], [1], [0, 0, 1, 1], [], []>} : vector<64x144xbf16>, vector<144x64xbf16>, vector<64x64xf32> -> vector<64x64xf32>
    %16 = vector.extract_strided_slice %15 {offsets = [0, 0], sizes = [64, 8], strides = [1, 1]} : vector<64x64xf32> to vector<64x8xf32>
    %17 = vector.extract_strided_slice %15 {offsets = [0, 8], sizes = [64, 8], strides = [1, 1]} : vector<64x64xf32> to vector<64x8xf32>
    %18 = arith.mulf %16, %16 : vector<64x8xf32>
    %19 = arith.mulf %17, %17 : vector<64x8xf32>
    %20 = arith.addf %18, %19 : vector<64x8xf32>
    %21 = vector.extract_strided_slice %15 {offsets = [0, 16], sizes = [64, 8], strides = [1, 1]} : vector<64x64xf32> to vector<64x8xf32>
    %22 = vector.extract_strided_slice %15 {offsets = [0, 24], sizes = [64, 8], strides = [1, 1]} : vector<64x64xf32> to vector<64x8xf32>
    %23 = arith.mulf %21, %21 : vector<64x8xf32>
    %24 = arith.mulf %22, %22 : vector<64x8xf32>
    %25 = arith.addf %23, %24 : vector<64x8xf32>
    %26 = arith.cmpf ogt, %25, %20 : vector<64x8xf32>
    %27 = arith.select %26, %21, %16 : vector<64x8xi1>, vector<64x8xf32>
    %28 = arith.select %26, %22, %17 : vector<64x8xi1>, vector<64x8xf32>
    %29 = arith.select %26, %25, %20 : vector<64x8xi1>, vector<64x8xf32>
    %30 = vector.extract_strided_slice %15 {offsets = [0, 32], sizes = [64, 8], strides = [1, 1]} : vector<64x64xf32> to vector<64x8xf32>
    %31 = vector.extract_strided_slice %15 {offsets = [0, 40], sizes = [64, 8], strides = [1, 1]} : vector<64x64xf32> to vector<64x8xf32>
    %32 = arith.mulf %30, %30 : vector<64x8xf32>
    %33 = arith.mulf %31, %31 : vector<64x8xf32>
    %34 = arith.addf %32, %33 : vector<64x8xf32>
    %35 = arith.cmpf ogt, %34, %29 : vector<64x8xf32>
    %36 = arith.select %35, %30, %27 : vector<64x8xi1>, vector<64x8xf32>
    %37 = arith.select %35, %31, %28 : vector<64x8xi1>, vector<64x8xf32>
    %38 = arith.select %35, %34, %29 : vector<64x8xi1>, vector<64x8xf32>
    %39 = vector.extract_strided_slice %15 {offsets = [0, 48], sizes = [64, 8], strides = [1, 1]} : vector<64x64xf32> to vector<64x8xf32>
    %40 = vector.extract_strided_slice %15 {offsets = [0, 56], sizes = [64, 8], strides = [1, 1]} : vector<64x64xf32> to vector<64x8xf32>
    %41 = arith.mulf %39, %39 : vector<64x8xf32>
    %42 = arith.mulf %40, %40 : vector<64x8xf32>
    %43 = arith.addf %41, %42 : vector<64x8xf32>
    %44 = arith.cmpf ogt, %43, %38 : vector<64x8xf32>
    %45 = arith.select %44, %39, %36 : vector<64x8xi1>, vector<64x8xf32>
    %46 = arith.select %44, %40, %37 : vector<64x8xi1>, vector<64x8xf32>
    %47 = tpu.concatenate %45, %46 in 1 : vector<64x8xf32>, vector<64x8xf32> -> vector<64x16xf32>
    %c0_5 = arith.constant 0 : index
    %c0_6 = arith.constant 0 : index
    %c0_7 = arith.constant 0 : index
    %48 = vector.load %arg3[%c0_5, %c0_6, %c0_7] : memref<1x64x16xf32, #tpu.memory_space<vmem>>, vector<1x64x16xf32>
    %49 = vector.shape_cast %48 : vector<1x64x16xf32> to vector<64x16xf32>
    %50 = vector.shape_cast %47 : vector<64x16xf32> to vector<1x64x16xf32>
    tpu.vector_store %arg3[%c0_5, %c0_6, %c0_7], %50 {strides = array<i32>} : memref<1x64x16xf32, #tpu.memory_space<vmem>>, vector<1x64x16xf32>,
    %cst_8 = arith.constant 1.000000e+00 : f32
    %51 = vector.broadcast %cst_8 : f32 to vector<1x64xf32>
    %cst_9 = arith.constant dense<0.000000e+00> : vector<1x16xf32>
    %52 = tpu.matmul %51, %47, %cst_9 {dimension_numbers = #tpu.dot_dimension_numbers<[1], [0], [0], [1], [0, 0, 1, 1], [], []>} : vector<1x64xf32>, vector<64x16xf32>, vector<1x16xf32> -> vector<1x16xf32>
    %c0_10 = arith.constant 0 : index
    %c0_11 = arith.constant 0 : index
    %c0_12 = arith.constant 0 : index
    %53 = vector.load %arg4[%c0_10, %c0_11, %c0_12] : memref<1x1x16xf32, #tpu.memory_space<vmem>>, vector<1x1x16xf32>
    %54 = vector.shape_cast %53 : vector<1x1x16xf32> to vector<1x16xf32>
    %55 = vector.shape_cast %52 : vector<1x16xf32> to vector<1x1x16xf32>
    tpu.vector_store %arg4[%c0_10, %c0_11, %c0_12], %55 {strides = array<i32>} : memref<1x1x16xf32, #tpu.memory_space<vmem>>, vector<1x1x16xf32>,
    return
  }
  func.func @transform_0(%arg0: i32) -> (i32, i32, i32, i32) {
    %c0_i32 = arith.constant 0 : i32
    %c0_i32_0 = arith.constant 0 : i32
    %c0_i32_1 = arith.constant 0 : i32
    %c0_i32_2 = arith.constant 0 : i32
    return %arg0, %c0_i32, %c0_i32_0, %c0_i32_1 : i32, i32, i32, i32
  }
  func.func @transform_1(%arg0: i32) -> (i32, i32) {
    %c0_i32 = arith.constant 0 : i32
    %c0_i32_0 = arith.constant 0 : i32
    %c0_i32_1 = arith.constant 0 : i32
    return %c0_i32, %c0_i32_0 : i32, i32
  }
  func.func @transform_2(%arg0: i32) -> (i32, i32, i32) {
    %c0_i32 = arith.constant 0 : i32
    %c0_i32_0 = arith.constant 0 : i32
    %c0_i32_1 = arith.constant 0 : i32
    return %arg0, %c0_i32, %c0_i32_0 : i32, i32, i32
  }
  func.func @transform_3(%arg0: i32) -> (i32, i32, i32) {
    %c0_i32 = arith.constant 0 : i32
    %c0_i32_0 = arith.constant 0 : i32
    %c0_i32_1 = arith.constant 0 : i32
    return %arg0, %c0_i32, %c0_i32_0 : i32, i32, i32
  }
}

</mosaic_0001>

<llo_original>
// kernel: down_cmplx_forward.10
$region0: #{down_cmplx_forward.10}
  #allocation0 [shape = 'u32[]', space=smem, size = 0x4, offset = 0x4, fixed_abs, tag = 'smem constant byte address 0x4 - core index']
  #allocation1 [shape = 'u32[144,128]{1,0:T(1,128)}', space=vmem, size = 0x12000, scoped, tag = 'internal scratch']
  %s0 = inlined_call_operand.vmem [shape: f32[128,16], index: 0, kind: input, shape index: {}]
  %s1 = inlined_call_operand.vmem [shape: f32[1,16], index: 1, kind: input, shape index: {}]
  %s2 = inlined_call_operand.vmem [shape: f32[1,8,8], index: 2, kind: output, shape index: {}]
  %s3 = sld [smem:[#allocation0]]
  $region18: #{down_cmplx_forward.10} parent=0
    _
  %s5 = ssub.s32 1, %s3
  %s6 = scalar_select 0, %s5, %s3
  // Predicated region
  $region2: #{down_cmplx_forward.10} parent=0 // pred_check
    _
  $region3: #{down_cmplx_forward.10} parent=0 // pred_check_branch
    %8 = sbr.rel (0) target = $region5
  $region4: #{down_cmplx_forward.10} parent=0 // pred_region
    _
  $region5: #{down_cmplx_forward.10} parent=0 // pred_fallthru
    _
  // Predicated region
  $region6: #{down_cmplx_forward.10} parent=0 // pred_check
    _
  $region7: #{down_cmplx_forward.10} parent=0 // pred_check_branch
    %10 = sbr.rel (0) target = $region9
  $region8: #{down_cmplx_forward.10} parent=0 // pred_region
    _
  $region9: #{down_cmplx_forward.10} parent=0 // pred_fallthru
    _
  %v11 = vld [vmem:[%s0] sm:$0xff]
  %v12 = vld [vmem:[%s0 + $0x8] sm:$0xff]
  %v13 = vld [vmem:[%s0 + $0x10] sm:$0xff]
  %v14 = vld [vmem:[%s0 + $0x18] sm:$0xff]
  %v15 = vld [vmem:[%s0 + $0x20] sm:$0xff]
  %v16 = vld [vmem:[%s0 + $0x28] sm:$0xff]
  %v17 = vld [vmem:[%s0 + $0x30] sm:$0xff]
  %v18 = vld [vmem:[%s0 + $0x38] sm:$0xff]
  %v19 = vld [vmem:[%s0 + $0x40] sm:$0xff]
  %v20 = vld [vmem:[%s0 + $0x48] sm:$0xff]
  %v21 = vld [vmem:[%s0 + $0x50] sm:$0xff]
  %v22 = vld [vmem:[%s0 + $0x58] sm:$0xff]
  %v23 = vld [vmem:[%s0 + $0x60] sm:$0xff]
  %v24 = vld [vmem:[%s0 + $0x68] sm:$0xff]
  %v25 = vld [vmem:[%s0 + $0x70] sm:$0xff]
  %v26 = vld [vmem:[%s0 + $0x78] sm:$0xff]
  %v27 = vld [vmem:[%s1] sm:$0x1]
  %v29 = vlaneseq
  %v30 = vshrl.u32 %v29, 7
  %v31 = vsub.s32 0, %v30
  %v32 = vrot.slane %v27, %v31
  %v34 = vsub.f32 %v11, %v32
  %v35 = vsub.f32 %v12, %v32
  %v36 = vsub.f32 %v13, %v32
  %v37 = vsub.f32 %v14, %v32
  %v38 = vsub.f32 %v15, %v32
  %v39 = vsub.f32 %v16, %v32
  %v40 = vsub.f32 %v17, %v32
  %v41 = vsub.f32 %v18, %v32
  %v42 = vsub.f32 %v19, %v32
  %v43 = vsub.f32 %v20, %v32
  %v44 = vsub.f32 %v21, %v32
  %v45 = vsub.f32 %v22, %v32
  %v46 = vsub.f32 %v23, %v32
  %v47 = vsub.f32 %v24, %v32
  %v48 = vsub.f32 %v25, %v32
  %v49 = vsub.f32 %v26, %v32
  %v50 = vmul.f32 %v34, %v34
  %v51 = vmul.f32 %v35, %v35
  %v52 = vmul.f32 %v36, %v36
  %v53 = vmul.f32 %v37, %v37
  %v54 = vmul.f32 %v38, %v38
  %v55 = vmul.f32 %v39, %v39
  %v56 = vmul.f32 %v40, %v40
  %v57 = vmul.f32 %v41, %v41
  %v58 = vmul.f32 %v42, %v42
  %v59 = vmul.f32 %v43, %v43
  %v60 = vmul.f32 %v44, %v44
  %v61 = vmul.f32 %v45, %v45
  %v62 = vmul.f32 %v46, %v46
  %v63 = vmul.f32 %v47, %v47
  %v64 = vmul.f32 %v48, %v48
  %v65 = vmul.f32 %v49, %v49
  %82 = vrot.lane.b32.xlu0 %v50, 120
  %v83 = vpop.permute.xlu0 %82
  %84 = vrot.lane.b32.xlu0 %v51, 120
  %v85 = vpop.permute.xlu0 %84
  %86 = vrot.lane.b32.xlu0 %v52, 120
  %v87 = vpop.permute.xlu0 %86
  %88 = vrot.lane.b32.xlu0 %v53, 120
  %v89 = vpop.permute.xlu0 %88
  %90 = vrot.lane.b32.xlu0 %v54, 120
  %v91 = vpop.permute.xlu0 %90
  %92 = vrot.lane.b32.xlu0 %v55, 120
  %v93 = vpop.permute.xlu0 %92
  %94 = vrot.lane.b32.xlu0 %v56, 120
  %v95 = vpop.permute.xlu0 %94
  %96 = vrot.lane.b32.xlu0 %v57, 120
  %v97 = vpop.permute.xlu0 %96
  %98 = vrot.lane.b32.xlu0 %v58, 120
  %v99 = vpop.permute.xlu0 %98
  %100 = vrot.lane.b32.xlu0 %v59, 120
  %v101 = vpop.permute.xlu0 %100
  %102 = vrot.lane.b32.xlu0 %v60, 120
  %v103 = vpop.permute.xlu0 %102
  %104 = vrot.lane.b32.xlu0 %v61, 120
  %v105 = vpop.permute.xlu0 %104
  %106 = vrot.lane.b32.xlu0 %v62, 120
  %v107 = vpop.permute.xlu0 %106
  %108 = vrot.lane.b32.xlu0 %v63, 120
  %v109 = vpop.permute.xlu0 %108
  %110 = vrot.lane.b32.xlu0 %v64, 120
  %v111 = vpop.permute.xlu0 %110
  %112 = vrot.lane.b32.xlu0 %v65, 120
  %v113 = vpop.permute.xlu0 %112
  %v130 = vadd.f32 %v50, %v83
  %v131 = vadd.f32 %v51, %v85
  %v132 = vadd.f32 %v52, %v87
  %v133 = vadd.f32 %v53, %v89
  %v134 = vadd.f32 %v54, %v91
  %v135 = vadd.f32 %v55, %v93
  %v136 = vadd.f32 %v56, %v95
  %v137 = vadd.f32 %v57, %v97
  %v138 = vadd.f32 %v58, %v99
  %v139 = vadd.f32 %v59, %v101
  %v140 = vadd.f32 %v60, %v103
  %v141 = vadd.f32 %v61, %v105
  %v142 = vadd.f32 %v62, %v107
  %v143 = vadd.f32 %v63, %v109
  %v144 = vadd.f32 %v64, %v111
  %v145 = vadd.f32 %v65, %v113
  %v146 = vadd.f32 %v130, 1e-12
  %v147 = vadd.f32 %v131, 1e-12
  %v148 = vadd.f32 %v132, 1e-12
  %v149 = vadd.f32 %v133, 1e-12
  %v150 = vadd.f32 %v134, 1e-12
  %v151 = vadd.f32 %v135, 1e-12
  %v152 = vadd.f32 %v136, 1e-12
  %v153 = vadd.f32 %v137, 1e-12
  %v154 = vadd.f32 %v138, 1e-12
  %v155 = vadd.f32 %v139, 1e-12
  %v156 = vadd.f32 %v140, 1e-12
  %v157 = vadd.f32 %v141, 1e-12
  %v158 = vadd.f32 %v142, 1e-12
  %v159 = vadd.f32 %v143, 1e-12
  %v160 = vadd.f32 %v144, 1e-12
  %v161 = vadd.f32 %v145, 1e-12
  %v162 = vrsqrt.pop %v146
  %v163 = vmul.f32 %v146, %v162
  %vm164 = vcmp.eq.f32.partialorder %v146, inf
  %v165 = vsel %vm164, %v146, %v163
  %vm166 = vcmp.eq.f32.partialorder %v146, 0.0
  %v167 = vand.u32 %v146, 2147483648
  %v168 = vsel %vm166, %v167, %v165
  %v169 = vrsqrt.pop %v147
  %v170 = vmul.f32 %v147, %v169
  %vm171 = vcmp.eq.f32.partialorder %v147, inf
  %v172 = vsel %vm171, %v147, %v170
  %vm173 = vcmp.eq.f32.partialorder %v147, 0.0
  %v174 = vand.u32 %v147, 2147483648
  %v175 = vsel %vm173, %v174, %v172
  %v176 = vrsqrt.pop %v148
  %v177 = vmul.f32 %v148, %v176
  %vm178 = vcmp.eq.f32.partialorder %v148, inf
  %v179 = vsel %vm178, %v148, %v177
  %vm180 = vcmp.eq.f32.partialorder %v148, 0.0
  %v181 = vand.u32 %v148, 2147483648
  %v182 = vsel %vm180, %v181, %v179
  %v183 = vrsqrt.pop %v149
  %v184 = vmul.f32 %v149, %v183
  %vm185 = vcmp.eq.f32.partialorder %v149, inf
  %v186 = vsel %vm185, %v149, %v184
  %vm187 = vcmp.eq.f32.partialorder %v149, 0.0
  %v188 = vand.u32 %v149, 2147483648
  %v189 = vsel %vm187, %v188, %v186
  %v190 = vrsqrt.pop %v150
  %v191 = vmul.f32 %v150, %v190
  %vm192 = vcmp.eq.f32.partialorder %v150, inf
  %v193 = vsel %vm192, %v150, %v191
  %vm194 = vcmp.eq.f32.partialorder %v150, 0.0
  %v195 = vand.u32 %v150, 2147483648
  %v196 = vsel %vm194, %v195, %v193
  %v197 = vrsqrt.pop %v151
  %v198 = vmul.f32 %v151, %v197
  %vm199 = vcmp.eq.f32.partialorder %v151, inf
  %v200 = vsel %vm199, %v151, %v198
  %vm201 = vcmp.eq.f32.partialorder %v151, 0.0
  %v202 = vand.u32 %v151, 2147483648
  %v203 = vsel %vm201, %v202, %v200
  %v204 = vrsqrt.pop %v152
  %v205 = vmul.f32 %v152, %v204
  %vm206 = vcmp.eq.f32.partialorder %v152, inf
  %v207 = vsel %vm206, %v152, %v205
  %vm208 = vcmp.eq.f32.partialorder %v152, 0.0
  %v209 = vand.u32 %v152, 2147483648
  %v210 = vsel %vm208, %v209, %v207
  %v211 = vrsqrt.pop %v153
  %v212 = vmul.f32 %v153, %v211
  %vm213 = vcmp.eq.f32.partialorder %v153, inf
  %v214 = vsel %vm213, %v153, %v212
  %vm215 = vcmp.eq.f32.partialorder %v153, 0.0
  %v216 = vand.u32 %v153, 2147483648
  %v217 = vsel %vm215, %v216, %v214
  %v218 = vrsqrt.pop %v154
  %v219 = vmul.f32 %v154, %v218
  %vm220 = vcmp.eq.f32.partialorder %v154, inf
  %v221 = vsel %vm220, %v154, %v219
  %vm222 = vcmp.eq.f32.partialorder %v154, 0.0
  %v223 = vand.u32 %v154, 2147483648
  %v224 = vsel %vm222, %v223, %v221
  %v225 = vrsqrt.pop %v155
  %v226 = vmul.f32 %v155, %v225
  %vm227 = vcmp.eq.f32.partialorder %v155, inf
  %v228 = vsel %vm227, %v155, %v226
  %vm229 = vcmp.eq.f32.partialorder %v155, 0.0
  %v230 = vand.u32 %v155, 2147483648
  %v231 = vsel %vm229, %v230, %v228
  %v232 = vrsqrt.pop %v156
  %v233 = vmul.f32 %v156, %v232
  %vm234 = vcmp.eq.f32.partialorder %v156, inf
  %v235 = vsel %vm234, %v156, %v233
  %vm236 = vcmp.eq.f32.partialorder %v156, 0.0
  %v237 = vand.u32 %v156, 2147483648
  %v238 = vsel %vm236, %v237, %v235
  %v239 = vrsqrt.pop %v157
  %v240 = vmul.f32 %v157, %v239
  %vm241 = vcmp.eq.f32.partialorder %v157, inf
  %v242 = vsel %vm241, %v157, %v240
  %vm243 = vcmp.eq.f32.partialorder %v157, 0.0
  %v244 = vand.u32 %v157, 2147483648
  %v245 = vsel %vm243, %v244, %v242
  %v246 = vrsqrt.pop %v158
  %v247 = vmul.f32 %v158, %v246
  %vm248 = vcmp.eq.f32.partialorder %v158, inf
  %v249 = vsel %vm248, %v158, %v247
  %vm250 = vcmp.eq.f32.partialorder %v158, 0.0
  %v251 = vand.u32 %v158, 2147483648
  %v252 = vsel %vm250, %v251, %v249
  %v253 = vrsqrt.pop %v159
  %v254 = vmul.f32 %v159, %v253
  %vm255 = vcmp.eq.f32.partialorder %v159, inf
  %v256 = vsel %vm255, %v159, %v254
  %vm257 = vcmp.eq.f32.partialorder %v159, 0.0
  %v258 = vand.u32 %v159, 2147483648
  %v259 = vsel %vm257, %v258, %v256
  %v260 = vrsqrt.pop %v160
  %v261 = vmul.f32 %v160, %v260
  %vm262 = vcmp.eq.f32.partialorder %v160, inf
  %v263 = vsel %vm262, %v160, %v261
  %vm264 = vcmp.eq.f32.partialorder %v160, 0.0
  %v265 = vand.u32 %v160, 2147483648
  %v266 = vsel %vm264, %v265, %v263
  %v267 = vrsqrt.pop %v161
  %v268 = vmul.f32 %v161, %v267
  %vm269 = vcmp.eq.f32.partialorder %v161, inf
  %v270 = vsel %vm269, %v161, %v268
  %vm271 = vcmp.eq.f32.partialorder %v161, 0.0
  %v272 = vand.u32 %v161, 2147483648
  %v273 = vsel %vm271, %v272, %v270
  %274 = vmatprep.subr.mxu0 0.0
  %275 = vmatpush1.msra.mxu0 %v273
  %276 = vmatprep.subr.mxu0 0.0
  %277 = vmatpush1.msra.mxu0 %v266
  %278 = vmatprep.subr.mxu0 0.0
  %279 = vmatpush1.msra.mxu0 %v259
  %280 = vmatprep.subr.mxu0 0.0
  %281 = vmatpush1.msra.mxu0 %v252
  %282 = vmatprep.subr.mxu0 0.0
  %283 = vmatpush1.msra.mxu0 %v245
  %284 = vmatprep.subr.mxu0 0.0
  %285 = vmatpush1.msra.mxu0 %v238
  %286 = vmatprep.subr.mxu0 0.0
  %287 = vmatpush1.msra.mxu0 %v231
  %288 = vmatprep.subr.mxu0 0.0
  %289 = vmatpush1.msra.mxu0 %v224
  %290 = vmatprep.subr.mxu0 0.0
  %291 = vmatpush1.msra.mxu0 %v217
  %292 = vmatprep.subr.mxu0 0.0
  %293 = vmatpush1.msra.mxu0 %v210
  %294 = vmatprep.subr.mxu0 0.0
  %295 = vmatpush1.msra.mxu0 %v203
  %296 = vmatprep.subr.mxu0 0.0
  %297 = vmatpush1.msra.mxu0 %v196
  %298 = vmatprep.subr.mxu0 0.0
  %299 = vmatpush1.msra.mxu0 %v189
  %300 = vmatprep.subr.mxu0 0.0
  %301 = vmatpush1.msra.mxu0 %v182
  %302 = vmatprep.subr.mxu0 0.0
  %303 = vmatpush1.msra.mxu0 %v175
  %304 = vmatprep.subr.mxu0 0.0
  %305 = vmatpush1.msra.mxu0 %v168
  %306 = vmatprep.subr.mxu0 0.0
  %307 = vmatpush2.msra.mxu0 0.0
  %308 = vmatprep.subr.mxu0 0.0
  %309 = vmatpush2.msra.mxu0 0.0
  %310 = vmatprep.subr.mxu0 0.0
  %311 = vmatpush2.msra.mxu0 0.0
  %312 = vmatprep.subr.mxu0 0.0
  %313 = vmatpush2.msra.mxu0 0.0
  %314 = vmatprep.subr.mxu0 0.0
  %315 = vmatpush2.msra.mxu0 0.0
  %316 = vmatprep.subr.mxu0 0.0
  %317 = vmatpush2.msra.mxu0 0.0
  %318 = vmatprep.subr.mxu0 0.0
  %319 = vmatpush2.msra.mxu0 0.0
  %320 = vmatprep.subr.mxu0 0.0
  %321 = vmatpush2.msra.mxu0 0.0
  %322 = vmatprep.subr.mxu0 0.0
  %323 = vmatpush2.msra.mxu0 0.0
  %324 = vmatprep.subr.mxu0 0.0
  %325 = vmatpush2.msra.mxu0 0.0
  %326 = vmatprep.subr.mxu0 0.0
  %327 = vmatpush2.msra.mxu0 0.0
  %328 = vmatprep.subr.mxu0 0.0
  %329 = vmatpush2.msra.mxu0 0.0
  %330 = vmatprep.subr.mxu0 0.0
  %331 = vmatpush2.msra.mxu0 0.0
  %332 = vmatprep.subr.mxu0 0.0
  %333 = vmatpush2.msra.mxu0 0.0
  %334 = vmatprep.subr.mxu0 0.0
  %335 = vmatpush2.msra.mxu0 0.0
  %336 = vmatprep.subr.mxu0 0.0
  %337 = vmatpush2.msra.mxu0 0.0
  %338 = vmatprep.mubr.f32.mxu0 0.0
  %339 = vmatmul.mubr.f32.gmra.mxu0 1.0
  %v340 = vpop.f32.mrf.mxu0
  %v341 = vadd.f32 0.0, %v340
  %v342 = vpop.f32.mrf.mxu0
  %343 = vdwg.mxu0
  %344 = vmatprep.subr.mxu0 0.0
  %345 = vmatpush1.msra.mxu0 %v161
  %346 = vmatprep.subr.mxu0 0.0
  %347 = vmatpush1.msra.mxu0 %v160
  %348 = vmatprep.subr.mxu0 0.0
  %349 = vmatpush1.msra.mxu0 %v159
  %350 = vmatprep.subr.mxu0 0.0
  %351 = vmatpush1.msra.mxu0 %v158
  %352 = vmatprep.subr.mxu0 0.0
  %353 = vmatpush1.msra.mxu0 %v157
  %354 = vmatprep.subr.mxu0 0.0
  %355 = vmatpush1.msra.mxu0 %v156
  %356 = vmatprep.subr.mxu0 0.0
  %357 = vmatpush1.msra.mxu0 %v155
  %358 = vmatprep.subr.mxu0 0.0
  %359 = vmatpush1.msra.mxu0 %v154
  %360 = vmatprep.subr.mxu0 0.0
  %361 = vmatpush1.msra.mxu0 %v153
  %362 = vmatprep.subr.mxu0 0.0
  %363 = vmatpush1.msra.mxu0 %v152
  %364 = vmatprep.subr.mxu0 0.0
  %365 = vmatpush1.msra.mxu0 %v151
  %366 = vmatprep.subr.mxu0 0.0
  %367 = vmatpush1.msra.mxu0 %v150
  %368 = vmatprep.subr.mxu0 0.0
  %369 = vmatpush1.msra.mxu0 %v149
  %370 = vmatprep.subr.mxu0 0.0
  %371 = vmatpush1.msra.mxu0 %v148
  %372 = vmatprep.subr.mxu0 0.0
  %373 = vmatpush1.msra.mxu0 %v147
  %374 = vmatprep.subr.mxu0 0.0
  %375 = vmatpush1.msra.mxu0 %v146
  %376 = vmatprep.subr.mxu0 0.0
  %377 = vmatpush2.msra.mxu0 0.0
  %378 = vmatprep.subr.mxu0 0.0
  %379 = vmatpush2.msra.mxu0 0.0
  %380 = vmatprep.subr.mxu0 0.0
  %381 = vmatpush2.msra.mxu0 0.0
  %382 = vmatprep.subr.mxu0 0.0
  %383 = vmatpush2.msra.mxu0 0.0
  %384 = vmatprep.subr.mxu0 0.0
  %385 = vmatpush2.msra.mxu0 0.0
  %386 = vmatprep.subr.mxu0 0.0
  %387 = vmatpush2.msra.mxu0 0.0
  %388 = vmatprep.subr.mxu0 0.0
  %389 = vmatpush2.msra.mxu0 0.0
  %390 = vmatprep.subr.mxu0 0.0
  %391 = vmatpush2.msra.mxu0 0.0
  %392 = vmatprep.subr.mxu0 0.0
  %393 = vmatpush2.msra.mxu0 0.0
  %394 = vmatprep.subr.mxu0 0.0
  %395 = vmatpush2.msra.mxu0 0.0
  %396 = vmatprep.subr.mxu0 0.0
  %397 = vmatpush2.msra.mxu0 0.0
  %398 = vmatprep.subr.mxu0 0.0
  %399 = vmatpush2.msra.mxu0 0.0
  %400 = vmatprep.subr.mxu0 0.0
  %401 = vmatpush2.msra.mxu0 0.0
  %402 = vmatprep.subr.mxu0 0.0
  %403 = vmatpush2.msra.mxu0 0.0
  %404 = vmatprep.subr.mxu0 0.0
  %405 = vmatpush2.msra.mxu0 0.0
  %406 = vmatprep.subr.mxu0 0.0
  %407 = vmatpush2.msra.mxu0 0.0
  %408 = vmatprep.mubr.f32.mxu0 0.0
  %409 = vmatmul.mubr.f32.gmra.mxu0 1.0
  %v410 = vpop.f32.mrf.mxu0
  %v411 = vadd.f32 0.0, %v410
  %v412 = vpop.f32.mrf.mxu0
  %413 = vdwg.mxu0
  %v415 = vrot.slane %v411, 7
  %vm417 = vcmask 1040384
  %v418 = vsel %vm417, %v341, %v415
  %vm419 = vcmask 1041408
  %v420 = vsel %vm419, %v418, 0.0
  %vm421 = vcmask 64512
  %422 = vst.msk [vmem:[%s2] sm:$0xff] %vm421, %v420
  // Predicated region
  $region10: #{down_cmplx_forward.10} parent=0 // pred_check
    _
  $region11: #{down_cmplx_forward.10} parent=0 // pred_check_branch
    %424 = sbr.rel (0) target = $region13
  $region12: #{down_cmplx_forward.10} parent=0 // pred_region
    _
  $region13: #{down_cmplx_forward.10} parent=0 // pred_fallthru
    _
  // Predicated region
  $region14: #{down_cmplx_forward.10} parent=0 // pred_check
    _
  $region15: #{down_cmplx_forward.10} parent=0 // pred_check_branch
    %426 = sbr.rel (0) target = $region17
  $region16: #{down_cmplx_forward.10} parent=0 // pred_region
    _
  $region17: #{down_cmplx_forward.10} parent=0 // pred_fallthru
    _

// kernel: down_cmplx_forward.9
$region0: #{down_cmplx_forward.9}
  #allocation0 [shape = 'u32[]', space=smem, size = 0x4, offset = 0x4, fixed_abs, tag = 'smem constant byte address 0x4 - core index']
  #allocation1 [shape = 'u32[144,128]{1,0:T(1,128)}', space=vmem, size = 0x12000, scoped, tag = 'internal scratch']
  %s0 = inlined_call_operand.vmem [shape: f32[2,10,10,8], index: 0, kind: input, shape index: {}]
  %s1 = inlined_call_operand.vmem [shape: bf16[72,16], index: 1, kind: input, shape index: {}]
  %s2 = inlined_call_operand.vmem [shape: f32[2,64,16], index: 2, kind: output, shape index: {0}]
  %s3 = inlined_call_operand.vmem [shape: f32[2,1,16], index: 3, kind: output, shape index: {1}]
  %4 = xla_tuple %s2, %s3
  %s5 = sld [smem:[#allocation0]]
  $region49: #{down_cmplx_forward.9} parent=0
    _
  %s7 = ssub.s32 1, %s5
  %s8 = scalar_select 0, %s7, %s5
  loop: start=0, step=1, limit=4
  $region2: #{down_cmplx_forward.9} parent=0 // loop_pre_header
    _
  $region3: #{down_cmplx_forward.9} parent=0 // loop_header
    %s10 = sphi 0, %s14
    %p11 = scmp.ge.s32.totalorder %s10, 4
    %s20 = sphi 0, %s22
    %s23 = sphi 0, %s20
    %s24 = sphi 0, %s23
    %s40 = sphi 0, %s24
    %s44 = sphi 0, %s44
    %s46 = sphi 0, %s44
    %s47 = sphi 0, %s46
    %s61 = sphi 0, %s47
    %s67 = sphi 0, %s69
    %s70 = sphi 0, %s67
    %s71 = sphi 0, %s70
    %s87 = sphi 0, %s71
    %s93 = sphi 0, %s95
    %s96 = sphi 0, %s93
    %s97 = sphi 0, %s96
    %s113 = sphi 0, %s97
  $region4: #{down_cmplx_forward.9} parent=0 // loop_header_branch
    %13 = sbr.rel (%p11) target = $region8
  $region5: #{down_cmplx_forward.9} parent=0 // loop_body
    %s15 = ssub.s32 %s10, 1
    %s16 = ssub.s32 %s10, 2
    %s17 = sadd.s32 %s10, 1
    %s18 = ssub.s32 %s10, %s17
    %p19 = scmp.eq.s32.totalorder %s18, 0
    %s21 = sadd.s32 %s20, 1
    %s22 = scalar_select %p19, %s20, %s21
    %p25 = pneg %p19
    %p26 = scmp.eq.s32.totalorder %s10, 1
    %p27 = por %p25, %p26
    %p28 = scmp.ne.s32.totalorder %s20, %s23
    %p29 = scmp.eq.s32.totalorder %s10, 0
    %p30 = por %p28, %p29
    %p31 = scmp.ne.s32.totalorder %s20, %s23
    %p32 = scmp.eq.s32.totalorder %s15, 1
    %p33 = por %p31, %p32
    %p34 = scmp.ne.s32.totalorder %s23, %s24
    %p35 = scmp.eq.s32.totalorder %s15, 0
    %p36 = por %p34, %p35
    %p37 = scmp.ne.s32.totalorder %s23, %s24
    %p38 = scmp.eq.s32.totalorder %s16, 1
    %p39 = por %p37, %p38
    %p41 = scmp.ne.s32.totalorder %s24, %s40
    %p42 = scmp.eq.s32.totalorder %s16, 0
    %p43 = por %p41, %p42
    %s45 = sadd.s32 %s44, 1
    %p48 = scmp.eq.s32.totalorder %s10, 1
    %p49 = scmp.ne.s32.totalorder %s44, %s46
    %p50 = scmp.eq.s32.totalorder %s10, 0
    %p51 = por %p49, %p50
    %p52 = scmp.ne.s32.totalorder %s44, %s46
    %p53 = scmp.eq.s32.totalorder %s15, 1
    %p54 = por %p52, %p53
    %p55 = scmp.ne.s32.totalorder %s46, %s47
    %p56 = scmp.eq.s32.totalorder %s15, 0
    %p57 = por %p55, %p56
    %p58 = scmp.ne.s32.totalorder %s46, %s47
    %p59 = scmp.eq.s32.totalorder %s16, 1
    %p60 = por %p58, %p59
    %p62 = scmp.ne.s32.totalorder %s47, %s61
    %p63 = scmp.eq.s32.totalorder %s16, 0
    %p64 = por %p62, %p63
    %s65 = ssub.s32 %s10, %s17
    %p66 = scmp.eq.s32.totalorder %s65, 0
    %s68 = sadd.s32 %s67, 1
    %s69 = scalar_select %p66, %s67, %s68
    %p72 = pneg %p66
    %p73 = scmp.eq.s32.totalorder %s10, 1
    %p74 = por %p72, %p73
    %p75 = scmp.ne.s32.totalorder %s67, %s70
    %p76 = scmp.eq.s32.totalorder %s10, 0
    %p77 = por %p75, %p76
    %p78 = scmp.ne.s32.totalorder %s67, %s70
    %p79 = scmp.eq.s32.totalorder %s15, 1
    %p80 = por %p78, %p79
    %p81 = scmp.ne.s32.totalorder %s70, %s71
    %p82 = scmp.eq.s32.totalorder %s15, 0
    %p83 = por %p81, %p82
    %p84 = scmp.ne.s32.totalorder %s70, %s71
    %p85 = scmp.eq.s32.totalorder %s16, 1
    %p86 = por %p84, %p85
    %p88 = scmp.ne.s32.totalorder %s71, %s87
    %p89 = scmp.eq.s32.totalorder %s16, 0
    %p90 = por %p88, %p89
    %s91 = ssub.s32 %s10, %s17
    %p92 = scmp.eq.s32.totalorder %s91, 0
    %s94 = sadd.s32 %s93, 1
    %s95 = scalar_select %p92, %s93, %s94
    %p98 = pneg %p92
    %p99 = scmp.eq.s32.totalorder %s10, 1
    %p100 = por %p98, %p99
    %p101 = scmp.ne.s32.totalorder %s93, %s96
    %p102 = scmp.eq.s32.totalorder %s10, 0
    %p103 = por %p101, %p102
    %p104 = scmp.ne.s32.totalorder %s93, %s96
    %p105 = scmp.eq.s32.totalorder %s15, 1
    %p106 = por %p104, %p105
    %p107 = scmp.ne.s32.totalorder %s96, %s97
    %p108 = scmp.eq.s32.totalorder %s15, 0
    %p109 = por %p107, %p108
    %p110 = scmp.ne.s32.totalorder %s96, %s97
    %p111 = scmp.eq.s32.totalorder %s16, 1
    %p112 = por %p110, %p111
    %p114 = scmp.ne.s32.totalorder %s97, %s113
    %p115 = scmp.eq.s32.totalorder %s16, 0
    %p116 = por %p114, %p115
    %p117 = scmp.le.s32.totalorder 1, %s10
    %p118 = scmp.lt.s32.totalorder %s10, 3
    %p119 = pnand %p117, %p118
    %p120 = pneg %p119
    // Predicated region
    $region9: #{down_cmplx_forward.9} parent=5 // pred_check
      _
    $region10: #{down_cmplx_forward.9} parent=5 // pred_check_branch
      %122 = sbr.rel (%p119) target = $region12
    $region11: #{down_cmplx_forward.9} parent=5 // pred_region
      %s123 = ssub.s32 %s10, 1
      // Predicated region
      $region13: #{down_cmplx_forward.9} parent=11 // pred_check
        %p124 = pneg %p57
      $region14: #{down_cmplx_forward.9} parent=11 // pred_check_branch
        %126 = sbr.rel (%p124) target = $region16
      $region15: #{down_cmplx_forward.9} parent=11 // pred_region
        _
      $region16: #{down_cmplx_forward.9} parent=11 // pred_fallthru
        _
    $region12: #{down_cmplx_forward.9} parent=5 // pred_fallthru
      _
    %p127 = scmp.lt.s32.totalorder %s10, 2
    // Predicated region
    $region17: #{down_cmplx_forward.9} parent=5 // pred_check
      %p128 = pneg %p127
    $region18: #{down_cmplx_forward.9} parent=5 // pred_check_branch
      %130 = sbr.rel (%p128) target = $region20
    $region19: #{down_cmplx_forward.9} parent=5 // pred_region
      // Predicated region
      $region21: #{down_cmplx_forward.9} parent=19 // pred_check
        %p131 = pneg %p30
      $region22: #{down_cmplx_forward.9} parent=19 // pred_check_branch
        %133 = sbr.rel (%p131) target = $region24
      $region23: #{down_cmplx_forward.9} parent=19 // pred_region
        %p134 = scmp.lt.s32.totalorder %s10, 1
        %s135 = scalar_select %p134, %s10, 1
        %s136 = smul.addr %s135, 20
        %s137 = smul.addr %s136, 8
        %s138 = scalar_lea.vmem %s0, %s137
      $region24: #{down_cmplx_forward.9} parent=19 // pred_fallthru
        _
    $region20: #{down_cmplx_forward.9} parent=5 // pred_fallthru
      _
    %p139 = scmp.le.s32.totalorder 1, %s10
    %p140 = scmp.lt.s32.totalorder %s10, 3
    %p141 = pnand %p139, %p140
    %p142 = pneg %p141
    // Predicated region
    $region25: #{down_cmplx_forward.9} parent=5 // pred_check
      _
    $region26: #{down_cmplx_forward.9} parent=5 // pred_check_branch
      %144 = sbr.rel (%p141) target = $region28
    $region27: #{down_cmplx_forward.9} parent=5 // pred_region
      %s145 = ssub.s32 %s10, 1
      %p146 = scmp.lt.s32.totalorder %s15, 1
      %s147 = scalar_select %p146, %s15, 1
      %s148 = smul.addr %s147, 20
      %s149 = smul.addr %s148, 8
      %s150 = scalar_lea.vmem %s0, %s149
      %p151 = pneg %p36
      %p152 = pneg %p33
      %p153 = pneg %p57
      %p154 = pneg %p54
      %p155 = pneg %p83
      %p156 = pneg %p80
      %p157 = scmp.lt.s32.totalorder %s15, 1
      %s158 = scalar_select %p157, %s15, 1
      %s159 = smul.addr %s158, 8
      %s160 = smul.addr %s159, 8
      %s161 = scalar_lea.vmem %s2, %s160
      %p162 = pneg %p109
      %p163 = pneg %p106
      %p164 = scmp.lt.s32.totalorder %s15, 1
      %s165 = scalar_select %p164, %s15, 1
      %s166 = scalar_lea.vmem %s3, %s165
      %p167 = scmp.lt.s32.totalorder %s15, 1
      %s168 = scalar_select %p167, %s15, 1
      %s169 = smul.addr %s168, 20
      %s170 = smul.addr %s169, 8
      %s171 = scalar_lea.vmem %s0, %s170
      %p172 = scmp.lt.s32.totalorder %s15, 1
      %s173 = scalar_select %p172, %s15, 1
      %s174 = smul.addr %s173, 8
      %s175 = smul.addr %s174, 8
      %s176 = scalar_lea.vmem %s2, %s175
      %p177 = scmp.lt.s32.totalorder %s15, 1
      %s178 = scalar_select %p177, %s15, 1
      %s179 = scalar_lea.vmem %s3, %s178
      %v181 = vld [vmem:[%s171] sm:$0xff]
      %v182 = vld [vmem:[%s171 + $0x8] sm:$0x3]
      %v183 = vld [vmem:[%s171 + $0x10] sm:$0xff]
      %v184 = vld [vmem:[%s171 + $0x18] sm:$0x3]
      %v185 = vld [vmem:[%s171 + $0x20] sm:$0xff]
      %v186 = vld [vmem:[%s171 + $0x28] sm:$0x3]
      %v187 = vld [vmem:[%s171 + $0x30] sm:$0xff]
      %v188 = vld [vmem:[%s171 + $0x38] sm:$0x3]
      %v189 = vld [vmem:[%s171 + $0x40] sm:$0xff]
      %v190 = vld [vmem:[%s171 + $0x48] sm:$0x3]
      %v191 = vld [vmem:[%s171 + $0x50] sm:$0xff]
      %v192 = vld [vmem:[%s171 + $0x58] sm:$0x3]
      %v193 = vld [vmem:[%s171 + $0x60] sm:$0xff]
      %v194 = vld [vmem:[%s171 + $0x68] sm:$0x3]
      %v195 = vld [vmem:[%s171 + $0x70] sm:$0xff]
      %v196 = vld [vmem:[%s171 + $0x78] sm:$0x3]
      %v197 = vld [vmem:[%s171 + $0x80] sm:$0xff]
      %v198 = vld [vmem:[%s171 + $0x88] sm:$0x3]
      %v199 = vld [vmem:[%s171 + $0x90] sm:$0xff]
      %v200 = vld [vmem:[%s171 + $0x98] sm:$0x3]
      %vm217 = vcmask 1046528
      %v218 = vrot.slane %v181, 1
      %v219 = vrot.slane %v182, 1
      %v220 = vsel %vm217, %v218, %v219
      %v221 = vrot.slane %v183, 1
      %v222 = vrot.slane %v184, 1
      %v223 = vsel %vm217, %v221, %v222
      %v224 = vrot.slane %v185, 1
      %v225 = vrot.slane %v186, 1
      %v226 = vsel %vm217, %v224, %v225
      %v227 = vrot.slane %v187, 1
      %v228 = vrot.slane %v188, 1
      %v229 = vsel %vm217, %v227, %v228
      %v230 = vrot.slane %v189, 1
      %v231 = vrot.slane %v190, 1
      %v232 = vsel %vm217, %v230, %v231
      %v233 = vrot.slane %v191, 1
      %v234 = vrot.slane %v192, 1
      %v235 = vsel %vm217, %v233, %v234
      %v236 = vrot.slane %v193, 1
      %v237 = vrot.slane %v194, 1
      %v238 = vsel %vm217, %v236, %v237
      %v239 = vrot.slane %v195, 1
      %v240 = vrot.slane %v196, 1
      %v241 = vsel %vm217, %v239, %v240
      %242 = vrot.lane.b32.xlu0 %v220, 8
      %v243 = vpop.permute.xlu0 %242
      %244 = vrot.lane.b32.xlu0 %v223, 8
      %v245 = vpop.permute.xlu0 %244
      %246 = vrot.lane.b32.xlu0 %v226, 8
      %v247 = vpop.permute.xlu0 %246
      %248 = vrot.lane.b32.xlu0 %v229, 8
      %v249 = vpop.permute.xlu0 %248
      %250 = vrot.lane.b32.xlu0 %v232, 8
      %v251 = vpop.permute.xlu0 %250
      %252 = vrot.lane.b32.xlu0 %v235, 8
      %v253 = vpop.permute.xlu0 %252
      %254 = vrot.lane.b32.xlu0 %v238, 8
      %v255 = vpop.permute.xlu0 %254
      %256 = vrot.lane.b32.xlu0 %v241, 8
      %v257 = vpop.permute.xlu0 %256
      %vm266 = vcmask 1045504
      %v267 = vrot.slane %v181, 2
      %v268 = vrot.slane %v182, 2
      %v269 = vsel %vm266, %v267, %v268
      %v270 = vrot.slane %v183, 2
      %v271 = vrot.slane %v184, 2
      %v272 = vsel %vm266, %v270, %v271
      %v273 = vrot.slane %v185, 2
      %v274 = vrot.slane %v186, 2
      %v275 = vsel %vm266, %v273, %v274
      %v276 = vrot.slane %v187, 2
      %v277 = vrot.slane %v188, 2
      %v278 = vsel %vm266, %v276, %v277
      %v279 = vrot.slane %v189, 2
      %v280 = vrot.slane %v190, 2
      %v281 = vsel %vm266, %v279, %v280
      %v282 = vrot.slane %v191, 2
      %v283 = vrot.slane %v192, 2
      %v284 = vsel %vm266, %v282, %v283
      %v285 = vrot.slane %v193, 2
      %v286 = vrot.slane %v194, 2
      %v287 = vsel %vm266, %v285, %v286
      %v288 = vrot.slane %v195, 2
      %v289 = vrot.slane %v196, 2
      %v290 = vsel %vm266, %v288, %v289
      %291 = vrot.lane.b32.xlu0 %v269, 16
      %v292 = vpop.permute.xlu0 %291
      %293 = vrot.lane.b32.xlu0 %v272, 16
      %v294 = vpop.permute.xlu0 %293
      %295 = vrot.lane.b32.xlu0 %v275, 16
      %v296 = vpop.permute.xlu0 %295
      %297 = vrot.lane.b32.xlu0 %v278, 16
      %v298 = vpop.permute.xlu0 %297
      %299 = vrot.lane.b32.xlu0 %v281, 16
      %v300 = vpop.permute.xlu0 %299
      %301 = vrot.lane.b32.xlu0 %v284, 16
      %v302 = vpop.permute.xlu0 %301
      %303 = vrot.lane.b32.xlu0 %v287, 16
      %v304 = vpop.permute.xlu0 %303
      %305 = vrot.lane.b32.xlu0 %v290, 16
      %v306 = vpop.permute.xlu0 %305
      %316 = vrot.lane.b32.xlu0 %v183, 24
      %v317 = vpop.permute.xlu0 %316
      %318 = vrot.lane.b32.xlu0 %v185, 24
      %v319 = vpop.permute.xlu0 %318
      %320 = vrot.lane.b32.xlu0 %v187, 24
      %v321 = vpop.permute.xlu0 %320
      %322 = vrot.lane.b32.xlu0 %v189, 24
      %v323 = vpop.permute.xlu0 %322
      %324 = vrot.lane.b32.xlu0 %v191, 24
      %v325 = vpop.permute.xlu0 %324
      %326 = vrot.lane.b32.xlu0 %v193, 24
      %v327 = vpop.permute.xlu0 %326
      %328 = vrot.lane.b32.xlu0 %v195, 24
      %v329 = vpop.permute.xlu0 %328
      %330 = vrot.lane.b32.xlu0 %v197, 24
      %v331 = vpop.permute.xlu0 %330
      %v341 = vrot.slane %v197, 1
      %v342 = vrot.slane %v198, 1
      %v343 = vsel %vm217, %v341, %v342
      %344 = vrot.lane.b32.xlu0 %v223, 32
      %v345 = vpop.permute.xlu0 %344
      %346 = vrot.lane.b32.xlu0 %v226, 32
      %v347 = vpop.permute.xlu0 %346
      %348 = vrot.lane.b32.xlu0 %v229, 32
      %v349 = vpop.permute.xlu0 %348
      %350 = vrot.lane.b32.xlu0 %v232, 32
      %v351 = vpop.permute.xlu0 %350
      %352 = vrot.lane.b32.xlu0 %v235, 32
      %v353 = vpop.permute.xlu0 %352
      %354 = vrot.lane.b32.xlu0 %v238, 32
      %v355 = vpop.permute.xlu0 %354
      %356 = vrot.lane.b32.xlu0 %v241, 32
      %v357 = vpop.permute.xlu0 %356
      %358 = vrot.lane.b32.xlu0 %v343, 32
      %v359 = vpop.permute.xlu0 %358
      %v368 = vrot.slane %v197, 2
      %v369 = vrot.slane %v198, 2
      %v370 = vsel %vm266, %v368, %v369
      %371 = vrot.lane.b32.xlu0 %v272, 40
      %v372 = vpop.permute.xlu0 %371
      %373 = vrot.lane.b32.xlu0 %v275, 40
      %v374 = vpop.permute.xlu0 %373
      %375 = vrot.lane.b32.xlu0 %v278, 40
      %v376 = vpop.permute.xlu0 %375
      %377 = vrot.lane.b32.xlu0 %v281, 40
      %v378 = vpop.permute.xlu0 %377
      %379 = vrot.lane.b32.xlu0 %v284, 40
      %v380 = vpop.permute.xlu0 %379
      %381 = vrot.lane.b32.xlu0 %v287, 40
      %v382 = vpop.permute.xlu0 %381
      %383 = vrot.lane.b32.xlu0 %v290, 40
      %v384 = vpop.permute.xlu0 %383
      %385 = vrot.lane.b32.xlu0 %v370, 40
      %v386 = vpop.permute.xlu0 %385
      %396 = vrot.lane.b32.xlu0 %v185, 48
      %v397 = vpop.permute.xlu0 %396
      %398 = vrot.lane.b32.xlu0 %v187, 48
      %v399 = vpop.permute.xlu0 %398
      %400 = vrot.lane.b32.xlu0 %v189, 48
      %v401 = vpop.permute.xlu0 %400
      %402 = vrot.lane.b32.xlu0 %v191, 48
      %v403 = vpop.permute.xlu0 %402
      %404 = vrot.lane.b32.xlu0 %v193, 48
      %v405 = vpop.permute.xlu0 %404
      %406 = vrot.lane.b32.xlu0 %v195, 48
      %v407 = vpop.permute.xlu0 %406
      %408 = vrot.lane.b32.xlu0 %v197, 48
      %v409 = vpop.permute.xlu0 %408
      %410 = vrot.lane.b32.xlu0 %v199, 48
      %v411 = vpop.permute.xlu0 %410
      %v421 = vrot.slane %v199, 1
      %v422 = vrot.slane %v200, 1
      %v423 = vsel %vm217, %v421, %v422
      %424 = vrot.lane.b32.xlu0 %v226, 56
      %v425 = vpop.permute.xlu0 %424
      %426 = vrot.lane.b32.xlu0 %v229, 56
      %v427 = vpop.permute.xlu0 %426
      %428 = vrot.lane.b32.xlu0 %v232, 56
      %v429 = vpop.permute.xlu0 %428
      %430 = vrot.lane.b32.xlu0 %v235, 56
      %v431 = vpop.permute.xlu0 %430
      %432 = vrot.lane.b32.xlu0 %v238, 56
      %v433 = vpop.permute.xlu0 %432
      %434 = vrot.lane.b32.xlu0 %v241, 56
      %v435 = vpop.permute.xlu0 %434
      %436 = vrot.lane.b32.xlu0 %v343, 56
      %v437 = vpop.permute.xlu0 %436
      %438 = vrot.lane.b32.xlu0 %v423, 56
      %v439 = vpop.permute.xlu0 %438
      %v448 = vrot.slane %v199, 2
      %v449 = vrot.slane %v200, 2
      %v450 = vsel %vm266, %v448, %v449
      %451 = vrot.lane.b32.xlu0 %v275, 64
      %v452 = vpop.permute.xlu0 %451
      %453 = vrot.lane.b32.xlu0 %v278, 64
      %v454 = vpop.permute.xlu0 %453
      %455 = vrot.lane.b32.xlu0 %v281, 64
      %v456 = vpop.permute.xlu0 %455
      %457 = vrot.lane.b32.xlu0 %v284, 64
      %v458 = vpop.permute.xlu0 %457
      %459 = vrot.lane.b32.xlu0 %v287, 64
      %v460 = vpop.permute.xlu0 %459
      %461 = vrot.lane.b32.xlu0 %v290, 64
      %v462 = vpop.permute.xlu0 %461
      %463 = vrot.lane.b32.xlu0 %v370, 64
      %v464 = vpop.permute.xlu0 %463
      %465 = vrot.lane.b32.xlu0 %v450, 64
      %v466 = vpop.permute.xlu0 %465
      %vm475 = vcmask 64512
      %v476 = vsel %vm475, %v181, %v243
      %v477 = vsel %vm475, %v183, %v245
      %v478 = vsel %vm475, %v185, %v247
      %v479 = vsel %vm475, %v187, %v249
      %v480 = vsel %vm475, %v189, %v251
      %v481 = vsel %vm475, %v191, %v253
      %v482 = vsel %vm475, %v193, %v255
      %v483 = vsel %vm475, %v195, %v257
      %vm484 = vcmask 130048
      %v485 = vsel %vm484, %v476, %v292
      %v486 = vsel %vm484, %v477, %v294
      %v487 = vsel %vm484, %v478, %v296
      %v488 = vsel %vm484, %v479, %v298
      %v489 = vsel %vm484, %v480, %v300
      %v490 = vsel %vm484, %v481, %v302
      %v491 = vsel %vm484, %v482, %v304
      %v492 = vsel %vm484, %v483, %v306
      %vm493 = vcmask 195584
      %v494 = vsel %vm493, %v485, %v317
      %v495 = vsel %vm493, %v486, %v319
      %v496 = vsel %vm493, %v487, %v321
      %v497 = vsel %vm493, %v488, %v323
      %v498 = vsel %vm493, %v489, %v325
      %v499 = vsel %vm493, %v490, %v327
      %v500 = vsel %vm493, %v491, %v329
      %v501 = vsel %vm493, %v492, %v331
      %vm502 = vcmask 261120
      %v503 = vsel %vm502, %v494, %v345
      %v504 = vsel %vm502, %v495, %v347
      %v505 = vsel %vm502, %v496, %v349
      %v506 = vsel %vm502, %v497, %v351
      %v507 = vsel %vm502, %v498, %v353
      %v508 = vsel %vm502, %v499, %v355
      %v509 = vsel %vm502, %v500, %v357
      %v510 = vsel %vm502, %v501, %v359
      %vm511 = vcmask 326656
      %v512 = vsel %vm511, %v503, %v372
      %v513 = vsel %vm511, %v504, %v374
      %v514 = vsel %vm511, %v505, %v376
      %v515 = vsel %vm511, %v506, %v378
      %v516 = vsel %vm511, %v507, %v380
      %v517 = vsel %vm511, %v508, %v382
      %v518 = vsel %vm511, %v509, %v384
      %v519 = vsel %vm511, %v510, %v386
      %vm520 = vcmask 392192
      %v521 = vsel %vm520, %v512, %v397
      %v522 = vsel %vm520, %v513, %v399
      %v523 = vsel %vm520, %v514, %v401
      %v524 = vsel %vm520, %v515, %v403
      %v525 = vsel %vm520, %v516, %v405
      %v526 = vsel %vm520, %v517, %v407
      %v527 = vsel %vm520, %v518, %v409
      %v528 = vsel %vm520, %v519, %v411
      %vm529 = vcmask 457728
      %v530 = vsel %vm529, %v521, %v425
      %v531 = vsel %vm529, %v522, %v427
      %v532 = vsel %vm529, %v523, %v429
      %v533 = vsel %vm529, %v524, %v431
      %v534 = vsel %vm529, %v525, %v433
      %v535 = vsel %vm529, %v526, %v435
      %v536 = vsel %vm529, %v527, %v437
      %v537 = vsel %vm529, %v528, %v439
      %vm538 = vcmask 523264
      %v539 = vsel %vm538, %v530, %v452
      %v540 = vsel %vm538, %v531, %v454
      %v541 = vsel %vm538, %v532, %v456
      %v542 = vsel %vm538, %v533, %v458
      %v543 = vsel %vm538, %v534, %v460
      %v544 = vsel %vm538, %v535, %v462
      %v545 = vsel %vm538, %v536, %v464
      %v546 = vsel %vm538, %v537, %v466
      %v547 = vpack.c.bf16 %v540, %v539
      %v548 = vpack.c.bf16 %v542, %v541
      %v549 = vpack.c.bf16 %v544, %v543
      %v550 = vpack.c.bf16 %v546, %v545
      %v551 = vld [vmem:[%s1] sm:$0xf]
      %v552 = vld [vmem:[%s1 + $0x4] sm:$0xf]
      %v553 = vld [vmem:[%s1 + $0x8] sm:$0xf]
      %v554 = vld [vmem:[%s1 + $0xc] sm:$0xf]
      %v555 = vld [vmem:[%s1 + $0x10] sm:$0xf]
      %v556 = vld [vmem:[%s1 + $0x14] sm:$0xf]
      %v557 = vld [vmem:[%s1 + $0x18] sm:$0xf]
      %v558 = vld [vmem:[%s1 + $0x1c] sm:$0xf]
      %v559 = vld [vmem:[%s1 + $0x20] sm:$0xf]
      %v569 = vunpack.c.l.b16 %v551
      %v570 = vunpack.c.l.b16 %v552
      %v571 = vunpack.c.l.b16 %v553
      %v572 = vunpack.c.l.b16 %v554
      %v573 = vunpack.c.l.b16 %v555
      %v574 = vunpack.c.l.b16 %v556
      %v575 = vunpack.c.l.b16 %v557
      %v576 = vunpack.c.l.b16 %v558
      %v577 = vunpack.c.l.b16 %v559
      %v578 = vpack.c.b16 %v570, %v569
      %v579 = vpack.c.b16 %v572, %v571
      %v580 = vpack.c.b16 %v574, %v573
      %v581 = vpack.c.b16 %v576, %v575
      %v582 = vpack.c.b16 %v577, %v577
      %vm587 = vcmask 588800
      %v589 = vsel %vm587, %v547, 0
      %v592 = vsel %vm587, %v548, 0
      %v595 = vsel %vm587, %v549, 0
      %v598 = vsel %vm587, %v550, 0
      %vm600 = vcmask 1043456
      %v602 = vsel %vm600, %v582, 0
      %604 = vmatprep.subr.bf16.mxu0 0
      %605 = vmatpush1.bf16.msra.mxu0 0
      %606 = vmatprep.subr.bf16.mxu0 0
      %607 = vmatpush1.bf16.msra.mxu0 0
      %608 = vmatprep.subr.bf16.mxu0 0
      %609 = vmatpush1.bf16.msra.mxu0 0
      %610 = vmatprep.subr.bf16.mxu0 0
      %611 = vmatpush1.bf16.msra.mxu0 %v602
      %612 = vmatprep.subr.bf16.mxu0 0
      %613 = vmatpush1.bf16.msra.mxu0 %v581
      %614 = vmatprep.subr.bf16.mxu0 0
      %615 = vmatpush1.bf16.msra.mxu0 %v580
      %616 = vmatprep.subr.bf16.mxu0 0
      %617 = vmatpush1.bf16.msra.mxu0 %v579
      %618 = vmatprep.subr.bf16.mxu0 0
      %619 = vmatpush1.bf16.msra.mxu0 %v578
      %620 = vmatprep.subr.bf16.mxu0 0
      %621 = vmatpush2.bf16.msra.mxu0 0
      %622 = vmatprep.subr.bf16.mxu0 0
      %623 = vmatpush2.bf16.msra.mxu0 0
      %624 = vmatprep.subr.bf16.mxu0 0
      %625 = vmatpush2.bf16.msra.mxu0 0
      %626 = vmatprep.subr.bf16.mxu0 0
      %627 = vmatpush2.bf16.msra.mxu0 0
      %628 = vmatprep.subr.bf16.mxu0 0
      %629 = vmatpush2.bf16.msra.mxu0 0
      %630 = vmatprep.subr.bf16.mxu0 0
      %631 = vmatpush2.bf16.msra.mxu0 0
      %632 = vmatprep.subr.bf16.mxu0 0
      %633 = vmatpush2.bf16.msra.mxu0 0
      %634 = vmatprep.subr.bf16.mxu0 0
      %635 = vmatpush2.bf16.msra.mxu0 0
      %636 = vmatprep.mubr.bf16.mxu0 0
      %637 = vmatmul.mubr.bf16.gmra.mxu0 %v589
      %v638 = vpop.f32.mrf.mxu0
      %v639 = vadd.f32 0.0, %v638
      %v640 = vpop.f32.mrf.mxu0
      %v641 = vpop.f32.mrf.mxu0
      %v642 = vadd.f32 0.0, %v641
      %v643 = vpop.f32.mrf.mxu0
      %644 = vmatprep.mubr.bf16.mxu0 0
      %645 = vmatmul.mubr.bf16.gmra.mxu0 %v592
      %v646 = vpop.f32.mrf.mxu0
      %v647 = vadd.f32 0.0, %v646
      %v648 = vpop.f32.mrf.mxu0
      %v649 = vpop.f32.mrf.mxu0
      %v650 = vadd.f32 0.0, %v649
      %v651 = vpop.f32.mrf.mxu0
      %652 = vmatprep.mubr.bf16.mxu0 0
      %653 = vmatmul.mubr.bf16.gmra.mxu0 %v595
      %v654 = vpop.f32.mrf.mxu0
      %v655 = vadd.f32 0.0, %v654
      %v656 = vpop.f32.mrf.mxu0
      %v657 = vpop.f32.mrf.mxu0
      %v658 = vadd.f32 0.0, %v657
      %v659 = vpop.f32.mrf.mxu0
      %660 = vmatprep.mubr.bf16.mxu0 0
      %661 = vmatmul.mubr.bf16.gmra.mxu0 %v598
      %v662 = vpop.f32.mrf.mxu0
      %v663 = vadd.f32 0.0, %v662
      %v664 = vpop.f32.mrf.mxu0
      %v665 = vpop.f32.mrf.mxu0
      %v666 = vadd.f32 0.0, %v665
      %v667 = vpop.f32.mrf.mxu0
      %668 = vdwg.mxu0
      %669 = vst.msk [vmem:[%s176] sm:$0xff] %vm484, %v639
      %670 = vst.msk [vmem:[%s176 + $0x8] sm:$0xff] %vm484, %v642
      %671 = vst.msk [vmem:[%s176 + $0x10] sm:$0xff] %vm484, %v647
      %672 = vst.msk [vmem:[%s176 + $0x18] sm:$0xff] %vm484, %v650
      %673 = vst.msk [vmem:[%s176 + $0x20] sm:$0xff] %vm484, %v655
      %674 = vst.msk [vmem:[%s176 + $0x28] sm:$0xff] %vm484, %v658
      %675 = vst.msk [vmem:[%s176 + $0x30] sm:$0xff] %vm484, %v663
      %676 = vst.msk [vmem:[%s176 + $0x38] sm:$0xff] %vm484, %v666
      %v678 = vsel %vm538, 1.0, 0
      %680 = vmatprep.subr.mxu0 0.0
      %681 = vmatpush1.msra.mxu0 0.0
      %682 = vmatprep.subr.mxu0 0.0
      %683 = vmatpush1.msra.mxu0 0.0
      %684 = vmatprep.subr.mxu0 0.0
      %685 = vmatpush1.msra.mxu0 0.0
      %686 = vmatprep.subr.mxu0 0.0
      %687 = vmatpush1.msra.mxu0 0.0
      %688 = vmatprep.subr.mxu0 0.0
      %689 = vmatpush1.msra.mxu0 0.0
      %690 = vmatprep.subr.mxu0 0.0
      %691 = vmatpush1.msra.mxu0 0.0
      %692 = vmatprep.subr.mxu0 0.0
      %693 = vmatpush1.msra.mxu0 0.0
      %694 = vmatprep.subr.mxu0 0.0
      %695 = vmatpush1.msra.mxu0 0.0
      %696 = vmatprep.subr.mxu0 0.0
      %697 = vmatpush1.msra.mxu0 %v666
      %698 = vmatprep.subr.mxu0 0.0
      %699 = vmatpush1.msra.mxu0 %v663
      %700 = vmatprep.subr.mxu0 0.0
      %701 = vmatpush1.msra.mxu0 %v658
      %702 = vmatprep.subr.mxu0 0.0
      %703 = vmatpush1.msra.mxu0 %v655
      %704 = vmatprep.subr.mxu0 0.0
      %705 = vmatpush1.msra.mxu0 %v650
      %706 = vmatprep.subr.mxu0 0.0
      %707 = vmatpush1.msra.mxu0 %v647
      %708 = vmatprep.subr.mxu0 0.0
      %709 = vmatpush1.msra.mxu0 %v642
      %710 = vmatprep.subr.mxu0 0.0
      %711 = vmatpush1.msra.mxu0 %v639
      %712 = vmatprep.subr.mxu0 0.0
      %713 = vmatpush2.msra.mxu0 0.0
      %714 = vmatprep.subr.mxu0 0.0
      %715 = vmatpush2.msra.mxu0 0.0
      %716 = vmatprep.subr.mxu0 0.0
      %717 = vmatpush2.msra.mxu0 0.0
      %718 = vmatprep.subr.mxu0 0.0
      %719 = vmatpush2.msra.mxu0 0.0
      %720 = vmatprep.subr.mxu0 0.0
      %721 = vmatpush2.msra.mxu0 0.0
      %722 = vmatprep.subr.mxu0 0.0
      %723 = vmatpush2.msra.mxu0 0.0
      %724 = vmatprep.subr.mxu0 0.0
      %725 = vmatpush2.msra.mxu0 0.0
      %726 = vmatprep.subr.mxu0 0.0
      %727 = vmatpush2.msra.mxu0 0.0
      %728 = vmatprep.subr.mxu0 0.0
      %729 = vmatpush2.msra.mxu0 0.0
      %730 = vmatprep.subr.mxu0 0.0
      %731 = vmatpush2.msra.mxu0 0.0
      %732 = vmatprep.subr.mxu0 0.0
      %733 = vmatpush2.msra.mxu0 0.0
      %734 = vmatprep.subr.mxu0 0.0
      %735 = vmatpush2.msra.mxu0 0.0
      %736 = vmatprep.subr.mxu0 0.0
      %737 = vmatpush2.msra.mxu0 0.0
      %738 = vmatprep.subr.mxu0 0.0
      %739 = vmatpush2.msra.mxu0 0.0
      %740 = vmatprep.subr.mxu0 0.0
      %741 = vmatpush2.msra.mxu0 0.0
      %742 = vmatprep.subr.mxu0 0.0
      %743 = vmatpush2.msra.mxu0 0.0
      %744 = vmatprep.mubr.f32.mxu0 0.0
      %745 = vmatmul.mubr.f32.gmra.mxu0 %v678
      %v746 = vpop.f32.mrf.mxu0
      %v747 = vadd.f32 0.0, %v746
      %v748 = vpop.f32.mrf.mxu0
      %749 = vdwg.mxu0
      %vm750 = vcmask 122880
      %751 = vst.msk [vmem:[%s179] sm:$0x1] %vm750, %v747
      %p752 = scmp.lt.s32.totalorder %s15, 1
      %s753 = scalar_select %p752, %s15, 1
      %s754 = smul.addr %s753, 8
      %s755 = smul.addr %s754, 8
      %s756 = scalar_lea.vmem %s2, %s755
      %p757 = scmp.lt.s32.totalorder %s15, 1
      %s758 = scalar_select %p757, %s15, 1
      %s759 = scalar_lea.vmem %s3, %s758
      // Predicated region
      $region29: #{down_cmplx_forward.9} parent=27 // pred_check
        %p760 = pneg %p80
      $region30: #{down_cmplx_forward.9} parent=27 // pred_check_branch
        %762 = sbr.rel (%p760) target = $region32
      $region31: #{down_cmplx_forward.9} parent=27 // pred_region
        _
      $region32: #{down_cmplx_forward.9} parent=27 // pred_fallthru
        _
      // Predicated region
      $region33: #{down_cmplx_forward.9} parent=27 // pred_check
        %p763 = pneg %p106
      $region34: #{down_cmplx_forward.9} parent=27 // pred_check_branch
        %765 = sbr.rel (%p763) target = $region36
      $region35: #{down_cmplx_forward.9} parent=27 // pred_region
        _
      $region36: #{down_cmplx_forward.9} parent=27 // pred_fallthru
        _
    $region28: #{down_cmplx_forward.9} parent=5 // pred_fallthru
      _
    %p766 = scmp.le.s32.totalorder 2, %s10
    // Predicated region
    $region37: #{down_cmplx_forward.9} parent=5 // pred_check
      %p767 = pneg %p766
    $region38: #{down_cmplx_forward.9} parent=5 // pred_check_branch
      %769 = sbr.rel (%p767) target = $region40
    $region39: #{down_cmplx_forward.9} parent=5 // pred_region
      %s770 = ssub.s32 %s10, 2
      // Predicated region
      $region41: #{down_cmplx_forward.9} parent=39 // pred_check
        %p771 = pneg %p86
      $region42: #{down_cmplx_forward.9} parent=39 // pred_check_branch
        %773 = sbr.rel (%p771) target = $region44
      $region43: #{down_cmplx_forward.9} parent=39 // pred_region
        %p774 = scmp.lt.s32.totalorder %s16, 1
        %s775 = scalar_select %p774, %s16, 1
        %s776 = smul.addr %s775, 8
        %s777 = smul.addr %s776, 8
        %s778 = scalar_lea.vmem %s2, %s777
      $region44: #{down_cmplx_forward.9} parent=39 // pred_fallthru
        _
      // Predicated region
      $region45: #{down_cmplx_forward.9} parent=39 // pred_check
        %p779 = pneg %p112
      $region46: #{down_cmplx_forward.9} parent=39 // pred_check_branch
        %781 = sbr.rel (%p779) target = $region48
      $region47: #{down_cmplx_forward.9} parent=39 // pred_region
        %p782 = scmp.lt.s32.totalorder %s16, 1
        %s783 = scalar_select %p782, %s16, 1
        %s784 = scalar_lea.vmem %s3, %s783
      $region48: #{down_cmplx_forward.9} parent=39 // pred_fallthru
        _
    $region40: #{down_cmplx_forward.9} parent=5 // pred_fallthru
      _
  $region6: #{down_cmplx_forward.9} parent=0 // loop_footer
    %s14 = sadd.s32 1, %s10
  $region7: #{down_cmplx_forward.9} parent=0 // loop_footer_branch
    %9 = sbr.rel target = $region3
  $region8: #{down_cmplx_forward.9} parent=0 // loop_exit
    _

// kernel: down_cmplx_forward.11
$region0: #{down_cmplx_forward.11}
  #allocation0 [shape = 'u32[]', space=smem, size = 0x4, offset = 0x4, fixed_abs, tag = 'smem constant byte address 0x4 - core index']
  #allocation1 [shape = 'u32[144,128]{1,0:T(1,128)}', space=vmem, size = 0x12000, scoped, tag = 'internal scratch']
  %s0 = inlined_call_operand.vmem [shape: f32[128,16], index: 0, kind: input, shape index: {}]
  %s1 = inlined_call_operand.vmem [shape: f32[4,8], index: 1, kind: input, shape index: {}]
  %s2 = inlined_call_operand.vmem [shape: f32[128,16], index: 2, kind: output, shape index: {}]
  %s3 = sld [smem:[#allocation0]]
  $region18: #{down_cmplx_forward.11} parent=0
    _
  %s5 = ssub.s32 1, %s3
  %s6 = scalar_select 0, %s5, %s3
  // Predicated region
  $region2: #{down_cmplx_forward.11} parent=0 // pred_check
    _
  $region3: #{down_cmplx_forward.11} parent=0 // pred_check_branch
    %8 = sbr.rel (0) target = $region5
  $region4: #{down_cmplx_forward.11} parent=0 // pred_region
    _
  $region5: #{down_cmplx_forward.11} parent=0 // pred_fallthru
    _
  // Predicated region
  $region6: #{down_cmplx_forward.11} parent=0 // pred_check
    _
  $region7: #{down_cmplx_forward.11} parent=0 // pred_check_branch
    %10 = sbr.rel (0) target = $region9
  $region8: #{down_cmplx_forward.11} parent=0 // pred_region
    _
  $region9: #{down_cmplx_forward.11} parent=0 // pred_fallthru
    _
  %v11 = vld [vmem:[%s0] sm:$0xff]
  %v12 = vld [vmem:[%s0 + $0x8] sm:$0xff]
  %v13 = vld [vmem:[%s0 + $0x10] sm:$0xff]
  %v14 = vld [vmem:[%s0 + $0x18] sm:$0xff]
  %v15 = vld [vmem:[%s0 + $0x20] sm:$0xff]
  %v16 = vld [vmem:[%s0 + $0x28] sm:$0xff]
  %v17 = vld [vmem:[%s0 + $0x30] sm:$0xff]
  %v18 = vld [vmem:[%s0 + $0x38] sm:$0xff]
  %v19 = vld [vmem:[%s0 + $0x40] sm:$0xff]
  %v20 = vld [vmem:[%s0 + $0x48] sm:$0xff]
  %v21 = vld [vmem:[%s0 + $0x50] sm:$0xff]
  %v22 = vld [vmem:[%s0 + $0x58] sm:$0xff]
  %v23 = vld [vmem:[%s0 + $0x60] sm:$0xff]
  %v24 = vld [vmem:[%s0 + $0x68] sm:$0xff]
  %v25 = vld [vmem:[%s0 + $0x70] sm:$0xff]
  %v26 = vld [vmem:[%s0 + $0x78] sm:$0xff]
  %v27 = vld [vmem:[%s1] sm:$0xf]
  %v28 = vlaneseq
  %v29 = vshrl.u32 %v28, 7
  %v30 = vsub.s32 0, %v29
  %v31 = vrot.slane %v27, %v30
  %v32 = vsub.f32 %v11, %v31
  %v33 = vsub.f32 %v12, %v31
  %v34 = vsub.f32 %v13, %v31
  %v35 = vsub.f32 %v14, %v31
  %v36 = vsub.f32 %v15, %v31
  %v37 = vsub.f32 %v16, %v31
  %v38 = vsub.f32 %v17, %v31
  %v39 = vsub.f32 %v18, %v31
  %v40 = vsub.f32 %v19, %v31
  %v41 = vsub.f32 %v20, %v31
  %v42 = vsub.f32 %v21, %v31
  %v43 = vsub.f32 %v22, %v31
  %v44 = vsub.f32 %v23, %v31
  %v45 = vsub.f32 %v24, %v31
  %v46 = vsub.f32 %v25, %v31
  %v47 = vsub.f32 %v26, %v31
  %v48 = vlaneseq
  %v49 = vshrl.u32 %v48, 7
  %v50 = vsub.s32 2, %v49
  %v51 = vrot.slane %v27, %v50
  %v52 = vmul.f32 %v32, %v51
  %v53 = vmul.f32 %v33, %v51
  %v54 = vmul.f32 %v34, %v51
  %v55 = vmul.f32 %v35, %v51
  %v56 = vmul.f32 %v36, %v51
  %v57 = vmul.f32 %v37, %v51
  %v58 = vmul.f32 %v38, %v51
  %v59 = vmul.f32 %v39, %v51
  %v60 = vmul.f32 %v40, %v51
  %v61 = vmul.f32 %v41, %v51
  %v62 = vmul.f32 %v42, %v51
  %v63 = vmul.f32 %v43, %v51
  %v64 = vmul.f32 %v44, %v51
  %v65 = vmul.f32 %v45, %v51
  %v66 = vmul.f32 %v46, %v51
  %v67 = vmul.f32 %v47, %v51
  %v68 = vlaneseq
  %v69 = vshrl.u32 %v68, 7
  %v70 = vsub.s32 1, %v69
  %v71 = vrot.slane %v27, %v70
  %73 = vrot.lane.b32.xlu0 %v71, 8
  %v74 = vpop.permute.xlu0 %73
  %v76 = vsub.f32 %v11, %v74
  %v77 = vsub.f32 %v12, %v74
  %v78 = vsub.f32 %v13, %v74
  %v79 = vsub.f32 %v14, %v74
  %v80 = vsub.f32 %v15, %v74
  %v81 = vsub.f32 %v16, %v74
  %v82 = vsub.f32 %v17, %v74
  %v83 = vsub.f32 %v18, %v74
  %v84 = vsub.f32 %v19, %v74
  %v85 = vsub.f32 %v20, %v74
  %v86 = vsub.f32 %v21, %v74
  %v87 = vsub.f32 %v22, %v74
  %v88 = vsub.f32 %v23, %v74
  %v89 = vsub.f32 %v24, %v74
  %v90 = vsub.f32 %v25, %v74
  %v91 = vsub.f32 %v26, %v74
  %93 = vrot.lane.b32.xlu0 %v51, 8
  %v94 = vpop.permute.xlu0 %93
  %v96 = vmul.f32 %v76, %v94
  %v97 = vmul.f32 %v77, %v94
  %v98 = vmul.f32 %v78, %v94
  %v99 = vmul.f32 %v79, %v94
  %v100 = vmul.f32 %v80, %v94
  %v101 = vmul.f32 %v81, %v94
  %v102 = vmul.f32 %v82, %v94
  %v103 = vmul.f32 %v83, %v94
  %v104 = vmul.f32 %v84, %v94
  %v105 = vmul.f32 %v85, %v94
  %v106 = vmul.f32 %v86, %v94
  %v107 = vmul.f32 %v87, %v94
  %v108 = vmul.f32 %v88, %v94
  %v109 = vmul.f32 %v89, %v94
  %v110 = vmul.f32 %v90, %v94
  %v111 = vmul.f32 %v91, %v94
  %v112 = vmul.f32 %v52, %v52
  %v113 = vmul.f32 %v53, %v53
  %v114 = vmul.f32 %v54, %v54
  %v115 = vmul.f32 %v55, %v55
  %v116 = vmul.f32 %v56, %v56
  %v117 = vmul.f32 %v57, %v57
  %v118 = vmul.f32 %v58, %v58
  %v119 = vmul.f32 %v59, %v59
  %v120 = vmul.f32 %v60, %v60
  %v121 = vmul.f32 %v61, %v61
  %v122 = vmul.f32 %v62, %v62
  %v123 = vmul.f32 %v63, %v63
  %v124 = vmul.f32 %v64, %v64
  %v125 = vmul.f32 %v65, %v65
  %v126 = vmul.f32 %v66, %v66
  %v127 = vmul.f32 %v67, %v67
  %v128 = vmul.f32 %v96, %v96
  %v129 = vmul.f32 %v97, %v97
  %v130 = vmul.f32 %v98, %v98
  %v131 = vmul.f32 %v99, %v99
  %v132 = vmul.f32 %v100, %v100
  %v133 = vmul.f32 %v101, %v101
  %v134 = vmul.f32 %v102, %v102
  %v135 = vmul.f32 %v103, %v103
  %v136 = vmul.f32 %v104, %v104
  %v137 = vmul.f32 %v105, %v105
  %v138 = vmul.f32 %v106, %v106
  %v139 = vmul.f32 %v107, %v107
  %v140 = vmul.f32 %v108, %v108
  %v141 = vmul.f32 %v109, %v109
  %v142 = vmul.f32 %v110, %v110
  %v143 = vmul.f32 %v111, %v111
  %160 = vrot.lane.b32.xlu0 %v128, 120
  %v161 = vpop.permute.xlu0 %160
  %162 = vrot.lane.b32.xlu0 %v129, 120
  %v163 = vpop.permute.xlu0 %162
  %164 = vrot.lane.b32.xlu0 %v130, 120
  %v165 = vpop.permute.xlu0 %164
  %166 = vrot.lane.b32.xlu0 %v131, 120
  %v167 = vpop.permute.xlu0 %166
  %168 = vrot.lane.b32.xlu0 %v132, 120
  %v169 = vpop.permute.xlu0 %168
  %170 = vrot.lane.b32.xlu0 %v133, 120
  %v171 = vpop.permute.xlu0 %170
  %172 = vrot.lane.b32.xlu0 %v134, 120
  %v173 = vpop.permute.xlu0 %172
  %174 = vrot.lane.b32.xlu0 %v135, 120
  %v175 = vpop.permute.xlu0 %174
  %176 = vrot.lane.b32.xlu0 %v136, 120
  %v177 = vpop.permute.xlu0 %176
  %178 = vrot.lane.b32.xlu0 %v137, 120
  %v179 = vpop.permute.xlu0 %178
  %180 = vrot.lane.b32.xlu0 %v138, 120
  %v181 = vpop.permute.xlu0 %180
  %182 = vrot.lane.b32.xlu0 %v139, 120
  %v183 = vpop.permute.xlu0 %182
  %184 = vrot.lane.b32.xlu0 %v140, 120
  %v185 = vpop.permute.xlu0 %184
  %186 = vrot.lane.b32.xlu0 %v141, 120
  %v187 = vpop.permute.xlu0 %186
  %188 = vrot.lane.b32.xlu0 %v142, 120
  %v189 = vpop.permute.xlu0 %188
  %190 = vrot.lane.b32.xlu0 %v143, 120
  %v191 = vpop.permute.xlu0 %190
  %v208 = vadd.f32 %v112, %v161
  %v209 = vadd.f32 %v113, %v163
  %v210 = vadd.f32 %v114, %v165
  %v211 = vadd.f32 %v115, %v167
  %v212 = vadd.f32 %v116, %v169
  %v213 = vadd.f32 %v117, %v171
  %v214 = vadd.f32 %v118, %v173
  %v215 = vadd.f32 %v119, %v175
  %v216 = vadd.f32 %v120, %v177
  %v217 = vadd.f32 %v121, %v179
  %v218 = vadd.f32 %v122, %v181
  %v219 = vadd.f32 %v123, %v183
  %v220 = vadd.f32 %v124, %v185
  %v221 = vadd.f32 %v125, %v187
  %v222 = vadd.f32 %v126, %v189
  %v223 = vadd.f32 %v127, %v191
  %v224 = vadd.f32 %v208, 1e-12
  %v225 = vadd.f32 %v209, 1e-12
  %v226 = vadd.f32 %v210, 1e-12
  %v227 = vadd.f32 %v211, 1e-12
  %v228 = vadd.f32 %v212, 1e-12
  %v229 = vadd.f32 %v213, 1e-12
  %v230 = vadd.f32 %v214, 1e-12
  %v231 = vadd.f32 %v215, 1e-12
  %v232 = vadd.f32 %v216, 1e-12
  %v233 = vadd.f32 %v217, 1e-12
  %v234 = vadd.f32 %v218, 1e-12
  %v235 = vadd.f32 %v219, 1e-12
  %v236 = vadd.f32 %v220, 1e-12
  %v237 = vadd.f32 %v221, 1e-12
  %v238 = vadd.f32 %v222, 1e-12
  %v239 = vadd.f32 %v223, 1e-12
  %v240 = vrsqrt.pop %v224
  %v241 = vmul.f32 %v224, %v240
  %vm242 = vcmp.eq.f32.partialorder %v224, inf
  %v243 = vsel %vm242, %v224, %v241
  %vm244 = vcmp.eq.f32.partialorder %v224, 0.0
  %v245 = vand.u32 %v224, 2147483648
  %v246 = vsel %vm244, %v245, %v243
  %v247 = vrsqrt.pop %v225
  %v248 = vmul.f32 %v225, %v247
  %vm249 = vcmp.eq.f32.partialorder %v225, inf
  %v250 = vsel %vm249, %v225, %v248
  %vm251 = vcmp.eq.f32.partialorder %v225, 0.0
  %v252 = vand.u32 %v225, 2147483648
  %v253 = vsel %vm251, %v252, %v250
  %v254 = vrsqrt.pop %v226
  %v255 = vmul.f32 %v226, %v254
  %vm256 = vcmp.eq.f32.partialorder %v226, inf
  %v257 = vsel %vm256, %v226, %v255
  %vm258 = vcmp.eq.f32.partialorder %v226, 0.0
  %v259 = vand.u32 %v226, 2147483648
  %v260 = vsel %vm258, %v259, %v257
  %v261 = vrsqrt.pop %v227
  %v262 = vmul.f32 %v227, %v261
  %vm263 = vcmp.eq.f32.partialorder %v227, inf
  %v264 = vsel %vm263, %v227, %v262
  %vm265 = vcmp.eq.f32.partialorder %v227, 0.0
  %v266 = vand.u32 %v227, 2147483648
  %v267 = vsel %vm265, %v266, %v264
  %v268 = vrsqrt.pop %v228
  %v269 = vmul.f32 %v228, %v268
  %vm270 = vcmp.eq.f32.partialorder %v228, inf
  %v271 = vsel %vm270, %v228, %v269
  %vm272 = vcmp.eq.f32.partialorder %v228, 0.0
  %v273 = vand.u32 %v228, 2147483648
  %v274 = vsel %vm272, %v273, %v271
  %v275 = vrsqrt.pop %v229
  %v276 = vmul.f32 %v229, %v275
  %vm277 = vcmp.eq.f32.partialorder %v229, inf
  %v278 = vsel %vm277, %v229, %v276
  %vm279 = vcmp.eq.f32.partialorder %v229, 0.0
  %v280 = vand.u32 %v229, 2147483648
  %v281 = vsel %vm279, %v280, %v278
  %v282 = vrsqrt.pop %v230
  %v283 = vmul.f32 %v230, %v282
  %vm284 = vcmp.eq.f32.partialorder %v230, inf
  %v285 = vsel %vm284, %v230, %v283
  %vm286 = vcmp.eq.f32.partialorder %v230, 0.0
  %v287 = vand.u32 %v230, 2147483648
  %v288 = vsel %vm286, %v287, %v285
  %v289 = vrsqrt.pop %v231
  %v290 = vmul.f32 %v231, %v289
  %vm291 = vcmp.eq.f32.partialorder %v231, inf
  %v292 = vsel %vm291, %v231, %v290
  %vm293 = vcmp.eq.f32.partialorder %v231, 0.0
  %v294 = vand.u32 %v231, 2147483648
  %v295 = vsel %vm293, %v294, %v292
  %v296 = vrsqrt.pop %v232
  %v297 = vmul.f32 %v232, %v296
  %vm298 = vcmp.eq.f32.partialorder %v232, inf
  %v299 = vsel %vm298, %v232, %v297
  %vm300 = vcmp.eq.f32.partialorder %v232, 0.0
  %v301 = vand.u32 %v232, 2147483648
  %v302 = vsel %vm300, %v301, %v299
  %v303 = vrsqrt.pop %v233
  %v304 = vmul.f32 %v233, %v303
  %vm305 = vcmp.eq.f32.partialorder %v233, inf
  %v306 = vsel %vm305, %v233, %v304
  %vm307 = vcmp.eq.f32.partialorder %v233, 0.0
  %v308 = vand.u32 %v233, 2147483648
  %v309 = vsel %vm307, %v308, %v306
  %v310 = vrsqrt.pop %v234
  %v311 = vmul.f32 %v234, %v310
  %vm312 = vcmp.eq.f32.partialorder %v234, inf
  %v313 = vsel %vm312, %v234, %v311
  %vm314 = vcmp.eq.f32.partialorder %v234, 0.0
  %v315 = vand.u32 %v234, 2147483648
  %v316 = vsel %vm314, %v315, %v313
  %v317 = vrsqrt.pop %v235
  %v318 = vmul.f32 %v235, %v317
  %vm319 = vcmp.eq.f32.partialorder %v235, inf
  %v320 = vsel %vm319, %v235, %v318
  %vm321 = vcmp.eq.f32.partialorder %v235, 0.0
  %v322 = vand.u32 %v235, 2147483648
  %v323 = vsel %vm321, %v322, %v320
  %v324 = vrsqrt.pop %v236
  %v325 = vmul.f32 %v236, %v324
  %vm326 = vcmp.eq.f32.partialorder %v236, inf
  %v327 = vsel %vm326, %v236, %v325
  %vm328 = vcmp.eq.f32.partialorder %v236, 0.0
  %v329 = vand.u32 %v236, 2147483648
  %v330 = vsel %vm328, %v329, %v327
  %v331 = vrsqrt.pop %v237
  %v332 = vmul.f32 %v237, %v331
  %vm333 = vcmp.eq.f32.partialorder %v237, inf
  %v334 = vsel %vm333, %v237, %v332
  %vm335 = vcmp.eq.f32.partialorder %v237, 0.0
  %v336 = vand.u32 %v237, 2147483648
  %v337 = vsel %vm335, %v336, %v334
  %v338 = vrsqrt.pop %v238
  %v339 = vmul.f32 %v238, %v338
  %vm340 = vcmp.eq.f32.partialorder %v238, inf
  %v341 = vsel %vm340, %v238, %v339
  %vm342 = vcmp.eq.f32.partialorder %v238, 0.0
  %v343 = vand.u32 %v238, 2147483648
  %v344 = vsel %vm342, %v343, %v341
  %v345 = vrsqrt.pop %v239
  %v346 = vmul.f32 %v239, %v345
  %vm347 = vcmp.eq.f32.partialorder %v239, inf
  %v348 = vsel %vm347, %v239, %v346
  %vm349 = vcmp.eq.f32.partialorder %v239, 0.0
  %v350 = vand.u32 %v239, 2147483648
  %v351 = vsel %vm349, %v350, %v348
  %v352 = vlaneseq
  %v353 = vshrl.u32 %v352, 7
  %v354 = vsub.s32 3, %v353
  %v355 = vrot.slane %v27, %v354
  %v356 = vadd.f32 %v246, %v355
  %v357 = vadd.f32 %v253, %v355
  %v358 = vadd.f32 %v260, %v355
  %v359 = vadd.f32 %v267, %v355
  %v360 = vadd.f32 %v274, %v355
  %v361 = vadd.f32 %v281, %v355
  %v362 = vadd.f32 %v288, %v355
  %v363 = vadd.f32 %v295, %v355
  %v364 = vadd.f32 %v302, %v355
  %v365 = vadd.f32 %v309, %v355
  %v366 = vadd.f32 %v316, %v355
  %v367 = vadd.f32 %v323, %v355
  %v368 = vadd.f32 %v330, %v355
  %v369 = vadd.f32 %v337, %v355
  %v370 = vadd.f32 %v344, %v355
  %v371 = vadd.f32 %v351, %v355
  %v372 = vmax.f32 %v356, 0.0
  %v373 = vmax.f32 %v357, 0.0
  %v374 = vmax.f32 %v358, 0.0
  %v375 = vmax.f32 %v359, 0.0
  %v376 = vmax.f32 %v360, 0.0
  %v377 = vmax.f32 %v361, 0.0
  %v378 = vmax.f32 %v362, 0.0
  %v379 = vmax.f32 %v363, 0.0
  %v380 = vmax.f32 %v364, 0.0
  %v381 = vmax.f32 %v365, 0.0
  %v382 = vmax.f32 %v366, 0.0
  %v383 = vmax.f32 %v367, 0.0
  %v384 = vmax.f32 %v368, 0.0
  %v385 = vmax.f32 %v369, 0.0
  %v386 = vmax.f32 %v370, 0.0
  %v387 = vmax.f32 %v371, 0.0
  %v388 = vrcp.pop %v246
  %v389 = vrcp.pop %v253
  %v390 = vrcp.pop %v260
  %v391 = vrcp.pop %v267
  %v392 = vrcp.pop %v274
  %v393 = vrcp.pop %v281
  %v394 = vrcp.pop %v288
  %v395 = vrcp.pop %v295
  %v396 = vrcp.pop %v302
  %v397 = vrcp.pop %v309
  %v398 = vrcp.pop %v316
  %v399 = vrcp.pop %v323
  %v400 = vrcp.pop %v330
  %v401 = vrcp.pop %v337
  %v402 = vrcp.pop %v344
  %v403 = vrcp.pop %v351
  %v404 = vmul.f32 %v372, %v388
  %v405 = vmul.f32 %v373, %v389
  %v406 = vmul.f32 %v374, %v390
  %v407 = vmul.f32 %v375, %v391
  %v408 = vmul.f32 %v376, %v392
  %v409 = vmul.f32 %v377, %v393
  %v410 = vmul.f32 %v378, %v394
  %v411 = vmul.f32 %v379, %v395
  %v412 = vmul.f32 %v380, %v396
  %v413 = vmul.f32 %v381, %v397
  %v414 = vmul.f32 %v382, %v398
  %v415 = vmul.f32 %v383, %v399
  %v416 = vmul.f32 %v384, %v400
  %v417 = vmul.f32 %v385, %v401
  %v418 = vmul.f32 %v386, %v402
  %v419 = vmul.f32 %v387, %v403
  %v420 = vmul.f32 %v52, %v404
  %v421 = vmul.f32 %v53, %v405
  %v422 = vmul.f32 %v54, %v406
  %v423 = vmul.f32 %v55, %v407
  %v424 = vmul.f32 %v56, %v408
  %v425 = vmul.f32 %v57, %v409
  %v426 = vmul.f32 %v58, %v410
  %v427 = vmul.f32 %v59, %v411
  %v428 = vmul.f32 %v60, %v412
  %v429 = vmul.f32 %v61, %v413
  %v430 = vmul.f32 %v62, %v414
  %v431 = vmul.f32 %v63, %v415
  %v432 = vmul.f32 %v64, %v416
  %v433 = vmul.f32 %v65, %v417
  %v434 = vmul.f32 %v66, %v418
  %v435 = vmul.f32 %v67, %v419
  %452 = vrot.lane.b32.xlu0 %v404, 8
  %v453 = vpop.permute.xlu0 %452
  %454 = vrot.lane.b32.xlu0 %v405, 8
  %v455 = vpop.permute.xlu0 %454
  %456 = vrot.lane.b32.xlu0 %v406, 8
  %v457 = vpop.permute.xlu0 %456
  %458 = vrot.lane.b32.xlu0 %v407, 8
  %v459 = vpop.permute.xlu0 %458
  %460 = vrot.lane.b32.xlu0 %v408, 8
  %v461 = vpop.permute.xlu0 %460
  %462 = vrot.lane.b32.xlu0 %v409, 8
  %v463 = vpop.permute.xlu0 %462
  %464 = vrot.lane.b32.xlu0 %v410, 8
  %v465 = vpop.permute.xlu0 %464
  %466 = vrot.lane.b32.xlu0 %v411, 8
  %v467 = vpop.permute.xlu0 %466
  %468 = vrot.lane.b32.xlu0 %v412, 8
  %v469 = vpop.permute.xlu0 %468
  %470 = vrot.lane.b32.xlu0 %v413, 8
  %v471 = vpop.permute.xlu0 %470
  %472 = vrot.lane.b32.xlu0 %v414, 8
  %v473 = vpop.permute.xlu0 %472
  %474 = vrot.lane.b32.xlu0 %v415, 8
  %v475 = vpop.permute.xlu0 %474
  %476 = vrot.lane.b32.xlu0 %v416, 8
  %v477 = vpop.permute.xlu0 %476
  %478 = vrot.lane.b32.xlu0 %v417, 8
  %v479 = vpop.permute.xlu0 %478
  %480 = vrot.lane.b32.xlu0 %v418, 8
  %v481 = vpop.permute.xlu0 %480
  %482 = vrot.lane.b32.xlu0 %v419, 8
  %v483 = vpop.permute.xlu0 %482
  %v500 = vmul.f32 %v96, %v453
  %v501 = vmul.f32 %v97, %v455
  %v502 = vmul.f32 %v98, %v457
  %v503 = vmul.f32 %v99, %v459
  %v504 = vmul.f32 %v100, %v461
  %v505 = vmul.f32 %v101, %v463
  %v506 = vmul.f32 %v102, %v465
  %v507 = vmul.f32 %v103, %v467
  %v508 = vmul.f32 %v104, %v469
  %v509 = vmul.f32 %v105, %v471
  %v510 = vmul.f32 %v106, %v473
  %v511 = vmul.f32 %v107, %v475
  %v512 = vmul.f32 %v108, %v477
  %v513 = vmul.f32 %v109, %v479
  %v514 = vmul.f32 %v110, %v481
  %v515 = vmul.f32 %v111, %v483
  %vm516 = vcmask 64512
  %v517 = vsel %vm516, %v420, %v500
  %v518 = vsel %vm516, %v421, %v501
  %v519 = vsel %vm516, %v422, %v502
  %v520 = vsel %vm516, %v423, %v503
  %v521 = vsel %vm516, %v424, %v504
  %v522 = vsel %vm516, %v425, %v505
  %v523 = vsel %vm516, %v426, %v506
  %v524 = vsel %vm516, %v427, %v507
  %v525 = vsel %vm516, %v428, %v508
  %v526 = vsel %vm516, %v429, %v509
  %v527 = vsel %vm516, %v430, %v510
  %v528 = vsel %vm516, %v431, %v511
  %v529 = vsel %vm516, %v432, %v512
  %v530 = vsel %vm516, %v433, %v513
  %v531 = vsel %vm516, %v434, %v514
  %v532 = vsel %vm516, %v435, %v515
  %vm533 = vcmask 130048
  %534 = vst.msk [vmem:[%s2] sm:$0xff] %vm533, %v517
  %535 = vst.msk [vmem:[%s2 + $0x8] sm:$0xff] %vm533, %v518
  %536 = vst.msk [vmem:[%s2 + $0x10] sm:$0xff] %vm533, %v519
  %537 = vst.msk [vmem:[%s2 + $0x18] sm:$0xff] %vm533, %v520
  %538 = vst.msk [vmem:[%s2 + $0x20] sm:$0xff] %vm533, %v521
  %539 = vst.msk [vmem:[%s2 + $0x28] sm:$0xff] %vm533, %v522
  %540 = vst.msk [vmem:[%s2 + $0x30] sm:$0xff] %vm533, %v523
  %541 = vst.msk [vmem:[%s2 + $0x38] sm:$0xff] %vm533, %v524
  %542 = vst.msk [vmem:[%s2 + $0x40] sm:$0xff] %vm533, %v525
  %543 = vst.msk [vmem:[%s2 + $0x48] sm:$0xff] %vm533, %v526
  %544 = vst.msk [vmem:[%s2 + $0x50] sm:$0xff] %vm533, %v527
  %545 = vst.msk [vmem:[%s2 + $0x58] sm:$0xff] %vm533, %v528
  %546 = vst.msk [vmem:[%s2 + $0x60] sm:$0xff] %vm533, %v529
  %547 = vst.msk [vmem:[%s2 + $0x68] sm:$0xff] %vm533, %v530
  %548 = vst.msk [vmem:[%s2 + $0x70] sm:$0xff] %vm533, %v531
  %549 = vst.msk [vmem:[%s2 + $0x78] sm:$0xff] %vm533, %v532
  // Predicated region
  $region10: #{down_cmplx_forward.11} parent=0 // pred_check
    _
  $region11: #{down_cmplx_forward.11} parent=0 // pred_check_branch
    %551 = sbr.rel (0) target = $region13
  $region12: #{down_cmplx_forward.11} parent=0 // pred_region
    _
  $region13: #{down_cmplx_forward.11} parent=0 // pred_fallthru
    _
  // Predicated region
  $region14: #{down_cmplx_forward.11} parent=0 // pred_check
    _
  $region15: #{down_cmplx_forward.11} parent=0 // pred_check_branch
    %553 = sbr.rel (0) target = $region17
  $region16: #{down_cmplx_forward.11} parent=0 // pred_region
    _
  $region17: #{down_cmplx_forward.11} parent=0 // pred_fallthru
    _

// kernel: down_cmplx_forward.12
$region0: #{down_cmplx_forward.12}
  #allocation0 [shape = 'u32[]', space=smem, size = 0x4, offset = 0x4, fixed_abs, tag = 'smem constant byte address 0x4 - core index']
  #allocation1 [shape = 'u32[144,128]{1,0:T(1,128)}', space=vmem, size = 0x12000, scoped, tag = 'internal scratch']
  %s0 = inlined_call_operand.vmem [shape: f32[2,10,10,16], index: 0, kind: input, shape index: {}]
  %s1 = inlined_call_operand.vmem [shape: bf16[144,16], index: 1, kind: input, shape index: {}]
  %s2 = inlined_call_operand.vmem [shape: f32[2,64,16], index: 2, kind: output, shape index: {0}]
  %s3 = inlined_call_operand.vmem [shape: f32[2,1,16], index: 3, kind: output, shape index: {1}]
  %4 = xla_tuple %s2, %s3
  %s5 = sld [smem:[#allocation0]]
  $region49: #{down_cmplx_forward.12} parent=0
    _
  %s7 = ssub.s32 1, %s5
  %s8 = scalar_select 0, %s7, %s5
  loop: start=0, step=1, limit=4
  $region2: #{down_cmplx_forward.12} parent=0 // loop_pre_header
    _
  $region3: #{down_cmplx_forward.12} parent=0 // loop_header
    %s10 = sphi 0, %s14
    %p11 = scmp.ge.s32.totalorder %s10, 4
    %s20 = sphi 0, %s22
    %s23 = sphi 0, %s20
    %s24 = sphi 0, %s23
    %s40 = sphi 0, %s24
    %s44 = sphi 0, %s44
    %s46 = sphi 0, %s44
    %s47 = sphi 0, %s46
    %s61 = sphi 0, %s47
    %s67 = sphi 0, %s69
    %s70 = sphi 0, %s67
    %s71 = sphi 0, %s70
    %s87 = sphi 0, %s71
    %s93 = sphi 0, %s95
    %s96 = sphi 0, %s93
    %s97 = sphi 0, %s96
    %s113 = sphi 0, %s97
  $region4: #{down_cmplx_forward.12} parent=0 // loop_header_branch
    %13 = sbr.rel (%p11) target = $region8
  $region5: #{down_cmplx_forward.12} parent=0 // loop_body
    %s15 = ssub.s32 %s10, 1
    %s16 = ssub.s32 %s10, 2
    %s17 = sadd.s32 %s10, 1
    %s18 = ssub.s32 %s10, %s17
    %p19 = scmp.eq.s32.totalorder %s18, 0
    %s21 = sadd.s32 %s20, 1
    %s22 = scalar_select %p19, %s20, %s21
    %p25 = pneg %p19
    %p26 = scmp.eq.s32.totalorder %s10, 1
    %p27 = por %p25, %p26
    %p28 = scmp.ne.s32.totalorder %s20, %s23
    %p29 = scmp.eq.s32.totalorder %s10, 0
    %p30 = por %p28, %p29
    %p31 = scmp.ne.s32.totalorder %s20, %s23
    %p32 = scmp.eq.s32.totalorder %s15, 1
    %p33 = por %p31, %p32
    %p34 = scmp.ne.s32.totalorder %s23, %s24
    %p35 = scmp.eq.s32.totalorder %s15, 0
    %p36 = por %p34, %p35
    %p37 = scmp.ne.s32.totalorder %s23, %s24
    %p38 = scmp.eq.s32.totalorder %s16, 1
    %p39 = por %p37, %p38
    %p41 = scmp.ne.s32.totalorder %s24, %s40
    %p42 = scmp.eq.s32.totalorder %s16, 0
    %p43 = por %p41, %p42
    %s45 = sadd.s32 %s44, 1
    %p48 = scmp.eq.s32.totalorder %s10, 1
    %p49 = scmp.ne.s32.totalorder %s44, %s46
    %p50 = scmp.eq.s32.totalorder %s10, 0
    %p51 = por %p49, %p50
    %p52 = scmp.ne.s32.totalorder %s44, %s46
    %p53 = scmp.eq.s32.totalorder %s15, 1
    %p54 = por %p52, %p53
    %p55 = scmp.ne.s32.totalorder %s46, %s47
    %p56 = scmp.eq.s32.totalorder %s15, 0
    %p57 = por %p55, %p56
    %p58 = scmp.ne.s32.totalorder %s46, %s47
    %p59 = scmp.eq.s32.totalorder %s16, 1
    %p60 = por %p58, %p59
    %p62 = scmp.ne.s32.totalorder %s47, %s61
    %p63 = scmp.eq.s32.totalorder %s16, 0
    %p64 = por %p62, %p63
    %s65 = ssub.s32 %s10, %s17
    %p66 = scmp.eq.s32.totalorder %s65, 0
    %s68 = sadd.s32 %s67, 1
    %s69 = scalar_select %p66, %s67, %s68
    %p72 = pneg %p66
    %p73 = scmp.eq.s32.totalorder %s10, 1
    %p74 = por %p72, %p73
    %p75 = scmp.ne.s32.totalorder %s67, %s70
    %p76 = scmp.eq.s32.totalorder %s10, 0
    %p77 = por %p75, %p76
    %p78 = scmp.ne.s32.totalorder %s67, %s70
    %p79 = scmp.eq.s32.totalorder %s15, 1
    %p80 = por %p78, %p79
    %p81 = scmp.ne.s32.totalorder %s70, %s71
    %p82 = scmp.eq.s32.totalorder %s15, 0
    %p83 = por %p81, %p82
    %p84 = scmp.ne.s32.totalorder %s70, %s71
    %p85 = scmp.eq.s32.totalorder %s16, 1
    %p86 = por %p84, %p85
    %p88 = scmp.ne.s32.totalorder %s71, %s87
    %p89 = scmp.eq.s32.totalorder %s16, 0
    %p90 = por %p88, %p89
    %s91 = ssub.s32 %s10, %s17
    %p92 = scmp.eq.s32.totalorder %s91, 0
    %s94 = sadd.s32 %s93, 1
    %s95 = scalar_select %p92, %s93, %s94
    %p98 = pneg %p92
    %p99 = scmp.eq.s32.totalorder %s10, 1
    %p100 = por %p98, %p99
    %p101 = scmp.ne.s32.totalorder %s93, %s96
    %p102 = scmp.eq.s32.totalorder %s10, 0
    %p103 = por %p101, %p102
    %p104 = scmp.ne.s32.totalorder %s93, %s96
    %p105 = scmp.eq.s32.totalorder %s15, 1
    %p106 = por %p104, %p105
    %p107 = scmp.ne.s32.totalorder %s96, %s97
    %p108 = scmp.eq.s32.totalorder %s15, 0
    %p109 = por %p107, %p108
    %p110 = scmp.ne.s32.totalorder %s96, %s97
    %p111 = scmp.eq.s32.totalorder %s16, 1
    %p112 = por %p110, %p111
    %p114 = scmp.ne.s32.totalorder %s97, %s113
    %p115 = scmp.eq.s32.totalorder %s16, 0
    %p116 = por %p114, %p115
    %p117 = scmp.le.s32.totalorder 1, %s10
    %p118 = scmp.lt.s32.totalorder %s10, 3
    %p119 = pnand %p117, %p118
    %p120 = pneg %p119
    // Predicated region
    $region9: #{down_cmplx_forward.12} parent=5 // pred_check
      _
    $region10: #{down_cmplx_forward.12} parent=5 // pred_check_branch
      %122 = sbr.rel (%p119) target = $region12
    $region11: #{down_cmplx_forward.12} parent=5 // pred_region
      %s123 = ssub.s32 %s10, 1
      // Predicated region
      $region13: #{down_cmplx_forward.12} parent=11 // pred_check
        %p124 = pneg %p57
      $region14: #{down_cmplx_forward.12} parent=11 // pred_check_branch
        %126 = sbr.rel (%p124) target = $region16
      $region15: #{down_cmplx_forward.12} parent=11 // pred_region
        _
      $region16: #{down_cmplx_forward.12} parent=11 // pred_fallthru
        _
    $region12: #{down_cmplx_forward.12} parent=5 // pred_fallthru
      _
    %p127 = scmp.lt.s32.totalorder %s10, 2
    // Predicated region
    $region17: #{down_cmplx_forward.12} parent=5 // pred_check
      %p128 = pneg %p127
    $region18: #{down_cmplx_forward.12} parent=5 // pred_check_branch
      %130 = sbr.rel (%p128) target = $region20
    $region19: #{down_cmplx_forward.12} parent=5 // pred_region
      // Predicated region
      $region21: #{down_cmplx_forward.12} parent=19 // pred_check
        %p131 = pneg %p30
      $region22: #{down_cmplx_forward.12} parent=19 // pred_check_branch
        %133 = sbr.rel (%p131) target = $region24
      $region23: #{down_cmplx_forward.12} parent=19 // pred_region
        %p134 = scmp.lt.s32.totalorder %s10, 1
        %s135 = scalar_select %p134, %s10, 1
        %s136 = smul.addr %s135, 20
        %s137 = smul.addr %s136, 8
        %s138 = scalar_lea.vmem %s0, %s137
      $region24: #{down_cmplx_forward.12} parent=19 // pred_fallthru
        _
    $region20: #{down_cmplx_forward.12} parent=5 // pred_fallthru
      _
    %p139 = scmp.le.s32.totalorder 1, %s10
    %p140 = scmp.lt.s32.totalorder %s10, 3
    %p141 = pnand %p139, %p140
    %p142 = pneg %p141
    // Predicated region
    $region25: #{down_cmplx_forward.12} parent=5 // pred_check
      _
    $region26: #{down_cmplx_forward.12} parent=5 // pred_check_branch
      %144 = sbr.rel (%p141) target = $region28
    $region27: #{down_cmplx_forward.12} parent=5 // pred_region
      %s145 = ssub.s32 %s10, 1
      %p146 = scmp.lt.s32.totalorder %s15, 1
      %s147 = scalar_select %p146, %s15, 1
      %s148 = smul.addr %s147, 20
      %s149 = smul.addr %s148, 8
      %s150 = scalar_lea.vmem %s0, %s149
      %p151 = pneg %p36
      %p152 = pneg %p33
      %p153 = pneg %p57
      %p154 = pneg %p54
      %p155 = pneg %p83
      %p156 = pneg %p80
      %p157 = scmp.lt.s32.totalorder %s15, 1
      %s158 = scalar_select %p157, %s15, 1
      %s159 = smul.addr %s158, 8
      %s160 = smul.addr %s159, 8
      %s161 = scalar_lea.vmem %s2, %s160
      %p162 = pneg %p109
      %p163 = pneg %p106
      %p164 = scmp.lt.s32.totalorder %s15, 1
      %s165 = scalar_select %p164, %s15, 1
      %s166 = scalar_lea.vmem %s3, %s165
      %p167 = scmp.lt.s32.totalorder %s15, 1
      %s168 = scalar_select %p167, %s15, 1
      %s169 = smul.addr %s168, 20
      %s170 = smul.addr %s169, 8
      %s171 = scalar_lea.vmem %s0, %s170
      %p172 = scmp.lt.s32.totalorder %s15, 1
      %s173 = scalar_select %p172, %s15, 1
      %s174 = smul.addr %s173, 8
      %s175 = smul.addr %s174, 8
      %s176 = scalar_lea.vmem %s2, %s175
      %p177 = scmp.lt.s32.totalorder %s15, 1
      %s178 = scalar_select %p177, %s15, 1
      %s179 = scalar_lea.vmem %s3, %s178
      %v181 = vld [vmem:[%s171] sm:$0xff]
      %v182 = vld [vmem:[%s171 + $0x8] sm:$0x3]
      %v183 = vld [vmem:[%s171 + $0x10] sm:$0xff]
      %v184 = vld [vmem:[%s171 + $0x18] sm:$0x3]
      %v185 = vld [vmem:[%s171 + $0x20] sm:$0xff]
      %v186 = vld [vmem:[%s171 + $0x28] sm:$0x3]
      %v187 = vld [vmem:[%s171 + $0x30] sm:$0xff]
      %v188 = vld [vmem:[%s171 + $0x38] sm:$0x3]
      %v189 = vld [vmem:[%s171 + $0x40] sm:$0xff]
      %v190 = vld [vmem:[%s171 + $0x48] sm:$0x3]
      %v191 = vld [vmem:[%s171 + $0x50] sm:$0xff]
      %v192 = vld [vmem:[%s171 + $0x58] sm:$0x3]
      %v193 = vld [vmem:[%s171 + $0x60] sm:$0xff]
      %v194 = vld [vmem:[%s171 + $0x68] sm:$0x3]
      %v195 = vld [vmem:[%s171 + $0x70] sm:$0xff]
      %v196 = vld [vmem:[%s171 + $0x78] sm:$0x3]
      %v197 = vld [vmem:[%s171 + $0x80] sm:$0xff]
      %v198 = vld [vmem:[%s171 + $0x88] sm:$0x3]
      %v199 = vld [vmem:[%s171 + $0x90] sm:$0xff]
      %v200 = vld [vmem:[%s171 + $0x98] sm:$0x3]
      %vm217 = vcmask 1046528
      %v218 = vrot.slane %v181, 1
      %v219 = vrot.slane %v182, 1
      %v220 = vsel %vm217, %v218, %v219
      %v221 = vrot.slane %v183, 1
      %v222 = vrot.slane %v184, 1
      %v223 = vsel %vm217, %v221, %v222
      %v224 = vrot.slane %v185, 1
      %v225 = vrot.slane %v186, 1
      %v226 = vsel %vm217, %v224, %v225
      %v227 = vrot.slane %v187, 1
      %v228 = vrot.slane %v188, 1
      %v229 = vsel %vm217, %v227, %v228
      %v230 = vrot.slane %v189, 1
      %v231 = vrot.slane %v190, 1
      %v232 = vsel %vm217, %v230, %v231
      %v233 = vrot.slane %v191, 1
      %v234 = vrot.slane %v192, 1
      %v235 = vsel %vm217, %v233, %v234
      %v236 = vrot.slane %v193, 1
      %v237 = vrot.slane %v194, 1
      %v238 = vsel %vm217, %v236, %v237
      %v239 = vrot.slane %v195, 1
      %v240 = vrot.slane %v196, 1
      %v241 = vsel %vm217, %v239, %v240
      %242 = vrot.lane.b32.xlu0 %v220, 16
      %v243 = vpop.permute.xlu0 %242
      %244 = vrot.lane.b32.xlu0 %v223, 16
      %v245 = vpop.permute.xlu0 %244
      %246 = vrot.lane.b32.xlu0 %v226, 16
      %v247 = vpop.permute.xlu0 %246
      %248 = vrot.lane.b32.xlu0 %v229, 16
      %v249 = vpop.permute.xlu0 %248
      %250 = vrot.lane.b32.xlu0 %v232, 16
      %v251 = vpop.permute.xlu0 %250
      %252 = vrot.lane.b32.xlu0 %v235, 16
      %v253 = vpop.permute.xlu0 %252
      %254 = vrot.lane.b32.xlu0 %v238, 16
      %v255 = vpop.permute.xlu0 %254
      %256 = vrot.lane.b32.xlu0 %v241, 16
      %v257 = vpop.permute.xlu0 %256
      %vm266 = vcmask 1045504
      %v267 = vrot.slane %v181, 2
      %v268 = vrot.slane %v182, 2
      %v269 = vsel %vm266, %v267, %v268
      %v270 = vrot.slane %v183, 2
      %v271 = vrot.slane %v184, 2
      %v272 = vsel %vm266, %v270, %v271
      %v273 = vrot.slane %v185, 2
      %v274 = vrot.slane %v186, 2
      %v275 = vsel %vm266, %v273, %v274
      %v276 = vrot.slane %v187, 2
      %v277 = vrot.slane %v188, 2
      %v278 = vsel %vm266, %v276, %v277
      %v279 = vrot.slane %v189, 2
      %v280 = vrot.slane %v190, 2
      %v281 = vsel %vm266, %v279, %v280
      %v282 = vrot.slane %v191, 2
      %v283 = vrot.slane %v192, 2
      %v284 = vsel %vm266, %v282, %v283
      %v285 = vrot.slane %v193, 2
      %v286 = vrot.slane %v194, 2
      %v287 = vsel %vm266, %v285, %v286
      %v288 = vrot.slane %v195, 2
      %v289 = vrot.slane %v196, 2
      %v290 = vsel %vm266, %v288, %v289
      %291 = vrot.lane.b32.xlu0 %v269, 32
      %v292 = vpop.permute.xlu0 %291
      %293 = vrot.lane.b32.xlu0 %v272, 32
      %v294 = vpop.permute.xlu0 %293
      %295 = vrot.lane.b32.xlu0 %v275, 32
      %v296 = vpop.permute.xlu0 %295
      %297 = vrot.lane.b32.xlu0 %v278, 32
      %v298 = vpop.permute.xlu0 %297
      %299 = vrot.lane.b32.xlu0 %v281, 32
      %v300 = vpop.permute.xlu0 %299
      %301 = vrot.lane.b32.xlu0 %v284, 32
      %v302 = vpop.permute.xlu0 %301
      %303 = vrot.lane.b32.xlu0 %v287, 32
      %v304 = vpop.permute.xlu0 %303
      %305 = vrot.lane.b32.xlu0 %v290, 32
      %v306 = vpop.permute.xlu0 %305
      %316 = vrot.lane.b32.xlu0 %v183, 48
      %v317 = vpop.permute.xlu0 %316
      %318 = vrot.lane.b32.xlu0 %v185, 48
      %v319 = vpop.permute.xlu0 %318
      %320 = vrot.lane.b32.xlu0 %v187, 48
      %v321 = vpop.permute.xlu0 %320
      %322 = vrot.lane.b32.xlu0 %v189, 48
      %v323 = vpop.permute.xlu0 %322
      %324 = vrot.lane.b32.xlu0 %v191, 48
      %v325 = vpop.permute.xlu0 %324
      %326 = vrot.lane.b32.xlu0 %v193, 48
      %v327 = vpop.permute.xlu0 %326
      %328 = vrot.lane.b32.xlu0 %v195, 48
      %v329 = vpop.permute.xlu0 %328
      %330 = vrot.lane.b32.xlu0 %v197, 48
      %v331 = vpop.permute.xlu0 %330
      %v341 = vrot.slane %v197, 1
      %v342 = vrot.slane %v198, 1
      %v343 = vsel %vm217, %v341, %v342
      %344 = vrot.lane.b32.xlu0 %v223, 64
      %v345 = vpop.permute.xlu0 %344
      %346 = vrot.lane.b32.xlu0 %v226, 64
      %v347 = vpop.permute.xlu0 %346
      %348 = vrot.lane.b32.xlu0 %v229, 64
      %v349 = vpop.permute.xlu0 %348
      %350 = vrot.lane.b32.xlu0 %v232, 64
      %v351 = vpop.permute.xlu0 %350
      %352 = vrot.lane.b32.xlu0 %v235, 64
      %v353 = vpop.permute.xlu0 %352
      %354 = vrot.lane.b32.xlu0 %v238, 64
      %v355 = vpop.permute.xlu0 %354
      %356 = vrot.lane.b32.xlu0 %v241, 64
      %v357 = vpop.permute.xlu0 %356
      %358 = vrot.lane.b32.xlu0 %v343, 64
      %v359 = vpop.permute.xlu0 %358
      %v368 = vrot.slane %v197, 2
      %v369 = vrot.slane %v198, 2
      %v370 = vsel %vm266, %v368, %v369
      %371 = vrot.lane.b32.xlu0 %v272, 80
      %v372 = vpop.permute.xlu0 %371
      %373 = vrot.lane.b32.xlu0 %v275, 80
      %v374 = vpop.permute.xlu0 %373
      %375 = vrot.lane.b32.xlu0 %v278, 80
      %v376 = vpop.permute.xlu0 %375
      %377 = vrot.lane.b32.xlu0 %v281, 80
      %v378 = vpop.permute.xlu0 %377
      %379 = vrot.lane.b32.xlu0 %v284, 80
      %v380 = vpop.permute.xlu0 %379
      %381 = vrot.lane.b32.xlu0 %v287, 80
      %v382 = vpop.permute.xlu0 %381
      %383 = vrot.lane.b32.xlu0 %v290, 80
      %v384 = vpop.permute.xlu0 %383
      %385 = vrot.lane.b32.xlu0 %v370, 80
      %v386 = vpop.permute.xlu0 %385
      %396 = vrot.lane.b32.xlu0 %v185, 96
      %v397 = vpop.permute.xlu0 %396
      %398 = vrot.lane.b32.xlu0 %v187, 96
      %v399 = vpop.permute.xlu0 %398
      %400 = vrot.lane.b32.xlu0 %v189, 96
      %v401 = vpop.permute.xlu0 %400
      %402 = vrot.lane.b32.xlu0 %v191, 96
      %v403 = vpop.permute.xlu0 %402
      %404 = vrot.lane.b32.xlu0 %v193, 96
      %v405 = vpop.permute.xlu0 %404
      %406 = vrot.lane.b32.xlu0 %v195, 96
      %v407 = vpop.permute.xlu0 %406
      %408 = vrot.lane.b32.xlu0 %v197, 96
      %v409 = vpop.permute.xlu0 %408
      %410 = vrot.lane.b32.xlu0 %v199, 96
      %v411 = vpop.permute.xlu0 %410
      %v421 = vrot.slane %v199, 1
      %v422 = vrot.slane %v200, 1
      %v423 = vsel %vm217, %v421, %v422
      %424 = vrot.lane.b32.xlu0 %v226, 112
      %v425 = vpop.permute.xlu0 %424
      %426 = vrot.lane.b32.xlu0 %v229, 112
      %v427 = vpop.permute.xlu0 %426
      %428 = vrot.lane.b32.xlu0 %v232, 112
      %v429 = vpop.permute.xlu0 %428
      %430 = vrot.lane.b32.xlu0 %v235, 112
      %v431 = vpop.permute.xlu0 %430
      %432 = vrot.lane.b32.xlu0 %v238, 112
      %v433 = vpop.permute.xlu0 %432
      %434 = vrot.lane.b32.xlu0 %v241, 112
      %v435 = vpop.permute.xlu0 %434
      %436 = vrot.lane.b32.xlu0 %v343, 112
      %v437 = vpop.permute.xlu0 %436
      %438 = vrot.lane.b32.xlu0 %v423, 112
      %v439 = vpop.permute.xlu0 %438
      %v448 = vrot.slane %v199, 2
      %v449 = vrot.slane %v200, 2
      %v450 = vsel %vm266, %v448, %v449
      %vm459 = vcmask 130048
      %v460 = vsel %vm459, %v181, %v243
      %v461 = vsel %vm459, %v183, %v245
      %v462 = vsel %vm459, %v185, %v247
      %v463 = vsel %vm459, %v187, %v249
      %v464 = vsel %vm459, %v189, %v251
      %v465 = vsel %vm459, %v191, %v253
      %v466 = vsel %vm459, %v193, %v255
      %v467 = vsel %vm459, %v195, %v257
      %vm468 = vcmask 261120
      %v469 = vsel %vm468, %v460, %v292
      %v470 = vsel %vm468, %v461, %v294
      %v471 = vsel %vm468, %v462, %v296
      %v472 = vsel %vm468, %v463, %v298
      %v473 = vsel %vm468, %v464, %v300
      %v474 = vsel %vm468, %v465, %v302
      %v475 = vsel %vm468, %v466, %v304
      %v476 = vsel %vm468, %v467, %v306
      %vm477 = vcmask 392192
      %v478 = vsel %vm477, %v469, %v317
      %v479 = vsel %vm477, %v470, %v319
      %v480 = vsel %vm477, %v471, %v321
      %v481 = vsel %vm477, %v472, %v323
      %v482 = vsel %vm477, %v473, %v325
      %v483 = vsel %vm477, %v474, %v327
      %v484 = vsel %vm477, %v475, %v329
      %v485 = vsel %vm477, %v476, %v331
      %vm486 = vcmask 523264
      %v487 = vsel %vm486, %v478, %v345
      %v488 = vsel %vm486, %v479, %v347
      %v489 = vsel %vm486, %v480, %v349
      %v490 = vsel %vm486, %v481, %v351
      %v491 = vsel %vm486, %v482, %v353
      %v492 = vsel %vm486, %v483, %v355
      %v493 = vsel %vm486, %v484, %v357
      %v494 = vsel %vm486, %v485, %v359
      %vm495 = vcmask 654336
      %v496 = vsel %vm495, %v487, %v372
      %v497 = vsel %vm495, %v488, %v374
      %v498 = vsel %vm495, %v489, %v376
      %v499 = vsel %vm495, %v490, %v378
      %v500 = vsel %vm495, %v491, %v380
      %v501 = vsel %vm495, %v492, %v382
      %v502 = vsel %vm495, %v493, %v384
      %v503 = vsel %vm495, %v494, %v386
      %vm504 = vcmask 785408
      %v505 = vsel %vm504, %v496, %v397
      %v506 = vsel %vm504, %v497, %v399
      %v507 = vsel %vm504, %v498, %v401
      %v508 = vsel %vm504, %v499, %v403
      %v509 = vsel %vm504, %v500, %v405
      %v510 = vsel %vm504, %v501, %v407
      %v511 = vsel %vm504, %v502, %v409
      %v512 = vsel %vm504, %v503, %v411
      %vm513 = vcmask 916480
      %v514 = vsel %vm513, %v505, %v425
      %v515 = vsel %vm513, %v506, %v427
      %v516 = vsel %vm513, %v507, %v429
      %v517 = vsel %vm513, %v508, %v431
      %v518 = vsel %vm513, %v509, %v433
      %v519 = vsel %vm513, %v510, %v435
      %v520 = vsel %vm513, %v511, %v437
      %v521 = vsel %vm513, %v512, %v439
      %v522 = vpack.c.bf16 %v515, %v514
      %v523 = vpack.c.bf16 %v278, %v275
      %v524 = vpack.c.bf16 %v517, %v516
      %v525 = vpack.c.bf16 %v284, %v281
      %v526 = vpack.c.bf16 %v519, %v518
      %v527 = vpack.c.bf16 %v290, %v287
      %v528 = vpack.c.bf16 %v521, %v520
      %v529 = vpack.c.bf16 %v450, %v370
      %v530 = vld [vmem:[%s1] sm:$0xf]
      %v531 = vld [vmem:[%s1 + $0x4] sm:$0xf]
      %v532 = vld [vmem:[%s1 + $0x8] sm:$0xf]
      %v533 = vld [vmem:[%s1 + $0xc] sm:$0xf]
      %v534 = vld [vmem:[%s1 + $0x10] sm:$0xf]
      %v535 = vld [vmem:[%s1 + $0x14] sm:$0xf]
      %v536 = vld [vmem:[%s1 + $0x18] sm:$0xf]
      %v537 = vld [vmem:[%s1 + $0x1c] sm:$0xf]
      %v538 = vld [vmem:[%s1 + $0x20] sm:$0xf]
      %v539 = vld [vmem:[%s1 + $0x24] sm:$0xf]
      %v540 = vld [vmem:[%s1 + $0x28] sm:$0xf]
      %v541 = vld [vmem:[%s1 + $0x2c] sm:$0xf]
      %v542 = vld [vmem:[%s1 + $0x30] sm:$0xf]
      %v543 = vld [vmem:[%s1 + $0x34] sm:$0xf]
      %v544 = vld [vmem:[%s1 + $0x38] sm:$0xf]
      %v545 = vld [vmem:[%s1 + $0x3c] sm:$0xf]
      %v546 = vld [vmem:[%s1 + $0x40] sm:$0xf]
      %v547 = vld [vmem:[%s1 + $0x44] sm:$0xf]
      %v566 = vunpack.c.l.b16 %v530
      %v567 = vunpack.c.l.b16 %v531
      %v568 = vunpack.c.l.b16 %v532
      %v569 = vunpack.c.l.b16 %v533
      %v570 = vunpack.c.l.b16 %v534
      %v571 = vunpack.c.l.b16 %v535
      %v572 = vunpack.c.l.b16 %v536
      %v573 = vunpack.c.l.b16 %v537
      %v574 = vunpack.c.l.b16 %v538
      %v575 = vunpack.c.l.b16 %v539
      %v576 = vunpack.c.l.b16 %v540
      %v577 = vunpack.c.l.b16 %v541
      %v578 = vunpack.c.l.b16 %v542
      %v579 = vunpack.c.l.b16 %v543
      %v580 = vunpack.c.l.b16 %v544
      %v581 = vunpack.c.l.b16 %v545
      %v582 = vunpack.c.l.b16 %v546
      %v583 = vunpack.c.l.b16 %v547
      %v584 = vpack.c.b16 %v567, %v566
      %v585 = vpack.c.b16 %v569, %v568
      %v586 = vpack.c.b16 %v571, %v570
      %v587 = vpack.c.b16 %v573, %v572
      %v588 = vpack.c.b16 %v575, %v574
      %v589 = vpack.c.b16 %v577, %v576
      %v590 = vpack.c.b16 %v579, %v578
      %v591 = vpack.c.b16 %v581, %v580
      %v592 = vpack.c.b16 %v583, %v582
      %v603 = vsel %vm459, %v523, 0
      %v606 = vsel %vm459, %v525, 0
      %v609 = vsel %vm459, %v527, 0
      %v612 = vsel %vm459, %v529, 0
      %614 = vmatprep.subr.bf16.mxu0 0
      %615 = vmatpush1.bf16.msra.mxu0 %v591
      %616 = vmatprep.subr.bf16.mxu0 0
      %617 = vmatpush1.bf16.msra.mxu0 %v590
      %618 = vmatprep.subr.bf16.mxu0 0
      %619 = vmatpush1.bf16.msra.mxu0 %v589
      %620 = vmatprep.subr.bf16.mxu0 0
      %621 = vmatpush1.bf16.msra.mxu0 %v588
      %622 = vmatprep.subr.bf16.mxu0 0
      %623 = vmatpush1.bf16.msra.mxu0 %v587
      %624 = vmatprep.subr.bf16.mxu0 0
      %625 = vmatpush1.bf16.msra.mxu0 %v586
      %626 = vmatprep.subr.bf16.mxu0 0
      %627 = vmatpush1.bf16.msra.mxu0 %v585
      %628 = vmatprep.subr.bf16.mxu0 0
      %629 = vmatpush1.bf16.msra.mxu0 %v584
      %630 = vmatprep.subr.bf16.mxu0 0
      %631 = vmatpush2.bf16.msra.mxu0 0
      %632 = vmatprep.subr.bf16.mxu0 0
      %633 = vmatpush2.bf16.msra.mxu0 0
      %634 = vmatprep.subr.bf16.mxu0 0
      %635 = vmatpush2.bf16.msra.mxu0 0
      %636 = vmatprep.subr.bf16.mxu0 0
      %637 = vmatpush2.bf16.msra.mxu0 0
      %638 = vmatprep.subr.bf16.mxu0 0
      %639 = vmatpush2.bf16.msra.mxu0 0
      %640 = vmatprep.subr.bf16.mxu0 0
      %641 = vmatpush2.bf16.msra.mxu0 0
      %642 = vmatprep.subr.bf16.mxu0 0
      %643 = vmatpush2.bf16.msra.mxu0 0
      %644 = vmatprep.subr.bf16.mxu0 0
      %645 = vmatpush2.bf16.msra.mxu0 %v592
      %646 = vmatprep.mubr.bf16.mxu0 %v603
      %647 = vmatmul.mubr.bf16.gmra.mxu0 %v522
      %v648 = vpop.f32.mrf.mxu0
      %v649 = vadd.f32 0.0, %v648
      %v650 = vpop.f32.mrf.mxu0
      %v651 = vpop.f32.mrf.mxu0
      %v652 = vadd.f32 0.0, %v651
      %v653 = vpop.f32.mrf.mxu0
      %654 = vmatprep.mubr.bf16.mxu0 %v606
      %655 = vmatmul.mubr.bf16.gmra.mxu0 %v524
      %v656 = vpop.f32.mrf.mxu0
      %v657 = vadd.f32 0.0, %v656
      %v658 = vpop.f32.mrf.mxu0
      %v659 = vpop.f32.mrf.mxu0
      %v660 = vadd.f32 0.0, %v659
      %v661 = vpop.f32.mrf.mxu0
      %662 = vmatprep.mubr.bf16.mxu0 %v609
      %663 = vmatmul.mubr.bf16.gmra.mxu0 %v526
      %v664 = vpop.f32.mrf.mxu0
      %v665 = vadd.f32 0.0, %v664
      %v666 = vpop.f32.mrf.mxu0
      %v667 = vpop.f32.mrf.mxu0
      %v668 = vadd.f32 0.0, %v667
      %v669 = vpop.f32.mrf.mxu0
      %670 = vmatprep.mubr.bf16.mxu0 %v612
      %671 = vmatmul.mubr.bf16.gmra.mxu0 %v528
      %v672 = vpop.f32.mrf.mxu0
      %v673 = vadd.f32 0.0, %v672
      %v674 = vpop.f32.mrf.mxu0
      %v675 = vpop.f32.mrf.mxu0
      %v676 = vadd.f32 0.0, %v675
      %v677 = vpop.f32.mrf.mxu0
      %678 = vdwg.mxu0
      %679 = vst.msk [vmem:[%s176] sm:$0xff] %vm459, %v649
      %680 = vst.msk [vmem:[%s176 + $0x8] sm:$0xff] %vm459, %v652
      %681 = vst.msk [vmem:[%s176 + $0x10] sm:$0xff] %vm459, %v657
      %682 = vst.msk [vmem:[%s176 + $0x18] sm:$0xff] %vm459, %v660
      %683 = vst.msk [vmem:[%s176 + $0x20] sm:$0xff] %vm459, %v665
      %684 = vst.msk [vmem:[%s176 + $0x28] sm:$0xff] %vm459, %v668
      %685 = vst.msk [vmem:[%s176 + $0x30] sm:$0xff] %vm459, %v673
      %686 = vst.msk [vmem:[%s176 + $0x38] sm:$0xff] %vm459, %v676
      %v688 = vsel %vm486, 1.0, 0
      %690 = vmatprep.subr.mxu0 0.0
      %691 = vmatpush1.msra.mxu0 0.0
      %692 = vmatprep.subr.mxu0 0.0
      %693 = vmatpush1.msra.mxu0 0.0
      %694 = vmatprep.subr.mxu0 0.0
      %695 = vmatpush1.msra.mxu0 0.0
      %696 = vmatprep.subr.mxu0 0.0
      %697 = vmatpush1.msra.mxu0 0.0
      %698 = vmatprep.subr.mxu0 0.0
      %699 = vmatpush1.msra.mxu0 0.0
      %700 = vmatprep.subr.mxu0 0.0
      %701 = vmatpush1.msra.mxu0 0.0
      %702 = vmatprep.subr.mxu0 0.0
      %703 = vmatpush1.msra.mxu0 0.0
      %704 = vmatprep.subr.mxu0 0.0
      %705 = vmatpush1.msra.mxu0 0.0
      %706 = vmatprep.subr.mxu0 0.0
      %707 = vmatpush1.msra.mxu0 %v676
      %708 = vmatprep.subr.mxu0 0.0
      %709 = vmatpush1.msra.mxu0 %v673
      %710 = vmatprep.subr.mxu0 0.0
      %711 = vmatpush1.msra.mxu0 %v668
      %712 = vmatprep.subr.mxu0 0.0
      %713 = vmatpush1.msra.mxu0 %v665
      %714 = vmatprep.subr.mxu0 0.0
      %715 = vmatpush1.msra.mxu0 %v660
      %716 = vmatprep.subr.mxu0 0.0
      %717 = vmatpush1.msra.mxu0 %v657
      %718 = vmatprep.subr.mxu0 0.0
      %719 = vmatpush1.msra.mxu0 %v652
      %720 = vmatprep.subr.mxu0 0.0
      %721 = vmatpush1.msra.mxu0 %v649
      %722 = vmatprep.subr.mxu0 0.0
      %723 = vmatpush2.msra.mxu0 0.0
      %724 = vmatprep.subr.mxu0 0.0
      %725 = vmatpush2.msra.mxu0 0.0
      %726 = vmatprep.subr.mxu0 0.0
      %727 = vmatpush2.msra.mxu0 0.0
      %728 = vmatprep.subr.mxu0 0.0
      %729 = vmatpush2.msra.mxu0 0.0
      %730 = vmatprep.subr.mxu0 0.0
      %731 = vmatpush2.msra.mxu0 0.0
      %732 = vmatprep.subr.mxu0 0.0
      %733 = vmatpush2.msra.mxu0 0.0
      %734 = vmatprep.subr.mxu0 0.0
      %735 = vmatpush2.msra.mxu0 0.0
      %736 = vmatprep.subr.mxu0 0.0
      %737 = vmatpush2.msra.mxu0 0.0
      %738 = vmatprep.subr.mxu0 0.0
      %739 = vmatpush2.msra.mxu0 0.0
      %740 = vmatprep.subr.mxu0 0.0
      %741 = vmatpush2.msra.mxu0 0.0
      %742 = vmatprep.subr.mxu0 0.0
      %743 = vmatpush2.msra.mxu0 0.0
      %744 = vmatprep.subr.mxu0 0.0
      %745 = vmatpush2.msra.mxu0 0.0
      %746 = vmatprep.subr.mxu0 0.0
      %747 = vmatpush2.msra.mxu0 0.0
      %748 = vmatprep.subr.mxu0 0.0
      %749 = vmatpush2.msra.mxu0 0.0
      %750 = vmatprep.subr.mxu0 0.0
      %751 = vmatpush2.msra.mxu0 0.0
      %752 = vmatprep.subr.mxu0 0.0
      %753 = vmatpush2.msra.mxu0 0.0
      %754 = vmatprep.mubr.f32.mxu0 0.0
      %755 = vmatmul.mubr.f32.gmra.mxu0 %v688
      %v756 = vpop.f32.mrf.mxu0
      %v757 = vadd.f32 0.0, %v756
      %v758 = vpop.f32.mrf.mxu0
      %759 = vdwg.mxu0
      %vm760 = vcmask 122880
      %761 = vst.msk [vmem:[%s179] sm:$0x1] %vm760, %v757
      %p762 = scmp.lt.s32.totalorder %s15, 1
      %s763 = scalar_select %p762, %s15, 1
      %s764 = smul.addr %s763, 8
      %s765 = smul.addr %s764, 8
      %s766 = scalar_lea.vmem %s2, %s765
      %p767 = scmp.lt.s32.totalorder %s15, 1
      %s768 = scalar_select %p767, %s15, 1
      %s769 = scalar_lea.vmem %s3, %s768
      // Predicated region
      $region29: #{down_cmplx_forward.12} parent=27 // pred_check
        %p770 = pneg %p80
      $region30: #{down_cmplx_forward.12} parent=27 // pred_check_branch
        %772 = sbr.rel (%p770) target = $region32
      $region31: #{down_cmplx_forward.12} parent=27 // pred_region
        _
      $region32: #{down_cmplx_forward.12} parent=27 // pred_fallthru
        _
      // Predicated region
      $region33: #{down_cmplx_forward.12} parent=27 // pred_check
        %p773 = pneg %p106
      $region34: #{down_cmplx_forward.12} parent=27 // pred_check_branch
        %775 = sbr.rel (%p773) target = $region36
      $region35: #{down_cmplx_forward.12} parent=27 // pred_region
        _
      $region36: #{down_cmplx_forward.12} parent=27 // pred_fallthru
        _
    $region28: #{down_cmplx_forward.12} parent=5 // pred_fallthru
      _
    %p776 = scmp.le.s32.totalorder 2, %s10
    // Predicated region
    $region37: #{down_cmplx_forward.12} parent=5 // pred_check
      %p777 = pneg %p776
    $region38: #{down_cmplx_forward.12} parent=5 // pred_check_branch
      %779 = sbr.rel (%p777) target = $region40
    $region39: #{down_cmplx_forward.12} parent=5 // pred_region
      %s780 = ssub.s32 %s10, 2
      // Predicated region
      $region41: #{down_cmplx_forward.12} parent=39 // pred_check
        %p781 = pneg %p86
      $region42: #{down_cmplx_forward.12} parent=39 // pred_check_branch
        %783 = sbr.rel (%p781) target = $region44
      $region43: #{down_cmplx_forward.12} parent=39 // pred_region
        %p784 = scmp.lt.s32.totalorder %s16, 1
        %s785 = scalar_select %p784, %s16, 1
        %s786 = smul.addr %s785, 8
        %s787 = smul.addr %s786, 8
        %s788 = scalar_lea.vmem %s2, %s787
      $region44: #{down_cmplx_forward.12} parent=39 // pred_fallthru
        _
      // Predicated region
      $region45: #{down_cmplx_forward.12} parent=39 // pred_check
        %p789 = pneg %p112
      $region46: #{down_cmplx_forward.12} parent=39 // pred_check_branch
        %791 = sbr.rel (%p789) target = $region48
      $region47: #{down_cmplx_forward.12} parent=39 // pred_region
        %p792 = scmp.lt.s32.totalorder %s16, 1
        %s793 = scalar_select %p792, %s16, 1
        %s794 = scalar_lea.vmem %s3, %s793
      $region48: #{down_cmplx_forward.12} parent=39 // pred_fallthru
        _
    $region40: #{down_cmplx_forward.12} parent=5 // pred_fallthru
      _
  $region6: #{down_cmplx_forward.12} parent=0 // loop_footer
    %s14 = sadd.s32 1, %s10
  $region7: #{down_cmplx_forward.12} parent=0 // loop_footer_branch
    %9 = sbr.rel target = $region3
  $region8: #{down_cmplx_forward.12} parent=0 // loop_exit
    _

// kernel: down_cmplx_forward.15
$region0: #{down_cmplx_forward.15}
  #allocation0 [shape = 'u32[]', space=smem, size = 0x4, offset = 0x4, fixed_abs, tag = 'smem constant byte address 0x4 - core index']
  #allocation1 [shape = 'u32[144,128]{1,0:T(1,128)}', space=vmem, size = 0x12000, scoped, tag = 'internal scratch']
  %s0 = inlined_call_operand.vmem [shape: f32[2,10,10,16], index: 0, kind: input, shape index: {}]
  %s1 = inlined_call_operand.vmem [shape: bf16[144,64], index: 1, kind: input, shape index: {}]
  %s2 = inlined_call_operand.vmem [shape: f32[2,64,16], index: 2, kind: output, shape index: {0}]
  %s3 = inlined_call_operand.vmem [shape: f32[2,1,16], index: 3, kind: output, shape index: {1}]
  %4 = xla_tuple %s2, %s3
  %s5 = sld [smem:[#allocation0]]
  $region49: #{down_cmplx_forward.15} parent=0
    _
  %s7 = ssub.s32 1, %s5
  %s8 = scalar_select 0, %s7, %s5
  loop: start=0, step=1, limit=4
  $region2: #{down_cmplx_forward.15} parent=0 // loop_pre_header
    _
  $region3: #{down_cmplx_forward.15} parent=0 // loop_header
    %s10 = sphi 0, %s14
    %p11 = scmp.ge.s32.totalorder %s10, 4
    %s20 = sphi 0, %s22
    %s23 = sphi 0, %s20
    %s24 = sphi 0, %s23
    %s40 = sphi 0, %s24
    %s44 = sphi 0, %s44
    %s46 = sphi 0, %s44
    %s47 = sphi 0, %s46
    %s61 = sphi 0, %s47
    %s67 = sphi 0, %s69
    %s70 = sphi 0, %s67
    %s71 = sphi 0, %s70
    %s87 = sphi 0, %s71
    %s93 = sphi 0, %s95
    %s96 = sphi 0, %s93
    %s97 = sphi 0, %s96
    %s113 = sphi 0, %s97
  $region4: #{down_cmplx_forward.15} parent=0 // loop_header_branch
    %13 = sbr.rel (%p11) target = $region8
  $region5: #{down_cmplx_forward.15} parent=0 // loop_body
    %s15 = ssub.s32 %s10, 1
    %s16 = ssub.s32 %s10, 2
    %s17 = sadd.s32 %s10, 1
    %s18 = ssub.s32 %s10, %s17
    %p19 = scmp.eq.s32.totalorder %s18, 0
    %s21 = sadd.s32 %s20, 1
    %s22 = scalar_select %p19, %s20, %s21
    %p25 = pneg %p19
    %p26 = scmp.eq.s32.totalorder %s10, 1
    %p27 = por %p25, %p26
    %p28 = scmp.ne.s32.totalorder %s20, %s23
    %p29 = scmp.eq.s32.totalorder %s10, 0
    %p30 = por %p28, %p29
    %p31 = scmp.ne.s32.totalorder %s20, %s23
    %p32 = scmp.eq.s32.totalorder %s15, 1
    %p33 = por %p31, %p32
    %p34 = scmp.ne.s32.totalorder %s23, %s24
    %p35 = scmp.eq.s32.totalorder %s15, 0
    %p36 = por %p34, %p35
    %p37 = scmp.ne.s32.totalorder %s23, %s24
    %p38 = scmp.eq.s32.totalorder %s16, 1
    %p39 = por %p37, %p38
    %p41 = scmp.ne.s32.totalorder %s24, %s40
    %p42 = scmp.eq.s32.totalorder %s16, 0
    %p43 = por %p41, %p42
    %s45 = sadd.s32 %s44, 1
    %p48 = scmp.eq.s32.totalorder %s10, 1
    %p49 = scmp.ne.s32.totalorder %s44, %s46
    %p50 = scmp.eq.s32.totalorder %s10, 0
    %p51 = por %p49, %p50
    %p52 = scmp.ne.s32.totalorder %s44, %s46
    %p53 = scmp.eq.s32.totalorder %s15, 1
    %p54 = por %p52, %p53
    %p55 = scmp.ne.s32.totalorder %s46, %s47
    %p56 = scmp.eq.s32.totalorder %s15, 0
    %p57 = por %p55, %p56
    %p58 = scmp.ne.s32.totalorder %s46, %s47
    %p59 = scmp.eq.s32.totalorder %s16, 1
    %p60 = por %p58, %p59
    %p62 = scmp.ne.s32.totalorder %s47, %s61
    %p63 = scmp.eq.s32.totalorder %s16, 0
    %p64 = por %p62, %p63
    %s65 = ssub.s32 %s10, %s17
    %p66 = scmp.eq.s32.totalorder %s65, 0
    %s68 = sadd.s32 %s67, 1
    %s69 = scalar_select %p66, %s67, %s68
    %p72 = pneg %p66
    %p73 = scmp.eq.s32.totalorder %s10, 1
    %p74 = por %p72, %p73
    %p75 = scmp.ne.s32.totalorder %s67, %s70
    %p76 = scmp.eq.s32.totalorder %s10, 0
    %p77 = por %p75, %p76
    %p78 = scmp.ne.s32.totalorder %s67, %s70
    %p79 = scmp.eq.s32.totalorder %s15, 1
    %p80 = por %p78, %p79
    %p81 = scmp.ne.s32.totalorder %s70, %s71
    %p82 = scmp.eq.s32.totalorder %s15, 0
    %p83 = por %p81, %p82
    %p84 = scmp.ne.s32.totalorder %s70, %s71
    %p85 = scmp.eq.s32.totalorder %s16, 1
    %p86 = por %p84, %p85
    %p88 = scmp.ne.s32.totalorder %s71, %s87
    %p89 = scmp.eq.s32.totalorder %s16, 0
    %p90 = por %p88, %p89
    %s91 = ssub.s32 %s10, %s17
    %p92 = scmp.eq.s32.totalorder %s91, 0
    %s94 = sadd.s32 %s93, 1
    %s95 = scalar_select %p92, %s93, %s94
    %p98 = pneg %p92
    %p99 = scmp.eq.s32.totalorder %s10, 1
    %p100 = por %p98, %p99
    %p101 = scmp.ne.s32.totalorder %s93, %s96
    %p102 = scmp.eq.s32.totalorder %s10, 0
    %p103 = por %p101, %p102
    %p104 = scmp.ne.s32.totalorder %s93, %s96
    %p105 = scmp.eq.s32.totalorder %s15, 1
    %p106 = por %p104, %p105
    %p107 = scmp.ne.s32.totalorder %s96, %s97
    %p108 = scmp.eq.s32.totalorder %s15, 0
    %p109 = por %p107, %p108
    %p110 = scmp.ne.s32.totalorder %s96, %s97
    %p111 = scmp.eq.s32.totalorder %s16, 1
    %p112 = por %p110, %p111
    %p114 = scmp.ne.s32.totalorder %s97, %s113
    %p115 = scmp.eq.s32.totalorder %s16, 0
    %p116 = por %p114, %p115
    %p117 = scmp.le.s32.totalorder 1, %s10
    %p118 = scmp.lt.s32.totalorder %s10, 3
    %p119 = pnand %p117, %p118
    %p120 = pneg %p119
    // Predicated region
    $region9: #{down_cmplx_forward.15} parent=5 // pred_check
      _
    $region10: #{down_cmplx_forward.15} parent=5 // pred_check_branch
      %122 = sbr.rel (%p119) target = $region12
    $region11: #{down_cmplx_forward.15} parent=5 // pred_region
      %s123 = ssub.s32 %s10, 1
      // Predicated region
      $region13: #{down_cmplx_forward.15} parent=11 // pred_check
        %p124 = pneg %p57
      $region14: #{down_cmplx_forward.15} parent=11 // pred_check_branch
        %126 = sbr.rel (%p124) target = $region16
      $region15: #{down_cmplx_forward.15} parent=11 // pred_region
        _
      $region16: #{down_cmplx_forward.15} parent=11 // pred_fallthru
        _
    $region12: #{down_cmplx_forward.15} parent=5 // pred_fallthru
      _
    %p127 = scmp.lt.s32.totalorder %s10, 2
    // Predicated region
    $region17: #{down_cmplx_forward.15} parent=5 // pred_check
      %p128 = pneg %p127
    $region18: #{down_cmplx_forward.15} parent=5 // pred_check_branch
      %130 = sbr.rel (%p128) target = $region20
    $region19: #{down_cmplx_forward.15} parent=5 // pred_region
      // Predicated region
      $region21: #{down_cmplx_forward.15} parent=19 // pred_check
        %p131 = pneg %p30
      $region22: #{down_cmplx_forward.15} parent=19 // pred_check_branch
        %133 = sbr.rel (%p131) target = $region24
      $region23: #{down_cmplx_forward.15} parent=19 // pred_region
        %p134 = scmp.lt.s32.totalorder %s10, 1
        %s135 = scalar_select %p134, %s10, 1
        %s136 = smul.addr %s135, 20
        %s137 = smul.addr %s136, 8
        %s138 = scalar_lea.vmem %s0, %s137
      $region24: #{down_cmplx_forward.15} parent=19 // pred_fallthru
        _
    $region20: #{down_cmplx_forward.15} parent=5 // pred_fallthru
      _
    %p139 = scmp.le.s32.totalorder 1, %s10
    %p140 = scmp.lt.s32.totalorder %s10, 3
    %p141 = pnand %p139, %p140
    %p142 = pneg %p141
    // Predicated region
    $region25: #{down_cmplx_forward.15} parent=5 // pred_check
      _
    $region26: #{down_cmplx_forward.15} parent=5 // pred_check_branch
      %144 = sbr.rel (%p141) target = $region28
    $region27: #{down_cmplx_forward.15} parent=5 // pred_region
      %s145 = ssub.s32 %s10, 1
      %p146 = scmp.lt.s32.totalorder %s15, 1
      %s147 = scalar_select %p146, %s15, 1
      %s148 = smul.addr %s147, 20
      %s149 = smul.addr %s148, 8
      %s150 = scalar_lea.vmem %s0, %s149
      %p151 = pneg %p36
      %p152 = pneg %p33
      %p153 = pneg %p57
      %p154 = pneg %p54
      %p155 = pneg %p83
      %p156 = pneg %p80
      %p157 = scmp.lt.s32.totalorder %s15, 1
      %s158 = scalar_select %p157, %s15, 1
      %s159 = smul.addr %s158, 8
      %s160 = smul.addr %s159, 8
      %s161 = scalar_lea.vmem %s2, %s160
      %p162 = pneg %p109
      %p163 = pneg %p106
      %p164 = scmp.lt.s32.totalorder %s15, 1
      %s165 = scalar_select %p164, %s15, 1
      %s166 = scalar_lea.vmem %s3, %s165
      %p167 = scmp.lt.s32.totalorder %s15, 1
      %s168 = scalar_select %p167, %s15, 1
      %s169 = smul.addr %s168, 20
      %s170 = smul.addr %s169, 8
      %s171 = scalar_lea.vmem %s0, %s170
      %p172 = scmp.lt.s32.totalorder %s15, 1
      %s173 = scalar_select %p172, %s15, 1
      %s174 = smul.addr %s173, 8
      %s175 = smul.addr %s174, 8
      %s176 = scalar_lea.vmem %s2, %s175
      %p177 = scmp.lt.s32.totalorder %s15, 1
      %s178 = scalar_select %p177, %s15, 1
      %s179 = scalar_lea.vmem %s3, %s178
      %v181 = vld [vmem:[%s171] sm:$0xff]
      %v182 = vld [vmem:[%s171 + $0x8] sm:$0x3]
      %v183 = vld [vmem:[%s171 + $0x10] sm:$0xff]
      %v184 = vld [vmem:[%s171 + $0x18] sm:$0x3]
      %v185 = vld [vmem:[%s171 + $0x20] sm:$0xff]
      %v186 = vld [vmem:[%s171 + $0x28] sm:$0x3]
      %v187 = vld [vmem:[%s171 + $0x30] sm:$0xff]
      %v188 = vld [vmem:[%s171 + $0x38] sm:$0x3]
      %v189 = vld [vmem:[%s171 + $0x40] sm:$0xff]
      %v190 = vld [vmem:[%s171 + $0x48] sm:$0x3]
      %v191 = vld [vmem:[%s171 + $0x50] sm:$0xff]
      %v192 = vld [vmem:[%s171 + $0x58] sm:$0x3]
      %v193 = vld [vmem:[%s171 + $0x60] sm:$0xff]
      %v194 = vld [vmem:[%s171 + $0x68] sm:$0x3]
      %v195 = vld [vmem:[%s171 + $0x70] sm:$0xff]
      %v196 = vld [vmem:[%s171 + $0x78] sm:$0x3]
      %v197 = vld [vmem:[%s171 + $0x80] sm:$0xff]
      %v198 = vld [vmem:[%s171 + $0x88] sm:$0x3]
      %v199 = vld [vmem:[%s171 + $0x90] sm:$0xff]
      %v200 = vld [vmem:[%s171 + $0x98] sm:$0x3]
      %vm217 = vcmask 1046528
      %v218 = vrot.slane %v181, 1
      %v219 = vrot.slane %v182, 1
      %v220 = vsel %vm217, %v218, %v219
      %v221 = vrot.slane %v183, 1
      %v222 = vrot.slane %v184, 1
      %v223 = vsel %vm217, %v221, %v222
      %v224 = vrot.slane %v185, 1
      %v225 = vrot.slane %v186, 1
      %v226 = vsel %vm217, %v224, %v225
      %v227 = vrot.slane %v187, 1
      %v228 = vrot.slane %v188, 1
      %v229 = vsel %vm217, %v227, %v228
      %v230 = vrot.slane %v189, 1
      %v231 = vrot.slane %v190, 1
      %v232 = vsel %vm217, %v230, %v231
      %v233 = vrot.slane %v191, 1
      %v234 = vrot.slane %v192, 1
      %v235 = vsel %vm217, %v233, %v234
      %v236 = vrot.slane %v193, 1
      %v237 = vrot.slane %v194, 1
      %v238 = vsel %vm217, %v236, %v237
      %v239 = vrot.slane %v195, 1
      %v240 = vrot.slane %v196, 1
      %v241 = vsel %vm217, %v239, %v240
      %242 = vrot.lane.b32.xlu0 %v220, 16
      %v243 = vpop.permute.xlu0 %242
      %244 = vrot.lane.b32.xlu0 %v223, 16
      %v245 = vpop.permute.xlu0 %244
      %246 = vrot.lane.b32.xlu0 %v226, 16
      %v247 = vpop.permute.xlu0 %246
      %248 = vrot.lane.b32.xlu0 %v229, 16
      %v249 = vpop.permute.xlu0 %248
      %250 = vrot.lane.b32.xlu0 %v232, 16
      %v251 = vpop.permute.xlu0 %250
      %252 = vrot.lane.b32.xlu0 %v235, 16
      %v253 = vpop.permute.xlu0 %252
      %254 = vrot.lane.b32.xlu0 %v238, 16
      %v255 = vpop.permute.xlu0 %254
      %256 = vrot.lane.b32.xlu0 %v241, 16
      %v257 = vpop.permute.xlu0 %256
      %vm266 = vcmask 1045504
      %v267 = vrot.slane %v181, 2
      %v268 = vrot.slane %v182, 2
      %v269 = vsel %vm266, %v267, %v268
      %v270 = vrot.slane %v183, 2
      %v271 = vrot.slane %v184, 2
      %v272 = vsel %vm266, %v270, %v271
      %v273 = vrot.slane %v185, 2
      %v274 = vrot.slane %v186, 2
      %v275 = vsel %vm266, %v273, %v274
      %v276 = vrot.slane %v187, 2
      %v277 = vrot.slane %v188, 2
      %v278 = vsel %vm266, %v276, %v277
      %v279 = vrot.slane %v189, 2
      %v280 = vrot.slane %v190, 2
      %v281 = vsel %vm266, %v279, %v280
      %v282 = vrot.slane %v191, 2
      %v283 = vrot.slane %v192, 2
      %v284 = vsel %vm266, %v282, %v283
      %v285 = vrot.slane %v193, 2
      %v286 = vrot.slane %v194, 2
      %v287 = vsel %vm266, %v285, %v286
      %v288 = vrot.slane %v195, 2
      %v289 = vrot.slane %v196, 2
      %v290 = vsel %vm266, %v288, %v289
      %291 = vrot.lane.b32.xlu0 %v269, 32
      %v292 = vpop.permute.xlu0 %291
      %293 = vrot.lane.b32.xlu0 %v272, 32
      %v294 = vpop.permute.xlu0 %293
      %295 = vrot.lane.b32.xlu0 %v275, 32
      %v296 = vpop.permute.xlu0 %295
      %297 = vrot.lane.b32.xlu0 %v278, 32
      %v298 = vpop.permute.xlu0 %297
      %299 = vrot.lane.b32.xlu0 %v281, 32
      %v300 = vpop.permute.xlu0 %299
      %301 = vrot.lane.b32.xlu0 %v284, 32
      %v302 = vpop.permute.xlu0 %301
      %303 = vrot.lane.b32.xlu0 %v287, 32
      %v304 = vpop.permute.xlu0 %303
      %305 = vrot.lane.b32.xlu0 %v290, 32
      %v306 = vpop.permute.xlu0 %305
      %316 = vrot.lane.b32.xlu0 %v183, 48
      %v317 = vpop.permute.xlu0 %316
      %318 = vrot.lane.b32.xlu0 %v185, 48
      %v319 = vpop.permute.xlu0 %318
      %320 = vrot.lane.b32.xlu0 %v187, 48
      %v321 = vpop.permute.xlu0 %320
      %322 = vrot.lane.b32.xlu0 %v189, 48
      %v323 = vpop.permute.xlu0 %322
      %324 = vrot.lane.b32.xlu0 %v191, 48
      %v325 = vpop.permute.xlu0 %324
      %326 = vrot.lane.b32.xlu0 %v193, 48
      %v327 = vpop.permute.xlu0 %326
      %328 = vrot.lane.b32.xlu0 %v195, 48
      %v329 = vpop.permute.xlu0 %328
      %330 = vrot.lane.b32.xlu0 %v197, 48
      %v331 = vpop.permute.xlu0 %330
      %v341 = vrot.slane %v197, 1
      %v342 = vrot.slane %v198, 1
      %v343 = vsel %vm217, %v341, %v342
      %344 = vrot.lane.b32.xlu0 %v223, 64
      %v345 = vpop.permute.xlu0 %344
      %346 = vrot.lane.b32.xlu0 %v226, 64
      %v347 = vpop.permute.xlu0 %346
      %348 = vrot.lane.b32.xlu0 %v229, 64
      %v349 = vpop.permute.xlu0 %348
      %350 = vrot.lane.b32.xlu0 %v232, 64
      %v351 = vpop.permute.xlu0 %350
      %352 = vrot.lane.b32.xlu0 %v235, 64
      %v353 = vpop.permute.xlu0 %352
      %354 = vrot.lane.b32.xlu0 %v238, 64
      %v355 = vpop.permute.xlu0 %354
      %356 = vrot.lane.b32.xlu0 %v241, 64
      %v357 = vpop.permute.xlu0 %356
      %358 = vrot.lane.b32.xlu0 %v343, 64
      %v359 = vpop.permute.xlu0 %358
      %v368 = vrot.slane %v197, 2
      %v369 = vrot.slane %v198, 2
      %v370 = vsel %vm266, %v368, %v369
      %371 = vrot.lane.b32.xlu0 %v272, 80
      %v372 = vpop.permute.xlu0 %371
      %373 = vrot.lane.b32.xlu0 %v275, 80
      %v374 = vpop.permute.xlu0 %373
      %375 = vrot.lane.b32.xlu0 %v278, 80
      %v376 = vpop.permute.xlu0 %375
      %377 = vrot.lane.b32.xlu0 %v281, 80
      %v378 = vpop.permute.xlu0 %377
      %379 = vrot.lane.b32.xlu0 %v284, 80
      %v380 = vpop.permute.xlu0 %379
      %381 = vrot.lane.b32.xlu0 %v287, 80
      %v382 = vpop.permute.xlu0 %381
      %383 = vrot.lane.b32.xlu0 %v290, 80
      %v384 = vpop.permute.xlu0 %383
      %385 = vrot.lane.b32.xlu0 %v370, 80
      %v386 = vpop.permute.xlu0 %385
      %396 = vrot.lane.b32.xlu0 %v185, 96
      %v397 = vpop.permute.xlu0 %396
      %398 = vrot.lane.b32.xlu0 %v187, 96
      %v399 = vpop.permute.xlu0 %398
      %400 = vrot.lane.b32.xlu0 %v189, 96
      %v401 = vpop.permute.xlu0 %400
      %402 = vrot.lane.b32.xlu0 %v191, 96
      %v403 = vpop.permute.xlu0 %402
      %404 = vrot.lane.b32.xlu0 %v193, 96
      %v405 = vpop.permute.xlu0 %404
      %406 = vrot.lane.b32.xlu0 %v195, 96
      %v407 = vpop.permute.xlu0 %406
      %408 = vrot.lane.b32.xlu0 %v197, 96
      %v409 = vpop.permute.xlu0 %408
      %410 = vrot.lane.b32.xlu0 %v199, 96
      %v411 = vpop.permute.xlu0 %410
      %v421 = vrot.slane %v199, 1
      %v422 = vrot.slane %v200, 1
      %v423 = vsel %vm217, %v421, %v422
      %424 = vrot.lane.b32.xlu0 %v226, 112
      %v425 = vpop.permute.xlu0 %424
      %426 = vrot.lane.b32.xlu0 %v229, 112
      %v427 = vpop.permute.xlu0 %426
      %428 = vrot.lane.b32.xlu0 %v232, 112
      %v429 = vpop.permute.xlu0 %428
      %430 = vrot.lane.b32.xlu0 %v235, 112
      %v431 = vpop.permute.xlu0 %430
      %432 = vrot.lane.b32.xlu0 %v238, 112
      %v433 = vpop.permute.xlu0 %432
      %434 = vrot.lane.b32.xlu0 %v241, 112
      %v435 = vpop.permute.xlu0 %434
      %436 = vrot.lane.b32.xlu0 %v343, 112
      %v437 = vpop.permute.xlu0 %436
      %438 = vrot.lane.b32.xlu0 %v423, 112
      %v439 = vpop.permute.xlu0 %438
      %v448 = vrot.slane %v199, 2
      %v449 = vrot.slane %v200, 2
      %v450 = vsel %vm266, %v448, %v449
      %vm459 = vcmask 130048
      %v460 = vsel %vm459, %v181, %v243
      %v461 = vsel %vm459, %v183, %v245
      %v462 = vsel %vm459, %v185, %v247
      %v463 = vsel %vm459, %v187, %v249
      %v464 = vsel %vm459, %v189, %v251
      %v465 = vsel %vm459, %v191, %v253
      %v466 = vsel %vm459, %v193, %v255
      %v467 = vsel %vm459, %v195, %v257
      %vm468 = vcmask 261120
      %v469 = vsel %vm468, %v460, %v292
      %v470 = vsel %vm468, %v461, %v294
      %v471 = vsel %vm468, %v462, %v296
      %v472 = vsel %vm468, %v463, %v298
      %v473 = vsel %vm468, %v464, %v300
      %v474 = vsel %vm468, %v465, %v302
      %v475 = vsel %vm468, %v466, %v304
      %v476 = vsel %vm468, %v467, %v306
      %vm477 = vcmask 392192
      %v478 = vsel %vm477, %v469, %v317
      %v479 = vsel %vm477, %v470, %v319
      %v480 = vsel %vm477, %v471, %v321
      %v481 = vsel %vm477, %v472, %v323
      %v482 = vsel %vm477, %v473, %v325
      %v483 = vsel %vm477, %v474, %v327
      %v484 = vsel %vm477, %v475, %v329
      %v485 = vsel %vm477, %v476, %v331
      %vm486 = vcmask 523264
      %v487 = vsel %vm486, %v478, %v345
      %v488 = vsel %vm486, %v479, %v347
      %v489 = vsel %vm486, %v480, %v349
      %v490 = vsel %vm486, %v481, %v351
      %v491 = vsel %vm486, %v482, %v353
      %v492 = vsel %vm486, %v483, %v355
      %v493 = vsel %vm486, %v484, %v357
      %v494 = vsel %vm486, %v485, %v359
      %vm495 = vcmask 654336
      %v496 = vsel %vm495, %v487, %v372
      %v497 = vsel %vm495, %v488, %v374
      %v498 = vsel %vm495, %v489, %v376
      %v499 = vsel %vm495, %v490, %v378
      %v500 = vsel %vm495, %v491, %v380
      %v501 = vsel %vm495, %v492, %v382
      %v502 = vsel %vm495, %v493, %v384
      %v503 = vsel %vm495, %v494, %v386
      %vm504 = vcmask 785408
      %v505 = vsel %vm504, %v496, %v397
      %v506 = vsel %vm504, %v497, %v399
      %v507 = vsel %vm504, %v498, %v401
      %v508 = vsel %vm504, %v499, %v403
      %v509 = vsel %vm504, %v500, %v405
      %v510 = vsel %vm504, %v501, %v407
      %v511 = vsel %vm504, %v502, %v409
      %v512 = vsel %vm504, %v503, %v411
      %vm513 = vcmask 916480
      %v514 = vsel %vm513, %v505, %v425
      %v515 = vsel %vm513, %v506, %v427
      %v516 = vsel %vm513, %v507, %v429
      %v517 = vsel %vm513, %v508, %v431
      %v518 = vsel %vm513, %v509, %v433
      %v519 = vsel %vm513, %v510, %v435
      %v520 = vsel %vm513, %v511, %v437
      %v521 = vsel %vm513, %v512, %v439
      %v522 = vpack.c.bf16 %v515, %v514
      %v523 = vpack.c.bf16 %v278, %v275
      %v524 = vpack.c.bf16 %v517, %v516
      %v525 = vpack.c.bf16 %v284, %v281
      %v526 = vpack.c.bf16 %v519, %v518
      %v527 = vpack.c.bf16 %v290, %v287
      %v528 = vpack.c.bf16 %v521, %v520
      %v529 = vpack.c.bf16 %v450, %v370
      %v530 = vld [vmem:[%s1] sm:$0xf]
      %v531 = vld [vmem:[%s1 + $0x4] sm:$0xf]
      %v532 = vld [vmem:[%s1 + $0x8] sm:$0xf]
      %v533 = vld [vmem:[%s1 + $0xc] sm:$0xf]
      %v534 = vld [vmem:[%s1 + $0x10] sm:$0xf]
      %v535 = vld [vmem:[%s1 + $0x14] sm:$0xf]
      %v536 = vld [vmem:[%s1 + $0x18] sm:$0xf]
      %v537 = vld [vmem:[%s1 + $0x1c] sm:$0xf]
      %v538 = vld [vmem:[%s1 + $0x20] sm:$0xf]
      %v539 = vld [vmem:[%s1 + $0x24] sm:$0xf]
      %v540 = vld [vmem:[%s1 + $0x28] sm:$0xf]
      %v541 = vld [vmem:[%s1 + $0x2c] sm:$0xf]
      %v542 = vld [vmem:[%s1 + $0x30] sm:$0xf]
      %v543 = vld [vmem:[%s1 + $0x34] sm:$0xf]
      %v544 = vld [vmem:[%s1 + $0x38] sm:$0xf]
      %v545 = vld [vmem:[%s1 + $0x3c] sm:$0xf]
      %v546 = vld [vmem:[%s1 + $0x40] sm:$0xf]
      %v547 = vld [vmem:[%s1 + $0x44] sm:$0xf]
      %v566 = vunpack.c.l.b16 %v530
      %v567 = vunpack.c.l.b16 %v531
      %v568 = vunpack.c.l.b16 %v532
      %v569 = vunpack.c.l.b16 %v533
      %v570 = vunpack.c.l.b16 %v534
      %v571 = vunpack.c.l.b16 %v535
      %v572 = vunpack.c.l.b16 %v536
      %v573 = vunpack.c.l.b16 %v537
      %v574 = vunpack.c.l.b16 %v538
      %v575 = vunpack.c.l.b16 %v539
      %v576 = vunpack.c.l.b16 %v540
      %v577 = vunpack.c.l.b16 %v541
      %v578 = vunpack.c.l.b16 %v542
      %v579 = vunpack.c.l.b16 %v543
      %v580 = vunpack.c.l.b16 %v544
      %v581 = vunpack.c.l.b16 %v545
      %v582 = vunpack.c.l.b16 %v546
      %v583 = vunpack.c.l.b16 %v547
      %v584 = vpack.c.b16 %v567, %v566
      %v585 = vpack.c.b16 %v569, %v568
      %v586 = vpack.c.b16 %v571, %v570
      %v587 = vpack.c.b16 %v573, %v572
      %v588 = vpack.c.b16 %v575, %v574
      %v589 = vpack.c.b16 %v577, %v576
      %v590 = vpack.c.b16 %v579, %v578
      %v591 = vpack.c.b16 %v581, %v580
      %v592 = vpack.c.b16 %v583, %v582
      %v603 = vsel %vm459, %v523, 0
      %v606 = vsel %vm459, %v525, 0
      %v609 = vsel %vm459, %v527, 0
      %v612 = vsel %vm459, %v529, 0
      %614 = vmatprep.subr.bf16.mxu0 0
      %615 = vmatpush1.bf16.msra.mxu0 %v591
      %616 = vmatprep.subr.bf16.mxu0 0
      %617 = vmatpush1.bf16.msra.mxu0 %v590
      %618 = vmatprep.subr.bf16.mxu0 0
      %619 = vmatpush1.bf16.msra.mxu0 %v589
      %620 = vmatprep.subr.bf16.mxu0 0
      %621 = vmatpush1.bf16.msra.mxu0 %v588
      %622 = vmatprep.subr.bf16.mxu0 0
      %623 = vmatpush1.bf16.msra.mxu0 %v587
      %624 = vmatprep.subr.bf16.mxu0 0
      %625 = vmatpush1.bf16.msra.mxu0 %v586
      %626 = vmatprep.subr.bf16.mxu0 0
      %627 = vmatpush1.bf16.msra.mxu0 %v585
      %628 = vmatprep.subr.bf16.mxu0 0
      %629 = vmatpush1.bf16.msra.mxu0 %v584
      %630 = vmatprep.subr.bf16.mxu0 0
      %631 = vmatpush2.bf16.msra.mxu0 0
      %632 = vmatprep.subr.bf16.mxu0 0
      %633 = vmatpush2.bf16.msra.mxu0 0
      %634 = vmatprep.subr.bf16.mxu0 0
      %635 = vmatpush2.bf16.msra.mxu0 0
      %636 = vmatprep.subr.bf16.mxu0 0
      %637 = vmatpush2.bf16.msra.mxu0 0
      %638 = vmatprep.subr.bf16.mxu0 0
      %639 = vmatpush2.bf16.msra.mxu0 0
      %640 = vmatprep.subr.bf16.mxu0 0
      %641 = vmatpush2.bf16.msra.mxu0 0
      %642 = vmatprep.subr.bf16.mxu0 0
      %643 = vmatpush2.bf16.msra.mxu0 0
      %644 = vmatprep.subr.bf16.mxu0 0
      %645 = vmatpush2.bf16.msra.mxu0 %v592
      %646 = vmatprep.mubr.bf16.mxu0 %v603
      %647 = vmatmul.mubr.bf16.gmra.mxu0 %v522
      %v648 = vpop.f32.mrf.mxu0
      %v649 = vadd.f32 0.0, %v648
      %v650 = vpop.f32.mrf.mxu0
      %v651 = vpop.f32.mrf.mxu0
      %v652 = vadd.f32 0.0, %v651
      %v653 = vpop.f32.mrf.mxu0
      %654 = vmatprep.mubr.bf16.mxu0 %v606
      %655 = vmatmul.mubr.bf16.gmra.mxu0 %v524
      %v656 = vpop.f32.mrf.mxu0
      %v657 = vadd.f32 0.0, %v656
      %v658 = vpop.f32.mrf.mxu0
      %v659 = vpop.f32.mrf.mxu0
      %v660 = vadd.f32 0.0, %v659
      %v661 = vpop.f32.mrf.mxu0
      %662 = vmatprep.mubr.bf16.mxu0 %v609
      %663 = vmatmul.mubr.bf16.gmra.mxu0 %v526
      %v664 = vpop.f32.mrf.mxu0
      %v665 = vadd.f32 0.0, %v664
      %v666 = vpop.f32.mrf.mxu0
      %v667 = vpop.f32.mrf.mxu0
      %v668 = vadd.f32 0.0, %v667
      %v669 = vpop.f32.mrf.mxu0
      %670 = vmatprep.mubr.bf16.mxu0 %v612
      %671 = vmatmul.mubr.bf16.gmra.mxu0 %v528
      %v672 = vpop.f32.mrf.mxu0
      %v673 = vadd.f32 0.0, %v672
      %v674 = vpop.f32.mrf.mxu0
      %v675 = vpop.f32.mrf.mxu0
      %v676 = vadd.f32 0.0, %v675
      %v677 = vpop.f32.mrf.mxu0
      %678 = vdwg.mxu0
      %v679 = vmul.f32 %v649, %v649
      %v680 = vmul.f32 %v652, %v652
      %v681 = vmul.f32 %v657, %v657
      %v682 = vmul.f32 %v660, %v660
      %v683 = vmul.f32 %v665, %v665
      %v684 = vmul.f32 %v668, %v668
      %v685 = vmul.f32 %v673, %v673
      %v686 = vmul.f32 %v676, %v676
      %695 = vrot.lane.b32.xlu0 %v679, 120
      %v696 = vpop.permute.xlu0 %695
      %697 = vrot.lane.b32.xlu0 %v680, 120
      %v698 = vpop.permute.xlu0 %697
      %699 = vrot.lane.b32.xlu0 %v681, 120
      %v700 = vpop.permute.xlu0 %699
      %701 = vrot.lane.b32.xlu0 %v682, 120
      %v702 = vpop.permute.xlu0 %701
      %703 = vrot.lane.b32.xlu0 %v683, 120
      %v704 = vpop.permute.xlu0 %703
      %705 = vrot.lane.b32.xlu0 %v684, 120
      %v706 = vpop.permute.xlu0 %705
      %707 = vrot.lane.b32.xlu0 %v685, 120
      %v708 = vpop.permute.xlu0 %707
      %709 = vrot.lane.b32.xlu0 %v686, 120
      %v710 = vpop.permute.xlu0 %709
      %v719 = vadd.f32 %v679, %v696
      %v720 = vadd.f32 %v680, %v698
      %v721 = vadd.f32 %v681, %v700
      %v722 = vadd.f32 %v682, %v702
      %v723 = vadd.f32 %v683, %v704
      %v724 = vadd.f32 %v684, %v706
      %v725 = vadd.f32 %v685, %v708
      %v726 = vadd.f32 %v686, %v710
      %735 = vrot.lane.b32.xlu0 %v719, 16
      %v736 = vpop.permute.xlu0 %735
      %737 = vrot.lane.b32.xlu0 %v720, 16
      %v738 = vpop.permute.xlu0 %737
      %739 = vrot.lane.b32.xlu0 %v721, 16
      %v740 = vpop.permute.xlu0 %739
      %741 = vrot.lane.b32.xlu0 %v722, 16
      %v742 = vpop.permute.xlu0 %741
      %743 = vrot.lane.b32.xlu0 %v723, 16
      %v744 = vpop.permute.xlu0 %743
      %745 = vrot.lane.b32.xlu0 %v724, 16
      %v746 = vpop.permute.xlu0 %745
      %747 = vrot.lane.b32.xlu0 %v725, 16
      %v748 = vpop.permute.xlu0 %747
      %749 = vrot.lane.b32.xlu0 %v726, 16
      %v750 = vpop.permute.xlu0 %749
      %vm759 = vcmp.gt.f32.partialorder %v719, %v736
      %vm760 = vcmp.gt.f32.partialorder %v720, %v738
      %vm761 = vcmp.gt.f32.partialorder %v721, %v740
      %vm762 = vcmp.gt.f32.partialorder %v722, %v742
      %vm763 = vcmp.gt.f32.partialorder %v723, %v744
      %vm764 = vcmp.gt.f32.partialorder %v724, %v746
      %vm765 = vcmp.gt.f32.partialorder %v725, %v748
      %vm766 = vcmp.gt.f32.partialorder %v726, %v750
      %775 = vrot.lane.b32.xlu0 %v649, 16
      %v776 = vpop.permute.xlu0 %775
      %777 = vrot.lane.b32.xlu0 %v652, 16
      %v778 = vpop.permute.xlu0 %777
      %779 = vrot.lane.b32.xlu0 %v657, 16
      %v780 = vpop.permute.xlu0 %779
      %781 = vrot.lane.b32.xlu0 %v660, 16
      %v782 = vpop.permute.xlu0 %781
      %783 = vrot.lane.b32.xlu0 %v665, 16
      %v784 = vpop.permute.xlu0 %783
      %785 = vrot.lane.b32.xlu0 %v668, 16
      %v786 = vpop.permute.xlu0 %785
      %787 = vrot.lane.b32.xlu0 %v673, 16
      %v788 = vpop.permute.xlu0 %787
      %789 = vrot.lane.b32.xlu0 %v676, 16
      %v790 = vpop.permute.xlu0 %789
      %v799 = vsel %vm759, %v649, %v776
      %v800 = vsel %vm760, %v652, %v778
      %v801 = vsel %vm761, %v657, %v780
      %v802 = vsel %vm762, %v660, %v782
      %v803 = vsel %vm763, %v665, %v784
      %v804 = vsel %vm764, %v668, %v786
      %v805 = vsel %vm765, %v673, %v788
      %v806 = vsel %vm766, %v676, %v790
      %807 = vrot.lane.b32.xlu0 %v649, 120
      %v808 = vpop.permute.xlu0 %807
      %809 = vrot.lane.b32.xlu0 %v652, 120
      %v810 = vpop.permute.xlu0 %809
      %811 = vrot.lane.b32.xlu0 %v657, 120
      %v812 = vpop.permute.xlu0 %811
      %813 = vrot.lane.b32.xlu0 %v660, 120
      %v814 = vpop.permute.xlu0 %813
      %815 = vrot.lane.b32.xlu0 %v665, 120
      %v816 = vpop.permute.xlu0 %815
      %817 = vrot.lane.b32.xlu0 %v668, 120
      %v818 = vpop.permute.xlu0 %817
      %819 = vrot.lane.b32.xlu0 %v673, 120
      %v820 = vpop.permute.xlu0 %819
      %821 = vrot.lane.b32.xlu0 %v676, 120
      %v822 = vpop.permute.xlu0 %821
      %831 = vrot.lane.b32.xlu0 %v649, 8
      %v832 = vpop.permute.xlu0 %831
      %833 = vrot.lane.b32.xlu0 %v652, 8
      %v834 = vpop.permute.xlu0 %833
      %835 = vrot.lane.b32.xlu0 %v657, 8
      %v836 = vpop.permute.xlu0 %835
      %837 = vrot.lane.b32.xlu0 %v660, 8
      %v838 = vpop.permute.xlu0 %837
      %839 = vrot.lane.b32.xlu0 %v665, 8
      %v840 = vpop.permute.xlu0 %839
      %841 = vrot.lane.b32.xlu0 %v668, 8
      %v842 = vpop.permute.xlu0 %841
      %843 = vrot.lane.b32.xlu0 %v673, 8
      %v844 = vpop.permute.xlu0 %843
      %845 = vrot.lane.b32.xlu0 %v676, 8
      %v846 = vpop.permute.xlu0 %845
      %v855 = vsel %vm759, %v808, %v832
      %v856 = vsel %vm760, %v810, %v834
      %v857 = vsel %vm761, %v812, %v836
      %v858 = vsel %vm762, %v814, %v838
      %v859 = vsel %vm763, %v816, %v840
      %v860 = vsel %vm764, %v818, %v842
      %v861 = vsel %vm765, %v820, %v844
      %v862 = vsel %vm766, %v822, %v846
      %v863 = vsel %vm759, %v719, %v736
      %v864 = vsel %vm760, %v720, %v738
      %v865 = vsel %vm761, %v721, %v740
      %v866 = vsel %vm762, %v722, %v742
      %v867 = vsel %vm763, %v723, %v744
      %v868 = vsel %vm764, %v724, %v746
      %v869 = vsel %vm765, %v725, %v748
      %v870 = vsel %vm766, %v726, %v750
      %879 = vrot.lane.b32.xlu0 %v863, 16
      %v880 = vpop.permute.xlu0 %879
      %881 = vrot.lane.b32.xlu0 %v864, 16
      %v882 = vpop.permute.xlu0 %881
      %883 = vrot.lane.b32.xlu0 %v865, 16
      %v884 = vpop.permute.xlu0 %883
      %885 = vrot.lane.b32.xlu0 %v866, 16
      %v886 = vpop.permute.xlu0 %885
      %887 = vrot.lane.b32.xlu0 %v867, 16
      %v888 = vpop.permute.xlu0 %887
      %889 = vrot.lane.b32.xlu0 %v868, 16
      %v890 = vpop.permute.xlu0 %889
      %891 = vrot.lane.b32.xlu0 %v869, 16
      %v892 = vpop.permute.xlu0 %891
      %893 = vrot.lane.b32.xlu0 %v870, 16
      %v894 = vpop.permute.xlu0 %893
      %vm903 = vcmp.gt.f32.partialorder %v719, %v880
      %vm904 = vcmp.gt.f32.partialorder %v720, %v882
      %vm905 = vcmp.gt.f32.partialorder %v721, %v884
      %vm906 = vcmp.gt.f32.partialorder %v722, %v886
      %vm907 = vcmp.gt.f32.partialorder %v723, %v888
      %vm908 = vcmp.gt.f32.partialorder %v724, %v890
      %vm909 = vcmp.gt.f32.partialorder %v725, %v892
      %vm910 = vcmp.gt.f32.partialorder %v726, %v894
      %919 = vrot.lane.b32.xlu0 %v799, 16
      %v920 = vpop.permute.xlu0 %919
      %921 = vrot.lane.b32.xlu0 %v800, 16
      %v922 = vpop.permute.xlu0 %921
      %923 = vrot.lane.b32.xlu0 %v801, 16
      %v924 = vpop.permute.xlu0 %923
      %925 = vrot.lane.b32.xlu0 %v802, 16
      %v926 = vpop.permute.xlu0 %925
      %927 = vrot.lane.b32.xlu0 %v803, 16
      %v928 = vpop.permute.xlu0 %927
      %929 = vrot.lane.b32.xlu0 %v804, 16
      %v930 = vpop.permute.xlu0 %929
      %931 = vrot.lane.b32.xlu0 %v805, 16
      %v932 = vpop.permute.xlu0 %931
      %933 = vrot.lane.b32.xlu0 %v806, 16
      %v934 = vpop.permute.xlu0 %933
      %v943 = vsel %vm903, %v649, %v920
      %v944 = vsel %vm904, %v652, %v922
      %v945 = vsel %vm905, %v657, %v924
      %v946 = vsel %vm906, %v660, %v926
      %v947 = vsel %vm907, %v665, %v928
      %v948 = vsel %vm908, %v668, %v930
      %v949 = vsel %vm909, %v673, %v932
      %v950 = vsel %vm910, %v676, %v934
      %959 = vrot.lane.b32.xlu0 %v855, 16
      %v960 = vpop.permute.xlu0 %959
      %961 = vrot.lane.b32.xlu0 %v856, 16
      %v962 = vpop.permute.xlu0 %961
      %963 = vrot.lane.b32.xlu0 %v857, 16
      %v964 = vpop.permute.xlu0 %963
      %965 = vrot.lane.b32.xlu0 %v858, 16
      %v966 = vpop.permute.xlu0 %965
      %967 = vrot.lane.b32.xlu0 %v859, 16
      %v968 = vpop.permute.xlu0 %967
      %969 = vrot.lane.b32.xlu0 %v860, 16
      %v970 = vpop.permute.xlu0 %969
      %971 = vrot.lane.b32.xlu0 %v861, 16
      %v972 = vpop.permute.xlu0 %971
      %973 = vrot.lane.b32.xlu0 %v862, 16
      %v974 = vpop.permute.xlu0 %973
      %v983 = vsel %vm903, %v808, %v960
      %v984 = vsel %vm904, %v810, %v962
      %v985 = vsel %vm905, %v812, %v964
      %v986 = vsel %vm906, %v814, %v966
      %v987 = vsel %vm907, %v816, %v968
      %v988 = vsel %vm908, %v818, %v970
      %v989 = vsel %vm909, %v820, %v972
      %v990 = vsel %vm910, %v822, %v974
      %v991 = vsel %vm903, %v719, %v880
      %v992 = vsel %vm904, %v720, %v882
      %v993 = vsel %vm905, %v721, %v884
      %v994 = vsel %vm906, %v722, %v886
      %v995 = vsel %vm907, %v723, %v888
      %v996 = vsel %vm908, %v724, %v890
      %v997 = vsel %vm909, %v725, %v892
      %v998 = vsel %vm910, %v726, %v894
      %1007 = vrot.lane.b32.xlu0 %v991, 16
      %v1008 = vpop.permute.xlu0 %1007
      %1009 = vrot.lane.b32.xlu0 %v992, 16
      %v1010 = vpop.permute.xlu0 %1009
      %1011 = vrot.lane.b32.xlu0 %v993, 16
      %v1012 = vpop.permute.xlu0 %1011
      %1013 = vrot.lane.b32.xlu0 %v994, 16
      %v1014 = vpop.permute.xlu0 %1013
      %1015 = vrot.lane.b32.xlu0 %v995, 16
      %v1016 = vpop.permute.xlu0 %1015
      %1017 = vrot.lane.b32.xlu0 %v996, 16
      %v1018 = vpop.permute.xlu0 %1017
      %1019 = vrot.lane.b32.xlu0 %v997, 16
      %v1020 = vpop.permute.xlu0 %1019
      %1021 = vrot.lane.b32.xlu0 %v998, 16
      %v1022 = vpop.permute.xlu0 %1021
      %vm1031 = vcmp.gt.f32.partialorder %v719, %v1008
      %vm1032 = vcmp.gt.f32.partialorder %v720, %v1010
      %vm1033 = vcmp.gt.f32.partialorder %v721, %v1012
      %vm1034 = vcmp.gt.f32.partialorder %v722, %v1014
      %vm1035 = vcmp.gt.f32.partialorder %v723, %v1016
      %vm1036 = vcmp.gt.f32.partialorder %v724, %v1018
      %vm1037 = vcmp.gt.f32.partialorder %v725, %v1020
      %vm1038 = vcmp.gt.f32.partialorder %v726, %v1022
      %1047 = vrot.lane.b32.xlu0 %v943, 16
      %v1048 = vpop.permute.xlu0 %1047
      %1049 = vrot.lane.b32.xlu0 %v944, 16
      %v1050 = vpop.permute.xlu0 %1049
      %1051 = vrot.lane.b32.xlu0 %v945, 16
      %v1052 = vpop.permute.xlu0 %1051
      %1053 = vrot.lane.b32.xlu0 %v946, 16
      %v1054 = vpop.permute.xlu0 %1053
      %1055 = vrot.lane.b32.xlu0 %v947, 16
      %v1056 = vpop.permute.xlu0 %1055
      %1057 = vrot.lane.b32.xlu0 %v948, 16
      %v1058 = vpop.permute.xlu0 %1057
      %1059 = vrot.lane.b32.xlu0 %v949, 16
      %v1060 = vpop.permute.xlu0 %1059
      %1061 = vrot.lane.b32.xlu0 %v950, 16
      %v1062 = vpop.permute.xlu0 %1061
      %v1071 = vsel %vm1031, %v649, %v1048
      %v1072 = vsel %vm1032, %v652, %v1050
      %v1073 = vsel %vm1033, %v657, %v1052
      %v1074 = vsel %vm1034, %v660, %v1054
      %v1075 = vsel %vm1035, %v665, %v1056
      %v1076 = vsel %vm1036, %v668, %v1058
      %v1077 = vsel %vm1037, %v673, %v1060
      %v1078 = vsel %vm1038, %v676, %v1062
      %1087 = vrot.lane.b32.xlu0 %v983, 16
      %v1088 = vpop.permute.xlu0 %1087
      %1089 = vrot.lane.b32.xlu0 %v984, 16
      %v1090 = vpop.permute.xlu0 %1089
      %1091 = vrot.lane.b32.xlu0 %v985, 16
      %v1092 = vpop.permute.xlu0 %1091
      %1093 = vrot.lane.b32.xlu0 %v986, 16
      %v1094 = vpop.permute.xlu0 %1093
      %1095 = vrot.lane.b32.xlu0 %v987, 16
      %v1096 = vpop.permute.xlu0 %1095
      %1097 = vrot.lane.b32.xlu0 %v988, 16
      %v1098 = vpop.permute.xlu0 %1097
      %1099 = vrot.lane.b32.xlu0 %v989, 16
      %v1100 = vpop.permute.xlu0 %1099
      %1101 = vrot.lane.b32.xlu0 %v990, 16
      %v1102 = vpop.permute.xlu0 %1101
      %v1111 = vsel %vm1031, %v808, %v1088
      %v1112 = vsel %vm1032, %v810, %v1090
      %v1113 = vsel %vm1033, %v812, %v1092
      %v1114 = vsel %vm1034, %v814, %v1094
      %v1115 = vsel %vm1035, %v816, %v1096
      %v1116 = vsel %vm1036, %v818, %v1098
      %v1117 = vsel %vm1037, %v820, %v1100
      %v1118 = vsel %vm1038, %v822, %v1102
      %1127 = vrot.lane.b32.xlu0 %v1071, 80
      %v1128 = vpop.permute.xlu0 %1127
      %1129 = vrot.lane.b32.xlu0 %v1072, 80
      %v1130 = vpop.permute.xlu0 %1129
      %1131 = vrot.lane.b32.xlu0 %v1073, 80
      %v1132 = vpop.permute.xlu0 %1131
      %1133 = vrot.lane.b32.xlu0 %v1074, 80
      %v1134 = vpop.permute.xlu0 %1133
      %1135 = vrot.lane.b32.xlu0 %v1075, 80
      %v1136 = vpop.permute.xlu0 %1135
      %1137 = vrot.lane.b32.xlu0 %v1076, 80
      %v1138 = vpop.permute.xlu0 %1137
      %1139 = vrot.lane.b32.xlu0 %v1077, 80
      %v1140 = vpop.permute.xlu0 %1139
      %1141 = vrot.lane.b32.xlu0 %v1078, 80
      %v1142 = vpop.permute.xlu0 %1141
      %1159 = vrot.lane.b32.xlu0 %v1111, 88
      %v1160 = vpop.permute.xlu0 %1159
      %1161 = vrot.lane.b32.xlu0 %v1112, 88
      %v1162 = vpop.permute.xlu0 %1161
      %1163 = vrot.lane.b32.xlu0 %v1113, 88
      %v1164 = vpop.permute.xlu0 %1163
      %1165 = vrot.lane.b32.xlu0 %v1114, 88
      %v1166 = vpop.permute.xlu0 %1165
      %1167 = vrot.lane.b32.xlu0 %v1115, 88
      %v1168 = vpop.permute.xlu0 %1167
      %1169 = vrot.lane.b32.xlu0 %v1116, 88
      %v1170 = vpop.permute.xlu0 %1169
      %1171 = vrot.lane.b32.xlu0 %v1117, 88
      %v1172 = vpop.permute.xlu0 %1171
      %1173 = vrot.lane.b32.xlu0 %v1118, 88
      %v1174 = vpop.permute.xlu0 %1173
      %vm1183 = vcmask 64512
      %v1184 = vsel %vm1183, %v1128, %v1160
      %v1185 = vsel %vm1183, %v1130, %v1162
      %v1186 = vsel %vm1183, %v1132, %v1164
      %v1187 = vsel %vm1183, %v1134, %v1166
      %v1188 = vsel %vm1183, %v1136, %v1168
      %v1189 = vsel %vm1183, %v1138, %v1170
      %v1190 = vsel %vm1183, %v1140, %v1172
      %v1191 = vsel %vm1183, %v1142, %v1174
      %1192 = vst.msk [vmem:[%s176] sm:$0xff] %vm459, %v1184
      %1193 = vst.msk [vmem:[%s176 + $0x8] sm:$0xff] %vm459, %v1185
      %1194 = vst.msk [vmem:[%s176 + $0x10] sm:$0xff] %vm459, %v1186
      %1195 = vst.msk [vmem:[%s176 + $0x18] sm:$0xff] %vm459, %v1187
      %1196 = vst.msk [vmem:[%s176 + $0x20] sm:$0xff] %vm459, %v1188
      %1197 = vst.msk [vmem:[%s176 + $0x28] sm:$0xff] %vm459, %v1189
      %1198 = vst.msk [vmem:[%s176 + $0x30] sm:$0xff] %vm459, %v1190
      %1199 = vst.msk [vmem:[%s176 + $0x38] sm:$0xff] %vm459, %v1191
      %v1201 = vsel %vm486, 1.0, 0
      %1203 = vmatprep.subr.mxu0 0.0
      %1204 = vmatpush1.msra.mxu0 0.0
      %1205 = vmatprep.subr.mxu0 0.0
      %1206 = vmatpush1.msra.mxu0 0.0
      %1207 = vmatprep.subr.mxu0 0.0
      %1208 = vmatpush1.msra.mxu0 0.0
      %1209 = vmatprep.subr.mxu0 0.0
      %1210 = vmatpush1.msra.mxu0 0.0
      %1211 = vmatprep.subr.mxu0 0.0
      %1212 = vmatpush1.msra.mxu0 0.0
      %1213 = vmatprep.subr.mxu0 0.0
      %1214 = vmatpush1.msra.mxu0 0.0
      %1215 = vmatprep.subr.mxu0 0.0
      %1216 = vmatpush1.msra.mxu0 0.0
      %1217 = vmatprep.subr.mxu0 0.0
      %1218 = vmatpush1.msra.mxu0 0.0
      %1219 = vmatprep.subr.mxu0 0.0
      %1220 = vmatpush1.msra.mxu0 %v1191
      %1221 = vmatprep.subr.mxu0 0.0
      %1222 = vmatpush1.msra.mxu0 %v1190
      %1223 = vmatprep.subr.mxu0 0.0
      %1224 = vmatpush1.msra.mxu0 %v1189
      %1225 = vmatprep.subr.mxu0 0.0
      %1226 = vmatpush1.msra.mxu0 %v1188
      %1227 = vmatprep.subr.mxu0 0.0
      %1228 = vmatpush1.msra.mxu0 %v1187
      %1229 = vmatprep.subr.mxu0 0.0
      %1230 = vmatpush1.msra.mxu0 %v1186
      %1231 = vmatprep.subr.mxu0 0.0
      %1232 = vmatpush1.msra.mxu0 %v1185
      %1233 = vmatprep.subr.mxu0 0.0
      %1234 = vmatpush1.msra.mxu0 %v1184
      %1235 = vmatprep.subr.mxu0 0.0
      %1236 = vmatpush2.msra.mxu0 0.0
      %1237 = vmatprep.subr.mxu0 0.0
      %1238 = vmatpush2.msra.mxu0 0.0
      %1239 = vmatprep.subr.mxu0 0.0
      %1240 = vmatpush2.msra.mxu0 0.0
      %1241 = vmatprep.subr.mxu0 0.0
      %1242 = vmatpush2.msra.mxu0 0.0
      %1243 = vmatprep.subr.mxu0 0.0
      %1244 = vmatpush2.msra.mxu0 0.0
      %1245 = vmatprep.subr.mxu0 0.0
      %1246 = vmatpush2.msra.mxu0 0.0
      %1247 = vmatprep.subr.mxu0 0.0
      %1248 = vmatpush2.msra.mxu0 0.0
      %1249 = vmatprep.subr.mxu0 0.0
      %1250 = vmatpush2.msra.mxu0 0.0
      %1251 = vmatprep.subr.mxu0 0.0
      %1252 = vmatpush2.msra.mxu0 0.0
      %1253 = vmatprep.subr.mxu0 0.0
      %1254 = vmatpush2.msra.mxu0 0.0
      %1255 = vmatprep.subr.mxu0 0.0
      %1256 = vmatpush2.msra.mxu0 0.0
      %1257 = vmatprep.subr.mxu0 0.0
      %1258 = vmatpush2.msra.mxu0 0.0
      %1259 = vmatprep.subr.mxu0 0.0
      %1260 = vmatpush2.msra.mxu0 0.0
      %1261 = vmatprep.subr.mxu0 0.0
      %1262 = vmatpush2.msra.mxu0 0.0
      %1263 = vmatprep.subr.mxu0 0.0
      %1264 = vmatpush2.msra.mxu0 0.0
      %1265 = vmatprep.subr.mxu0 0.0
      %1266 = vmatpush2.msra.mxu0 0.0
      %1267 = vmatprep.mubr.f32.mxu0 0.0
      %1268 = vmatmul.mubr.f32.gmra.mxu0 %v1201
      %v1269 = vpop.f32.mrf.mxu0
      %v1270 = vadd.f32 0.0, %v1269
      %v1271 = vpop.f32.mrf.mxu0
      %1272 = vdwg.mxu0
      %vm1273 = vcmask 122880
      %1274 = vst.msk [vmem:[%s179] sm:$0x1] %vm1273, %v1270
      %p1275 = scmp.lt.s32.totalorder %s15, 1
      %s1276 = scalar_select %p1275, %s15, 1
      %s1277 = smul.addr %s1276, 8
      %s1278 = smul.addr %s1277, 8
      %s1279 = scalar_lea.vmem %s2, %s1278
      %p1280 = scmp.lt.s32.totalorder %s15, 1
      %s1281 = scalar_select %p1280, %s15, 1
      %s1282 = scalar_lea.vmem %s3, %s1281
      // Predicated region
      $region29: #{down_cmplx_forward.15} parent=27 // pred_check
        %p1283 = pneg %p80
      $region30: #{down_cmplx_forward.15} parent=27 // pred_check_branch
        %1285 = sbr.rel (%p1283) target = $region32
      $region31: #{down_cmplx_forward.15} parent=27 // pred_region
        _
      $region32: #{down_cmplx_forward.15} parent=27 // pred_fallthru
        _
      // Predicated region
      $region33: #{down_cmplx_forward.15} parent=27 // pred_check
        %p1286 = pneg %p106
      $region34: #{down_cmplx_forward.15} parent=27 // pred_check_branch
        %1288 = sbr.rel (%p1286) target = $region36
      $region35: #{down_cmplx_forward.15} parent=27 // pred_region
        _
      $region36: #{down_cmplx_forward.15} parent=27 // pred_fallthru
        _
    $region28: #{down_cmplx_forward.15} parent=5 // pred_fallthru
      _
    %p1289 = scmp.le.s32.totalorder 2, %s10
    // Predicated region
    $region37: #{down_cmplx_forward.15} parent=5 // pred_check
      %p1290 = pneg %p1289
    $region38: #{down_cmplx_forward.15} parent=5 // pred_check_branch
      %1292 = sbr.rel (%p1290) target = $region40
    $region39: #{down_cmplx_forward.15} parent=5 // pred_region
      %s1293 = ssub.s32 %s10, 2
      // Predicated region
      $region41: #{down_cmplx_forward.15} parent=39 // pred_check
        %p1294 = pneg %p86
      $region42: #{down_cmplx_forward.15} parent=39 // pred_check_branch
        %1296 = sbr.rel (%p1294) target = $region44
      $region43: #{down_cmplx_forward.15} parent=39 // pred_region
        %p1297 = scmp.lt.s32.totalorder %s16, 1
        %s1298 = scalar_select %p1297, %s16, 1
        %s1299 = smul.addr %s1298, 8
        %s1300 = smul.addr %s1299, 8
        %s1301 = scalar_lea.vmem %s2, %s1300
      $region44: #{down_cmplx_forward.15} parent=39 // pred_fallthru
        _
      // Predicated region
      $region45: #{down_cmplx_forward.15} parent=39 // pred_check
        %p1302 = pneg %p112
      $region46: #{down_cmplx_forward.15} parent=39 // pred_check_branch
        %1304 = sbr.rel (%p1302) target = $region48
      $region47: #{down_cmplx_forward.15} parent=39 // pred_region
        %p1305 = scmp.lt.s32.totalorder %s16, 1
        %s1306 = scalar_select %p1305, %s16, 1
        %s1307 = scalar_lea.vmem %s3, %s1306
      $region48: #{down_cmplx_forward.15} parent=39 // pred_fallthru
        _
    $region40: #{down_cmplx_forward.15} parent=5 // pred_fallthru
      _
  $region6: #{down_cmplx_forward.15} parent=0 // loop_footer
    %s14 = sadd.s32 1, %s10
  $region7: #{down_cmplx_forward.15} parent=0 // loop_footer_branch
    %9 = sbr.rel target = $region3
  $region8: #{down_cmplx_forward.15} parent=0 // loop_exit
    _

</llo_original>
